<compile_context>
chip_gen: v5e
topology: v5e:2x2
jax: 0.10.0
libtpu: 0.0.40
codegen_flags: <defaults>
</compile_context>

<pallas_src>
import functools

import jax
import jax.numpy as jnp
from jax import lax
from jax.experimental import pallas as pl
from jax.experimental.pallas import tpu as pltpu


_NEG = -1e30  # finite "minus infinity" for padding masks (avoids 0 * inf -> NaN)


def _round_up(x, m):
    return (x + m - 1) // m * m


def _matmul_nt(a, b):
    """a @ b.T (contract last dims) on the MXU with f32 accumulation."""
    return lax.dot_general(
        a, b, (((1,), (1,)), ((), ())), preferred_element_type=jnp.float32
    )


def _infonce_kernel(
    z1n_ref, z2n_ref,                    # inputs : bf16 (Np, Dp), normalized, whole-array VMEM
    loss_ref, acc_ref,                   # outputs: (1, 1) f32 each
    colbase_ref,                         # scratch: (1, Np) additive column mask (incl. -shift)
    lcol_ref,                            # scratch: (1, Np) bottom-half column sum of exp(s - shift)
    tops_ref, dsum_ref, corr_ref,        # scratch: (1, 1) accumulators
    *, n, block_rows, temperature, inf,
):
    i = pl.program_id(0)
    nb = pl.num_programs(0)
    tm = block_rows
    npad = z1n_ref.shape[0]
    inv_t = 1.0 / temperature
    # Static LSE shift: inputs are L2-normalized (wrapper), so |s| <= ~1/T and
    # exp(s - shift) <= ~e^0, no online max needed.
    shift = inv_t

    # ---------------- one-time init (block 0) ----------------
    @pl.when(i == 0)
    def _init():
        cidx = lax.broadcasted_iota(jnp.int32, (1, npad), 1)
        colbase_ref[...] = jnp.where(cidx < n, -shift, _NEG)
        lcol_ref[...] = jnp.zeros_like(lcol_ref)
        tops_ref[...] = jnp.zeros_like(tops_ref)
        dsum_ref[...] = jnp.zeros_like(dsum_ref)
        corr_ref[...] = jnp.zeros_like(corr_ref)

    # ---------------- this block's rows ----------------
    r0 = pl.multiple_of(i * tm, tm)
    z1b = z1n_ref[pl.ds(r0, tm), :]      # (tm, Dp) bf16
    z2b = z2n_ref[pl.ds(r0, tm), :]
    z1f = z1n_ref[...]                   # (Np, Dp) bf16 resident RHS
    z2f = z2n_ref[...]

    # 3 matmuls per block; z2 @ z1.T is intentionally never computed.
    s_ij = _matmul_nt(z1b, z2f) * inv_t  # rows [r0, r0+tm) of z1 @ z2.T / T
    s_ii = _matmul_nt(z1b, z1f) * inv_t  # rows of z1 @ z1.T / T
    s_jj = _matmul_nt(z2b, z2f) * inv_t  # rows of z2 @ z2.T / T

    # Additive masks: padded rows/cols -> _NEG, valid -> -shift; s_ii/s_jj
    # additionally get -INF on the diagonal (matches the reference).
    grow1 = r0 + lax.broadcasted_iota(jnp.int32, (tm, 1), 0)   # global row ids
    rvalid = grow1 < n                                          # (tm, 1)
    base = colbase_ref[...] + jnp.where(rvalid, 0.0, _NEG)      # (tm, npad)
    col = lax.broadcasted_iota(jnp.int32, (tm, npad), 1)
    base_diag = base + jnp.where(col == grow1, -inf, 0.0)       # (tm, npad)

    m_ij = s_ij + base                   # masked + shifted scores
    p_ij = jnp.exp(m_ij)                 # shared by top-half rows AND bottom-half cols
    p_ii = jnp.exp(s_ii + base_diag)
    p_jj = jnp.exp(s_jj + base_diag)

    # diag(sim_zij) straight from the embeddings (padded rows are exactly 0).
    diag_b = jnp.sum(z1b.astype(jnp.float32) * z2b.astype(jnp.float32),
                     axis=-1, keepdims=True) * inv_t            # (tm, 1)

    # ---- top half of sim_Z (rows r0..r0+tm-1): logsumexp([s_ij | s_ii]) - diag
    row_l = (jnp.sum(p_ij, axis=1, keepdims=True)
             + jnp.sum(p_ii, axis=1, keepdims=True))
    lse_top = jnp.log(jnp.where(rvalid, row_l, 1.0)) + shift
    tops_ref[...] += jnp.sum(jnp.where(rvalid, lse_top - diag_b, 0.0), keepdims=True)
    dsum_ref[...] += jnp.sum(jnp.where(rvalid, diag_b, 0.0), keepdims=True)

    # ---- ssl accuracy, fused on the masked s_ij tile (uniform -shift does not
    # change the argmax; torch.argmax returns the FIRST maximal index).
    rowmax = jnp.max(m_ij, axis=1, keepdims=True)
    pred = jnp.min(jnp.where(m_ij == rowmax, col, npad), axis=1, keepdims=True)
    corr_ref[...] += jnp.sum(
        jnp.where((pred == grow1) & rvalid, 1.0, 0.0), keepdims=True)

    # ---- bottom half of sim_Z, accumulated column-wise: bottom row k is
    # [sim_zjj[k, :] | sim_zij[:, k]]; column k of s_jj (symmetry of z2@z2.T)
    # and column k of s_ij provide this block's chunk.  Masked / padded
    # entries contribute exp(_NEG) = 0, so the accumulation stays clean.
    lcol_ref[...] += (jnp.sum(p_ij, axis=0, keepdims=True)
                      + jnp.sum(p_jj, axis=0, keepdims=True))

    # ---------------- finalize (last block) ----------------
    @pl.when(i == nb - 1)
    def _done():
        cvalid = lax.broadcasted_iota(jnp.int32, (1, npad), 1) < n
        lse_bot = jnp.log(jnp.where(cvalid, lcol_ref[...], 1.0)) + shift
        bot = jnp.sum(jnp.where(cvalid, lse_bot, 0.0), keepdims=True)
        # sum over all 2N diag entries of -log_softmax, averaged.
        loss_ref[...] = (tops_ref[...] + bot - dsum_ref[...]) / (2.0 * n)
        acc_ref[...] = 100.0 * corr_ref[...] / n


def _tpu_kind():
    try:
        return jax.devices()[0].device_kind.lower()
    except Exception:
        return ""


def _default_block_rows(kind):
    # v6e / v7x have a 256-wide MXU -> 256 LHS rows per resident weight tile;
    # v5e and older are 128-wide -> tm=128 already matches, bigger only costs VMEM.
    old = any(t in kind for t in ("v2", "v3", "v4", "v5"))
    return 128 if old else 256


def _vmem_limit(kind, est):
    # v7x has only 64 MiB physical VMEM per TensorCore -> stay well below it;
    # v5e/v6e have 128 MiB physical (scoped default is only 16-32 MiB).
    cap = (56 << 20) if "v7" in kind else (100 << 20)
    return int(min(max(est, 32 << 20), cap))


def infonce_pallas(z1, z2, temperature=0.1, inf=1e8, block_rows=None):
    """Returns {'loss': scalar f32, 'ssl_acc': scalar f32}."""
    assert z1.shape == z2.shape and z1.ndim == 2
    n, d = z1.shape
    kind = _tpu_kind()
    tm = _default_block_rows(kind) if block_rows is None else block_rows
    assert tm % 128 == 0
    npad = _round_up(max(n, 1), tm)          # rows padded to the row tile
    dpad = _round_up(max(d, 1), 128)         # contraction dim padded to 128
    nb = npad // tm

    # F.normalize(x, p=2, dim=-1) == x * rsqrt(max(sum(x^2), eps^2)), eps=1e-12.
    # Done once in f32 in the wrapper; the bf16 result feeds the MXU directly.
    def _norm(x):
        x = x.astype(jnp.float32)
        ss = jnp.sum(x * x, axis=-1, keepdims=True)
        return (x * lax.rsqrt(jnp.maximum(ss, 1e-24))).astype(jnp.bfloat16)

    z1n = jnp.pad(_norm(z1), ((0, npad - n), (0, dpad - d)))
    z2n = jnp.pad(_norm(z2), ((0, npad - n), (0, dpad - d)))

    # VMEM budget: two resident bf16 inputs (single-buffered) + three (tm, Np)
    # f32 sim tiles, their exps / masks, and the (1, Np) accumulators.
    est = (2 * npad * dpad * 2) + (12 * tm * npad * 4) + (8 * npad) + (4 << 20)

    kernel = functools.partial(
        _infonce_kernel, n=n, block_rows=tm,
        temperature=float(temperature), inf=float(inf))

    loss, acc = pl.pallas_call(
        kernel,
        out_shape=(
            jax.ShapeDtypeStruct((1, 1), jnp.float32),
            jax.ShapeDtypeStruct((1, 1), jnp.float32),
        ),
        grid_spec=pltpu.PrefetchScalarGridSpec(
            num_scalar_prefetch=0,
            grid=(nb,),
            in_specs=[
                # whole-array VMEM residents: copied in once, never re-DMA'd,
                # not double-buffered (the window never changes across the grid).
                pl.BlockSpec(memory_space=pltpu.MemorySpace.VMEM),
                pl.BlockSpec(memory_space=pltpu.MemorySpace.VMEM),
            ],
            out_specs=(
                pl.BlockSpec((1, 1), lambda i: (0, 0)),
                pl.BlockSpec((1, 1), lambda i: (0, 0)),
            ),
            scratch_shapes=[
                pltpu.VMEM((1, npad), jnp.float32),   # column additive mask (+shift)
                pltpu.VMEM((1, npad), jnp.float32),   # bottom-half column sumexp
                pltpu.VMEM((1, 1), jnp.float32),      # top-half sum(lse - diag)
                pltpu.VMEM((1, 1), jnp.float32),      # sum(diag)
                pltpu.VMEM((1, 1), jnp.float32),      # correct count
            ],
        ),
        compiler_params=pltpu.CompilerParams(
            dimension_semantics=("arbitrary",),
            vmem_limit_bytes=_vmem_limit(kind, est),
        ),
    )(z1n, z2n)
    return {"loss": loss[0, 0], "ssl_acc": acc[0, 0]}


def infonce_ref(z1, z2, temperature=0.1, inf=1e8):
    """Pure-JAX reference mirroring the PyTorch module (single-device all_gather = identity)."""
    z1 = z1 / jnp.maximum(jnp.linalg.norm(z1, axis=-1, keepdims=True), 1e-12)
    z2 = z2 / jnp.maximum(jnp.linalg.norm(z2, axis=-1, keepdims=True), 1e-12)
    n = z1.shape[0]
    sim_zii = z1 @ z1.T / temperature - inf * jnp.eye(n)
    sim_zjj = z2 @ z2.T / temperature - inf * jnp.eye(n)
    sim_zij = z1 @ z2.T / temperature
    sim_z = jnp.concatenate(
        [
            jnp.concatenate([sim_zij, sim_zii], axis=1),
            jnp.concatenate([sim_zjj, sim_zij.T], axis=1),
        ],
        axis=0,
    )
    log_sim = jax.nn.log_softmax(sim_z, axis=1)
    loss = -jnp.mean(jnp.diag(log_sim))
    pred = jnp.argmax(sim_zij, axis=1)
    acc = 100.0 * jnp.sum(pred == jnp.arange(n)) / n
    return loss, acc


def _check(n, d, key, rtol, atol):
    k1, k2 = jax.random.split(key)
    z1 = jax.random.normal(k1, (n, d), dtype=jnp.float32)
    z2 = jax.random.normal(k2, (n, d), dtype=jnp.float32)

    out = infonce_pallas(z1, z2, temperature=0.1)
    loss = jax.block_until_ready(out["loss"])
    acc = jax.block_until_ready(out["ssl_acc"])

    ref_loss, ref_acc = infonce_ref(z1, z2, temperature=0.1)
    # bf16 MXU inputs -> compare against the f32 reference with loose tolerance.
    assert jnp.allclose(loss, ref_loss, rtol=rtol, atol=atol), (n, d, loss, ref_loss)
    # argmax on bf16 scores can flip a near-tie vs the f32 reference; allow up
    # to 2 flipped predictions (each flip changes acc by 100/n).
    assert jnp.abs(acc - ref_acc) <= 200.0 / n + 1e-3, (n, d, acc, ref_acc)


if __name__ == "__main__":
    key = jax.random.PRNGKey(0)
    k_a, k_b = jax.random.split(key)
    # Small shapes consistent with the module's (bsize, feature_dim) embeddings.
    _check(8, 32, k_a, rtol=5e-2, atol=5e-2)      # single row block, padded D
    _check(300, 40, k_b, rtol=5e-2, atol=5e-2)    # multi-block path + row padding
    print("KERNEL_OK")
</pallas_src>

<mosaic_0001>
module attributes {stable_mosaic.version = 11 : i64} {
  func.func @_infonce_kernel(%arg0: i32, %arg1: memref<256x128xbf16, #tpu.memory_space<vmem>>, %arg2: memref<256x128xbf16, #tpu.memory_space<vmem>>, %arg3: memref<1x1xf32, #tpu.memory_space<vmem>>, %arg4: memref<1x1xf32, #tpu.memory_space<vmem>>, %arg5: memref<1x256xf32, #tpu.memory_space<vmem>>, %arg6: memref<1x256xf32, #tpu.memory_space<vmem>>, %arg7: memref<1x1xf32, #tpu.memory_space<vmem>>, %arg8: memref<1x1xf32, #tpu.memory_space<vmem>>, %arg9: memref<1x1xf32, #tpu.memory_space<vmem>>) attributes {dimension_semantics = [#tpu.dimension_semantics<arbitrary>], iteration_bounds = array<i64: 1>, scalar_prefetch = 0 : i64, scratch_operands = 5 : i64, tpu.core_type = #tpu.core_type<tc>, window_params = [{pipeline_mode = #tpu.pipeline_mode<synchronous>, transform_indices = @transform_0, window_bounds = array<i64: 256, 128>}, {pipeline_mode = #tpu.pipeline_mode<synchronous>, transform_indices = @transform_1, window_bounds = array<i64: 256, 128>}, {pipeline_mode = #tpu.pipeline_mode<synchronous>, transform_indices = @transform_2, window_bounds = array<i64: 1, 1>}, {pipeline_mode = #tpu.pipeline_mode<synchronous>, transform_indices = @transform_3, window_bounds = array<i64: 1, 1>}]} {
    %c0_i32 = arith.constant 0 : i32
    %0 = arith.cmpi eq, %arg0, %c0_i32 : i32
    %1 = arith.extui %0 : i1 to i32
    %c0_i32_0 = arith.constant 0 : i32
    %2 = arith.cmpi ne, %1, %c0_i32_0 : i32
    scf.if %2 {
      %115 = tpu.iota {dimensions = array<i32: 1>} : vector<1x256xi32>
      %c8_i32_53 = arith.constant 8 : i32
      %116 = vector.broadcast %c8_i32_53 : i32 to vector<1x256xi32>
      %117 = arith.cmpi slt, %115, %116 : vector<1x256xi32>
      %cst_54 = arith.constant -1.000000e+01 : f32
      %cst_55 = arith.constant -1.000000e+30 : f32
      %118 = vector.broadcast %cst_54 : f32 to vector<1x256xf32>
      %119 = vector.broadcast %cst_55 : f32 to vector<1x256xf32>
      %120 = arith.select %117, %118, %119 : vector<1x256xi1>, vector<1x256xf32>
      %c0_56 = arith.constant 0 : index
      %c0_57 = arith.constant 0 : index
      %121 = vector.load %arg5[%c0_56, %c0_57] : memref<1x256xf32, #tpu.memory_space<vmem>>, vector<1x256xf32>
      tpu.vector_store %arg5[%c0_56, %c0_57], %120 {strides = array<i32>} : memref<1x256xf32, #tpu.memory_space<vmem>>, vector<1x256xf32>,
      %cst_58 = arith.constant 0.000000e+00 : f32
      %122 = vector.broadcast %cst_58 : f32 to vector<1x256xf32>
      %c0_59 = arith.constant 0 : index
      %c0_60 = arith.constant 0 : index
      %123 = vector.load %arg6[%c0_59, %c0_60] : memref<1x256xf32, #tpu.memory_space<vmem>>, vector<1x256xf32>
      tpu.vector_store %arg6[%c0_59, %c0_60], %122 {strides = array<i32>} : memref<1x256xf32, #tpu.memory_space<vmem>>, vector<1x256xf32>,
      %cst_61 = arith.constant 0.000000e+00 : f32
      %124 = vector.broadcast %cst_61 : f32 to vector<1x1xf32>
      %c0_62 = arith.constant 0 : index
      %c0_63 = arith.constant 0 : index
      %125 = vector.load %arg7[%c0_62, %c0_63] : memref<1x1xf32, #tpu.memory_space<vmem>>, vector<1x1xf32>
      tpu.vector_store %arg7[%c0_62, %c0_63], %124 {strides = array<i32>} : memref<1x1xf32, #tpu.memory_space<vmem>>, vector<1x1xf32>,
      %cst_64 = arith.constant 0.000000e+00 : f32
      %126 = vector.broadcast %cst_64 : f32 to vector<1x1xf32>
      %c0_65 = arith.constant 0 : index
      %c0_66 = arith.constant 0 : index
      %127 = vector.load %arg8[%c0_65, %c0_66] : memref<1x1xf32, #tpu.memory_space<vmem>>, vector<1x1xf32>
      tpu.vector_store %arg8[%c0_65, %c0_66], %126 {strides = array<i32>} : memref<1x1xf32, #tpu.memory_space<vmem>>, vector<1x1xf32>,
      %cst_67 = arith.constant 0.000000e+00 : f32
      %128 = vector.broadcast %cst_67 : f32 to vector<1x1xf32>
      %c0_68 = arith.constant 0 : index
      %c0_69 = arith.constant 0 : index
      %129 = vector.load %arg9[%c0_68, %c0_69] : memref<1x1xf32, #tpu.memory_space<vmem>>, vector<1x1xf32>
      tpu.vector_store %arg9[%c0_68, %c0_69], %128 {strides = array<i32>} : memref<1x1xf32, #tpu.memory_space<vmem>>, vector<1x1xf32>,
    } else {
    }
    %c256_i32 = arith.constant 256 : i32
    %3 = arith.muli %arg0, %c256_i32 : i32
    %4 = tpu.assume_multiple %3, 256 : i32
    %5 = arith.index_cast %4 : i32 to index
    %c0 = arith.constant 0 : index
    %6 = vector.load %arg1[%5, %c0] : memref<256x128xbf16, #tpu.memory_space<vmem>>, vector<256x128xbf16>
    %7 = arith.index_cast %4 : i32 to index
    %c0_1 = arith.constant 0 : index
    %8 = vector.load %arg2[%7, %c0_1] : memref<256x128xbf16, #tpu.memory_space<vmem>>, vector<256x128xbf16>
    %c0_2 = arith.constant 0 : index
    %c0_3 = arith.constant 0 : index
    %9 = vector.load %arg1[%c0_2, %c0_3] : memref<256x128xbf16, #tpu.memory_space<vmem>>, vector<256x128xbf16>
    %c0_4 = arith.constant 0 : index
    %c0_5 = arith.constant 0 : index
    %10 = vector.load %arg2[%c0_4, %c0_5] : memref<256x128xbf16, #tpu.memory_space<vmem>>, vector<256x128xbf16>
    %cst = arith.constant dense<0.000000e+00> : vector<256x256xf32>
    %11 = tpu.matmul %6, %10, %cst {dimension_numbers = #tpu.dot_dimension_numbers<[1], [1], [0], [0], [0, 0, 1, 0], [], []>} : vector<256x128xbf16>, vector<256x128xbf16>, vector<256x256xf32> -> vector<256x256xf32>
    %cst_6 = arith.constant 1.000000e+01 : f32
    %12 = vector.broadcast %cst_6 : f32 to vector<256x256xf32>
    %13 = arith.mulf %11, %12 : vector<256x256xf32>
    %cst_7 = arith.constant dense<0.000000e+00> : vector<256x256xf32>
    %14 = tpu.matmul %6, %9, %cst_7 {dimension_numbers = #tpu.dot_dimension_numbers<[1], [1], [0], [0], [0, 0, 1, 0], [], []>} : vector<256x128xbf16>, vector<256x128xbf16>, vector<256x256xf32> -> vector<256x256xf32>
    %cst_8 = arith.constant 1.000000e+01 : f32
    %15 = vector.broadcast %cst_8 : f32 to vector<256x256xf32>
    %16 = arith.mulf %14, %15 : vector<256x256xf32>
    %cst_9 = arith.constant dense<0.000000e+00> : vector<256x256xf32>
    %17 = tpu.matmul %8, %10, %cst_9 {dimension_numbers = #tpu.dot_dimension_numbers<[1], [1], [0], [0], [0, 0, 1, 0], [], []>} : vector<256x128xbf16>, vector<256x128xbf16>, vector<256x256xf32> -> vector<256x256xf32>
    %cst_10 = arith.constant 1.000000e+01 : f32
    %18 = vector.broadcast %cst_10 : f32 to vector<256x256xf32>
    %19 = arith.mulf %17, %18 : vector<256x256xf32>
    %20 = tpu.iota {dimensions = array<i32: 0>} : vector<256x1xi32>
    %21 = vector.broadcast %4 : i32 to vector<256x1xi32>
    %22 = arith.addi %21, %20 : vector<256x1xi32>
    %c8_i32 = arith.constant 8 : i32
    %23 = vector.broadcast %c8_i32 : i32 to vector<256x1xi32>
    %24 = arith.cmpi slt, %22, %23 : vector<256x1xi32>
    %c0_11 = arith.constant 0 : index
    %c0_12 = arith.constant 0 : index
    %25 = vector.load %arg5[%c0_11, %c0_12] : memref<1x256xf32, #tpu.memory_space<vmem>>, vector<1x256xf32>
    %cst_13 = arith.constant 0.000000e+00 : f32
    %cst_14 = arith.constant -1.000000e+30 : f32
    %26 = vector.broadcast %cst_13 : f32 to vector<256x1xf32>
    %27 = vector.broadcast %cst_14 : f32 to vector<256x1xf32>
    %28 = arith.select %24, %26, %27 : vector<256x1xi1>, vector<256x1xf32>
    %29 = vector.broadcast %25 : vector<1x256xf32> to vector<256x256xf32>
    %30 = vector.broadcast %28 : vector<256x1xf32> to vector<256x256xf32>
    %31 = arith.addf %29, %30 : vector<256x256xf32>
    %32 = tpu.iota {dimensions = array<i32: 1>} : vector<256x256xi32>
    %33 = vector.broadcast %22 : vector<256x1xi32> to vector<256x256xi32>
    %34 = arith.cmpi eq, %32, %33 : vector<256x256xi32>
    %cst_15 = arith.constant -1.000000e+08 : f32
    %cst_16 = arith.constant 0.000000e+00 : f32
    %35 = vector.broadcast %cst_15 : f32 to vector<256x256xf32>
    %36 = vector.broadcast %cst_16 : f32 to vector<256x256xf32>
    %37 = arith.select %34, %35, %36 : vector<256x256xi1>, vector<256x256xf32>
    %38 = arith.addf %31, %37 : vector<256x256xf32>
    %39 = arith.addf %13, %31 : vector<256x256xf32>
    %40 = math.exp %39 : vector<256x256xf32>
    %41 = arith.addf %16, %38 : vector<256x256xf32>
    %42 = math.exp %41 : vector<256x256xf32>
    %43 = arith.addf %19, %38 : vector<256x256xf32>
    %44 = math.exp %43 : vector<256x256xf32>
    %45 = arith.extf %6 : vector<256x128xbf16> to vector<256x128xf32>
    %46 = arith.extf %8 : vector<256x128xbf16> to vector<256x128xf32>
    %47 = arith.mulf %45, %46 : vector<256x128xf32>
    %cst_17 = arith.constant dense<0.000000e+00> : vector<256xf32>
    %48 = vector.multi_reduction <add>, %47, %cst_17 [1] : vector<256x128xf32> to vector<256xf32>
    %49 = vector.shape_cast %48 : vector<256xf32> to vector<256x1xf32>
    %cst_18 = arith.constant 1.000000e+01 : f32
    %50 = vector.broadcast %cst_18 : f32 to vector<256x1xf32>
    %51 = arith.mulf %49, %50 : vector<256x1xf32>
    %cst_19 = arith.constant dense<0.000000e+00> : vector<256xf32>
    %52 = vector.multi_reduction <add>, %40, %cst_19 [1] : vector<256x256xf32> to vector<256xf32>
    %53 = vector.shape_cast %52 : vector<256xf32> to vector<256x1xf32>
    %cst_20 = arith.constant dense<0.000000e+00> : vector<256xf32>
    %54 = vector.multi_reduction <add>, %42, %cst_20 [1] : vector<256x256xf32> to vector<256xf32>
    %55 = vector.shape_cast %54 : vector<256xf32> to vector<256x1xf32>
    %56 = arith.addf %53, %55 : vector<256x1xf32>
    %cst_21 = arith.constant 1.000000e+00 : f32
    %57 = vector.broadcast %cst_21 : f32 to vector<256x1xf32>
    %58 = arith.select %24, %56, %57 : vector<256x1xi1>, vector<256x1xf32>
    %59 = math.log %58 : vector<256x1xf32>
    %cst_22 = arith.constant 1.000000e+01 : f32
    %60 = vector.broadcast %cst_22 : f32 to vector<256x1xf32>
    %61 = arith.addf %59, %60 : vector<256x1xf32>
    %c0_23 = arith.constant 0 : index
    %c0_24 = arith.constant 0 : index
    %62 = vector.load %arg7[%c0_23, %c0_24] : memref<1x1xf32, #tpu.memory_space<vmem>>, vector<1x1xf32>
    %63 = arith.subf %61, %51 : vector<256x1xf32>
    %cst_25 = arith.constant 0.000000e+00 : f32
    %64 = vector.broadcast %cst_25 : f32 to vector<256x1xf32>
    %65 = arith.select %24, %63, %64 : vector<256x1xi1>, vector<256x1xf32>
    %66 = vector.shape_cast %65 : vector<256x1xf32> to vector<1x256x1xf32>
    %cst_26 = arith.constant dense<0.000000e+00> : vector<1xf32>
    %67 = vector.multi_reduction <add>, %66, %cst_26 [1, 2] : vector<1x256x1xf32> to vector<1xf32>
    %68 = vector.shape_cast %67 : vector<1xf32> to vector<1x1x1xf32>
    %69 = vector.extract %68[0, 0, 0] : f32 from vector<1x1x1xf32>
    %70 = vector.broadcast %69 : f32 to vector<1x1xf32>
    %71 = arith.addf %62, %70 : vector<1x1xf32>
    %c0_27 = arith.constant 0 : index
    %c0_28 = arith.constant 0 : index
    %72 = vector.load %arg7[%c0_27, %c0_28] : memref<1x1xf32, #tpu.memory_space<vmem>>, vector<1x1xf32>
    tpu.vector_store %arg7[%c0_27, %c0_28], %71 {strides = array<i32>} : memref<1x1xf32, #tpu.memory_space<vmem>>, vector<1x1xf32>,
    %c0_29 = arith.constant 0 : index
    %c0_30 = arith.constant 0 : index
    %73 = vector.load %arg8[%c0_29, %c0_30] : memref<1x1xf32, #tpu.memory_space<vmem>>, vector<1x1xf32>
    %cst_31 = arith.constant 0.000000e+00 : f32
    %74 = vector.broadcast %cst_31 : f32 to vector<256x1xf32>
    %75 = arith.select %24, %51, %74 : vector<256x1xi1>, vector<256x1xf32>
    %76 = vector.shape_cast %75 : vector<256x1xf32> to vector<1x256x1xf32>
    %cst_32 = arith.constant dense<0.000000e+00> : vector<1xf32>
    %77 = vector.multi_reduction <add>, %76, %cst_32 [1, 2] : vector<1x256x1xf32> to vector<1xf32>
    %78 = vector.shape_cast %77 : vector<1xf32> to vector<1x1x1xf32>
    %79 = vector.extract %78[0, 0, 0] : f32 from vector<1x1x1xf32>
    %80 = vector.broadcast %79 : f32 to vector<1x1xf32>
    %81 = arith.addf %73, %80 : vector<1x1xf32>
    %c0_33 = arith.constant 0 : index
    %c0_34 = arith.constant 0 : index
    %82 = vector.load %arg8[%c0_33, %c0_34] : memref<1x1xf32, #tpu.memory_space<vmem>>, vector<1x1xf32>
    tpu.vector_store %arg8[%c0_33, %c0_34], %81 {strides = array<i32>} : memref<1x1xf32, #tpu.memory_space<vmem>>, vector<1x1xf32>,
    %cst_35 = arith.constant dense<0xFF800000> : vector<256xf32>
    %83 = vector.multi_reduction <maximumf>, %39, %cst_35 [1] : vector<256x256xf32> to vector<256xf32>
    %84 = vector.shape_cast %83 : vector<256xf32> to vector<256x1xf32>
    %85 = vector.broadcast %84 : vector<256x1xf32> to vector<256x256xf32>
    %86 = arith.cmpf oeq, %39, %85 : vector<256x256xf32>
    %c256_i32_36 = arith.constant 256 : i32
    %87 = vector.broadcast %c256_i32_36 : i32 to vector<256x256xi32>
    %88 = arith.select %86, %32, %87 : vector<256x256xi1>, vector<256x256xi32>
    %cst_37 = arith.constant dense<2147483647> : vector<256xi32>
    %89 = vector.multi_reduction <minsi>, %88, %cst_37 [1] : vector<256x256xi32> to vector<256xi32>
    %90 = vector.shape_cast %89 : vector<256xi32> to vector<256x1xi32>
    %c0_38 = arith.constant 0 : index
    %c0_39 = arith.constant 0 : index
    %91 = vector.load %arg9[%c0_38, %c0_39] : memref<1x1xf32, #tpu.memory_space<vmem>>, vector<1x1xf32>
    %92 = arith.cmpi eq, %90, %22 : vector<256x1xi32>
    %93 = arith.andi %92, %24 : vector<256x1xi1>
    %cst_40 = arith.constant 1.000000e+00 : f32
    %cst_41 = arith.constant 0.000000e+00 : f32
    %94 = vector.broadcast %cst_40 : f32 to vector<256x1xf32>
    %95 = vector.broadcast %cst_41 : f32 to vector<256x1xf32>
    %96 = arith.select %93, %94, %95 : vector<256x1xi1>, vector<256x1xf32>
    %97 = vector.shape_cast %96 : vector<256x1xf32> to vector<1x256x1xf32>
    %cst_42 = arith.constant dense<0.000000e+00> : vector<1xf32>
    %98 = vector.multi_reduction <add>, %97, %cst_42 [1, 2] : vector<1x256x1xf32> to vector<1xf32>
    %99 = vector.shape_cast %98 : vector<1xf32> to vector<1x1x1xf32>
    %100 = vector.extract %99[0, 0, 0] : f32 from vector<1x1x1xf32>
    %101 = vector.broadcast %100 : f32 to vector<1x1xf32>
    %102 = arith.addf %91, %101 : vector<1x1xf32>
    %c0_43 = arith.constant 0 : index
    %c0_44 = arith.constant 0 : index
    %103 = vector.load %arg9[%c0_43, %c0_44] : memref<1x1xf32, #tpu.memory_space<vmem>>, vector<1x1xf32>
    tpu.vector_store %arg9[%c0_43, %c0_44], %102 {strides = array<i32>} : memref<1x1xf32, #tpu.memory_space<vmem>>, vector<1x1xf32>,
    %c0_45 = arith.constant 0 : index
    %c0_46 = arith.constant 0 : index
    %104 = vector.load %arg6[%c0_45, %c0_46] : memref<1x256xf32, #tpu.memory_space<vmem>>, vector<1x256xf32>
    %cst_47 = arith.constant dense<0.000000e+00> : vector<256xf32>
    %105 = vector.multi_reduction <add>, %40, %cst_47 [0] : vector<256x256xf32> to vector<256xf32>
    %106 = vector.shape_cast %105 : vector<256xf32> to vector<1x256xf32>
    %cst_48 = arith.constant dense<0.000000e+00> : vector<256xf32>
    %107 = vector.multi_reduction <add>, %44, %cst_48 [0] : vector<256x256xf32> to vector<256xf32>
    %108 = vector.shape_cast %107 : vector<256xf32> to vector<1x256xf32>
    %109 = arith.addf %106, %108 : vector<1x256xf32>
    %110 = arith.addf %104, %109 : vector<1x256xf32>
    %c0_49 = arith.constant 0 : index
    %c0_50 = arith.constant 0 : index
    %111 = vector.load %arg6[%c0_49, %c0_50] : memref<1x256xf32, #tpu.memory_space<vmem>>, vector<1x256xf32>
    tpu.vector_store %arg6[%c0_49, %c0_50], %110 {strides = array<i32>} : memref<1x256xf32, #tpu.memory_space<vmem>>, vector<1x256xf32>,
    %c0_i32_51 = arith.constant 0 : i32
    %112 = arith.cmpi eq, %arg0, %c0_i32_51 : i32
    %113 = arith.extui %112 : i1 to i32
    %c0_i32_52 = arith.constant 0 : i32
    %114 = arith.cmpi ne, %113, %c0_i32_52 : i32
    scf.if %114 {
      %115 = tpu.iota {dimensions = array<i32: 1>} : vector<1x256xi32>
      %c8_i32_53 = arith.constant 8 : i32
      %116 = vector.broadcast %c8_i32_53 : i32 to vector<1x256xi32>
      %117 = arith.cmpi slt, %115, %116 : vector<1x256xi32>
      %c0_54 = arith.constant 0 : index
      %c0_55 = arith.constant 0 : index
      %118 = vector.load %arg6[%c0_54, %c0_55] : memref<1x256xf32, #tpu.memory_space<vmem>>, vector<1x256xf32>
      %cst_56 = arith.constant 1.000000e+00 : f32
      %119 = vector.broadcast %cst_56 : f32 to vector<1x256xf32>
      %120 = arith.select %117, %118, %119 : vector<1x256xi1>, vector<1x256xf32>
      %121 = math.log %120 : vector<1x256xf32>
      %cst_57 = arith.constant 1.000000e+01 : f32
      %122 = vector.broadcast %cst_57 : f32 to vector<1x256xf32>
      %123 = arith.addf %121, %122 : vector<1x256xf32>
      %cst_58 = arith.constant 0.000000e+00 : f32
      %124 = vector.broadcast %cst_58 : f32 to vector<1x256xf32>
      %125 = arith.select %117, %123, %124 : vector<1x256xi1>, vector<1x256xf32>
      %126 = vector.shape_cast %125 : vector<1x256xf32> to vector<1x1x256xf32>
      %cst_59 = arith.constant dense<0.000000e+00> : vector<1xf32>
      %127 = vector.multi_reduction <add>, %126, %cst_59 [1, 2] : vector<1x1x256xf32> to vector<1xf32>
      %128 = vector.shape_cast %127 : vector<1xf32> to vector<1x1x1xf32>
      %129 = vector.extract %128[0, 0, 0] : f32 from vector<1x1x1xf32>
      %130 = vector.broadcast %129 : f32 to vector<1x1xf32>
      %c0_60 = arith.constant 0 : index
      %c0_61 = arith.constant 0 : index
      %131 = vector.load %arg7[%c0_60, %c0_61] : memref<1x1xf32, #tpu.memory_space<vmem>>, vector<1x1xf32>
      %132 = arith.addf %131, %130 : vector<1x1xf32>
      %c0_62 = arith.constant 0 : index
      %c0_63 = arith.constant 0 : index
      %133 = vector.load %arg8[%c0_62, %c0_63] : memref<1x1xf32, #tpu.memory_space<vmem>>, vector<1x1xf32>
      %134 = arith.subf %132, %133 : vector<1x1xf32>
      %cst_64 = arith.constant 1.600000e+01 : f32
      %135 = vector.broadcast %cst_64 : f32 to vector<1x1xf32>
      %136 = arith.divf %134, %135 : vector<1x1xf32>
      %c0_65 = arith.constant 0 : index
      %c0_66 = arith.constant 0 : index
      %137 = vector.load %arg3[%c0_65, %c0_66] : memref<1x1xf32, #tpu.memory_space<vmem>>, vector<1x1xf32>
      tpu.vector_store %arg3[%c0_65, %c0_66], %136 {strides = array<i32>} : memref<1x1xf32, #tpu.memory_space<vmem>>, vector<1x1xf32>,
      %c0_67 = arith.constant 0 : index
      %c0_68 = arith.constant 0 : index
      %138 = vector.load %arg9[%c0_67, %c0_68] : memref<1x1xf32, #tpu.memory_space<vmem>>, vector<1x1xf32>
      %cst_69 = arith.constant 1.000000e+02 : f32
      %139 = vector.broadcast %cst_69 : f32 to vector<1x1xf32>
      %140 = arith.mulf %139, %138 : vector<1x1xf32>
      %cst_70 = arith.constant 8.000000e+00 : f32
      %141 = vector.broadcast %cst_70 : f32 to vector<1x1xf32>
      %142 = arith.divf %140, %141 : vector<1x1xf32>
      %c0_71 = arith.constant 0 : index
      %c0_72 = arith.constant 0 : index
      %143 = vector.load %arg4[%c0_71, %c0_72] : memref<1x1xf32, #tpu.memory_space<vmem>>, vector<1x1xf32>
      tpu.vector_store %arg4[%c0_71, %c0_72], %142 {strides = array<i32>} : memref<1x1xf32, #tpu.memory_space<vmem>>, vector<1x1xf32>,
    } else {
    }
    return
  }
  func.func @transform_0(%arg0: i32) -> (i32, i32) {
    %c0_i32 = arith.constant 0 : i32
    %c0_i32_0 = arith.constant 0 : i32
    %c0_i32_1 = arith.constant 0 : i32
    return %c0_i32, %c0_i32_0 : i32, i32
  }
  func.func @transform_1(%arg0: i32) -> (i32, i32) {
    %c0_i32 = arith.constant 0 : i32
    %c0_i32_0 = arith.constant 0 : i32
    %c0_i32_1 = arith.constant 0 : i32
    return %c0_i32, %c0_i32_0 : i32, i32
  }
  func.func @transform_2(%arg0: i32) -> (i32, i32) {
    %c0_i32 = arith.constant 0 : i32
    %c0_i32_0 = arith.constant 0 : i32
    %c0_i32_1 = arith.constant 0 : i32
    return %c0_i32, %c0_i32_0 : i32, i32
  }
  func.func @transform_3(%arg0: i32) -> (i32, i32) {
    %c0_i32 = arith.constant 0 : i32
    %c0_i32_0 = arith.constant 0 : i32
    %c0_i32_1 = arith.constant 0 : i32
    return %c0_i32, %c0_i32_0 : i32, i32
  }
}

</mosaic_0001>

<llo_original>
// kernel: tpu_custom_call.1
$region0: #{tpu_custom_call.1}
  #allocation0 [shape = 'u32[]', space=smem, size = 0x4, offset = 0x4, fixed_abs, tag = 'smem constant byte address 0x4 - core index']
  #allocation1 [shape = 'u32[72,128]{1,0:T(1,128)}', space=vmem, size = 0x9000, scoped, tag = 'internal scratch']
  #allocation2 [shape = 'f32[1,256]{1,0:T(1,128)}', space=vmem, size = 0x400, scoped, tag = 'scratch operand']
  #allocation3 [shape = 'f32[1,256]{1,0:T(1,128)}', space=vmem, size = 0x400, scoped, tag = 'scratch operand']
  #allocation4 [shape = 'f32[1,1]{1,0:T(1,128)}', space=vmem, size = 0x200, scoped, tag = 'scratch operand']
  #allocation5 [shape = 'f32[1,1]{1,0:T(1,128)}', space=vmem, size = 0x200, scoped, tag = 'scratch operand']
  #allocation6 [shape = 'f32[1,1]{1,0:T(1,128)}', space=vmem, size = 0x200, scoped, tag = 'scratch operand']
  %s0 = inlined_call_operand.hbm [shape: bf16[256,128], index: 0, kind: input, shape index: {}]
  %s1 = inlined_call_operand.hbm [shape: bf16[256,128], index: 1, kind: input, shape index: {}]
  %s2 = inlined_call_operand.hbm [shape: f32[1,1], index: 2, kind: output, shape index: {0}]
  %s3 = inlined_call_operand.hbm [shape: f32[1,1], index: 3, kind: output, shape index: {1}]
  %4 = xla_tuple %s2, %s3
  %s5 = sld [smem:[#allocation0]]
  $region42: #{tpu_custom_call.1} parent=0
    _
  %s7 = ssub.s32 1, %s5
  %s8 = scalar_select 0, %s7, %s5
  $region1: #{tpu_custom_call.1} parent=0
    #allocation7 [shape = 'u8[65536]{0}', space=vmem, size = 0x10000, scoped, tag = 'input window, operand 0, single buffered']
    #allocation8 [shape = 's32[1]{0}', space=sflag, size = 0x4, scoped, tag = 'scoped memory for tpu_custom_call.1']
    #allocation9 [shape = 's32[1]{0}', space=sflag, size = 0x4, scoped, tag = 'scoped memory for tpu_custom_call.1']
    #allocation10 [shape = 'u8[65536]{0}', space=vmem, size = 0x10000, scoped, tag = 'input window, operand 1, single buffered']
    #allocation11 [shape = 's32[1]{0}', space=sflag, size = 0x4, scoped, tag = 'scoped memory for tpu_custom_call.1']
    #allocation12 [shape = 'u8[512]{0}', space=vmem, size = 0x400, scoped, tag = 'output window, operand 0, single buffered']
    #allocation13 [shape = 'u8[512]{0}', space=vmem, size = 0x400, scoped, tag = 'output window, operand 1, single buffered']
    #allocation14 [shape = 's32[1]{0}', space=sflag, size = 0x4, scoped, tag = 'scoped memory for tpu_custom_call.1']
    %9 = vsyncpa [#allocation8], 0
    %10 = vsyncpa [#allocation11], 0
    %11 = vsyncpa [#allocation9], 0
    %12 = vsyncpa [#allocation14], 0
    // Predicated region
    $region2: #{tpu_custom_call.1} parent=1 // pred_check
      _
    $region3: #{tpu_custom_call.1} parent=1 // pred_check_branch
      %14 = sbr.rel (0) target = $region5
    $region4: #{tpu_custom_call.1} parent=1 // pred_region
      %16 = vsyncadd [#allocation8], 0
      %s17 = sshll.u32 %s0, 4
      %s18 = int_to_ptr.hbm [resolvable:$true] %s17
      %s19 = sshll.u32 [#allocation7], 4
      %s20 = int_to_ptr.vmem [resolvable:$true] %s19
      %25 = dma.hbm_to_vmem [thread:$0]  %s18, 2048, %s20, [#allocation8], 64, 64, 4
    $region5: #{tpu_custom_call.1} parent=1 // pred_fallthru
      _
    // Predicated region
    $region6: #{tpu_custom_call.1} parent=1 // pred_check
      _
    $region7: #{tpu_custom_call.1} parent=1 // pred_check_branch
      %27 = sbr.rel (0) target = $region9
    $region8: #{tpu_custom_call.1} parent=1 // pred_region
      %29 = vsyncadd [#allocation11], 0
      %s30 = sshll.u32 %s1, 4
      %s31 = int_to_ptr.hbm [resolvable:$true] %s30
      %s32 = sshll.u32 [#allocation10], 4
      %s33 = int_to_ptr.vmem [resolvable:$true] %s32
      %38 = dma.hbm_to_vmem [thread:$0]  %s31, 2048, %s33, [#allocation11], 64, 64, 4
    $region9: #{tpu_custom_call.1} parent=1 // pred_fallthru
      _
    // Predicated region
    $region10: #{tpu_custom_call.1} parent=1 // pred_check
      _
    $region11: #{tpu_custom_call.1} parent=1 // pred_check_branch
      %40 = sbr.rel (0) target = $region13
    $region12: #{tpu_custom_call.1} parent=1 // pred_region
      %42 = dma.done [#allocation8], 2048
    $region13: #{tpu_custom_call.1} parent=1 // pred_fallthru
      _
    // Predicated region
    $region14: #{tpu_custom_call.1} parent=1 // pred_check
      _
    $region15: #{tpu_custom_call.1} parent=1 // pred_check_branch
      %44 = sbr.rel (0) target = $region17
    $region16: #{tpu_custom_call.1} parent=1 // pred_region
      %46 = dma.done [#allocation11], 2048
    $region17: #{tpu_custom_call.1} parent=1 // pred_fallthru
      _
    %p47 = scmp.eq.s32.totalorder 0, 0
    // Predicated region
    $region18: #{tpu_custom_call.1} parent=1 // pred_check
      %p48 = pneg %p47
    $region19: #{tpu_custom_call.1} parent=1 // pred_check_branch
      %50 = sbr.rel (%p48) target = $region21
    $region20: #{tpu_custom_call.1} parent=1 // pred_region
      %v51 = vlaneseq
      %v52 = vand.u32 %v51, 127
      %v53 = vadd.s32 %v52, 128
      %vm54 = vcmp.lt.s32.totalorder %v52, 8
      %vm55 = vcmp.lt.s32.totalorder %v53, 8
      %v56 = vsel %vm54, -10.0, -1e+30
      %v57 = vsel %vm55, -10.0, -1e+30
      %v60 = vrot.slane %v57, 7
      %vm61 = vcmask 1040384
      %v62 = vsel %vm61, %v56, %v60
      %v64 = vlaneseq
      %vm65 = vcmp.ge.s32.totalorder %v64, 0
      %vm66 = vcmp.lt.s32.totalorder %v64, 256
      %vm67 = vmand %vm65, %vm66
      %68 = vst.msk [vmem:[#allocation2] sm:$0x3] %vm67, %v62
      %69 = vst.msk [vmem:[#allocation3] sm:$0x3] %vm67, 0.0
      %vm70 = vcmask 0
      %71 = vst.msk [vmem:[#allocation4] sm:$0x1] %vm70, 0.0
      %72 = vst.msk [vmem:[#allocation5] sm:$0x1] %vm70, 0.0
      %73 = vst.msk [vmem:[#allocation6] sm:$0x1] %vm70, 0.0
    $region21: #{tpu_custom_call.1} parent=1 // pred_fallthru
      _
    %s74 = smul.u32 0, 256
    %s75 = sshra.s32 %s74, 3
    %s76 = sand.u32 %s74, 7
    %s77 = smul.addr %s75, 4
    %s78 = scalar_lea.vmem [#allocation7], %s77
    %v79 = vld [vmem:[%s78] sm:$0xf]
    %v80 = vld [vmem:[%s78 + $0x4] sm:$0xf]
    %v81 = vld [vmem:[%s78 + $0x8] sm:$0xf]
    %v82 = vld [vmem:[%s78 + $0xc] sm:$0xf]
    %v83 = vld [vmem:[%s78 + $0x10] sm:$0xf]
    %v84 = vld [vmem:[%s78 + $0x14] sm:$0xf]
    %v85 = vld [vmem:[%s78 + $0x18] sm:$0xf]
    %v86 = vld [vmem:[%s78 + $0x1c] sm:$0xf]
    %v87 = vld [vmem:[%s78 + $0x20] sm:$0xf]
    %v88 = vld [vmem:[%s78 + $0x24] sm:$0xf]
    %v89 = vld [vmem:[%s78 + $0x28] sm:$0xf]
    %v90 = vld [vmem:[%s78 + $0x2c] sm:$0xf]
    %v91 = vld [vmem:[%s78 + $0x30] sm:$0xf]
    %v92 = vld [vmem:[%s78 + $0x34] sm:$0xf]
    %v93 = vld [vmem:[%s78 + $0x38] sm:$0xf]
    %v94 = vld [vmem:[%s78 + $0x3c] sm:$0xf]
    %v95 = vld [vmem:[%s78 + $0x40] sm:$0xf]
    %v96 = vld [vmem:[%s78 + $0x44] sm:$0xf]
    %v97 = vld [vmem:[%s78 + $0x48] sm:$0xf]
    %v98 = vld [vmem:[%s78 + $0x4c] sm:$0xf]
    %v99 = vld [vmem:[%s78 + $0x50] sm:$0xf]
    %v100 = vld [vmem:[%s78 + $0x54] sm:$0xf]
    %v101 = vld [vmem:[%s78 + $0x58] sm:$0xf]
    %v102 = vld [vmem:[%s78 + $0x5c] sm:$0xf]
    %v103 = vld [vmem:[%s78 + $0x60] sm:$0xf]
    %v104 = vld [vmem:[%s78 + $0x64] sm:$0xf]
    %v105 = vld [vmem:[%s78 + $0x68] sm:$0xf]
    %v106 = vld [vmem:[%s78 + $0x6c] sm:$0xf]
    %v107 = vld [vmem:[%s78 + $0x70] sm:$0xf]
    %v108 = vld [vmem:[%s78 + $0x74] sm:$0xf]
    %v109 = vld [vmem:[%s78 + $0x78] sm:$0xf]
    %v110 = vld [vmem:[%s78 + $0x7c] sm:$0xf]
    %s111 = smul.addr %s75, 4
    %s112 = scalar_lea.vmem [#allocation10], %s111
    %v113 = vld [vmem:[%s112] sm:$0xf]
    %v114 = vld [vmem:[%s112 + $0x4] sm:$0xf]
    %v115 = vld [vmem:[%s112 + $0x8] sm:$0xf]
    %v116 = vld [vmem:[%s112 + $0xc] sm:$0xf]
    %v117 = vld [vmem:[%s112 + $0x10] sm:$0xf]
    %v118 = vld [vmem:[%s112 + $0x14] sm:$0xf]
    %v119 = vld [vmem:[%s112 + $0x18] sm:$0xf]
    %v120 = vld [vmem:[%s112 + $0x1c] sm:$0xf]
    %v121 = vld [vmem:[%s112 + $0x20] sm:$0xf]
    %v122 = vld [vmem:[%s112 + $0x24] sm:$0xf]
    %v123 = vld [vmem:[%s112 + $0x28] sm:$0xf]
    %v124 = vld [vmem:[%s112 + $0x2c] sm:$0xf]
    %v125 = vld [vmem:[%s112 + $0x30] sm:$0xf]
    %v126 = vld [vmem:[%s112 + $0x34] sm:$0xf]
    %v127 = vld [vmem:[%s112 + $0x38] sm:$0xf]
    %v128 = vld [vmem:[%s112 + $0x3c] sm:$0xf]
    %v129 = vld [vmem:[%s112 + $0x40] sm:$0xf]
    %v130 = vld [vmem:[%s112 + $0x44] sm:$0xf]
    %v131 = vld [vmem:[%s112 + $0x48] sm:$0xf]
    %v132 = vld [vmem:[%s112 + $0x4c] sm:$0xf]
    %v133 = vld [vmem:[%s112 + $0x50] sm:$0xf]
    %v134 = vld [vmem:[%s112 + $0x54] sm:$0xf]
    %v135 = vld [vmem:[%s112 + $0x58] sm:$0xf]
    %v136 = vld [vmem:[%s112 + $0x5c] sm:$0xf]
    %v137 = vld [vmem:[%s112 + $0x60] sm:$0xf]
    %v138 = vld [vmem:[%s112 + $0x64] sm:$0xf]
    %v139 = vld [vmem:[%s112 + $0x68] sm:$0xf]
    %v140 = vld [vmem:[%s112 + $0x6c] sm:$0xf]
    %v141 = vld [vmem:[%s112 + $0x70] sm:$0xf]
    %v142 = vld [vmem:[%s112 + $0x74] sm:$0xf]
    %v143 = vld [vmem:[%s112 + $0x78] sm:$0xf]
    %v144 = vld [vmem:[%s112 + $0x7c] sm:$0xf]
    %v145 = vld [vmem:[#allocation7] sm:$0xf]
    %v146 = vld [vmem:[#allocation7 + $0x4] sm:$0xf]
    %v147 = vld [vmem:[#allocation7 + $0x8] sm:$0xf]
    %v148 = vld [vmem:[#allocation7 + $0xc] sm:$0xf]
    %v149 = vld [vmem:[#allocation7 + $0x10] sm:$0xf]
    %v150 = vld [vmem:[#allocation7 + $0x14] sm:$0xf]
    %v151 = vld [vmem:[#allocation7 + $0x18] sm:$0xf]
    %v152 = vld [vmem:[#allocation7 + $0x1c] sm:$0xf]
    %v153 = vld [vmem:[#allocation7 + $0x20] sm:$0xf]
    %v154 = vld [vmem:[#allocation7 + $0x24] sm:$0xf]
    %v155 = vld [vmem:[#allocation7 + $0x28] sm:$0xf]
    %v156 = vld [vmem:[#allocation7 + $0x2c] sm:$0xf]
    %v157 = vld [vmem:[#allocation7 + $0x30] sm:$0xf]
    %v158 = vld [vmem:[#allocation7 + $0x34] sm:$0xf]
    %v159 = vld [vmem:[#allocation7 + $0x38] sm:$0xf]
    %v160 = vld [vmem:[#allocation7 + $0x3c] sm:$0xf]
    %v161 = vld [vmem:[#allocation7 + $0x40] sm:$0xf]
    %v162 = vld [vmem:[#allocation7 + $0x44] sm:$0xf]
    %v163 = vld [vmem:[#allocation7 + $0x48] sm:$0xf]
    %v164 = vld [vmem:[#allocation7 + $0x4c] sm:$0xf]
    %v165 = vld [vmem:[#allocation7 + $0x50] sm:$0xf]
    %v166 = vld [vmem:[#allocation7 + $0x54] sm:$0xf]
    %v167 = vld [vmem:[#allocation7 + $0x58] sm:$0xf]
    %v168 = vld [vmem:[#allocation7 + $0x5c] sm:$0xf]
    %v169 = vld [vmem:[#allocation7 + $0x60] sm:$0xf]
    %v170 = vld [vmem:[#allocation7 + $0x64] sm:$0xf]
    %v171 = vld [vmem:[#allocation7 + $0x68] sm:$0xf]
    %v172 = vld [vmem:[#allocation7 + $0x6c] sm:$0xf]
    %v173 = vld [vmem:[#allocation7 + $0x70] sm:$0xf]
    %v174 = vld [vmem:[#allocation7 + $0x74] sm:$0xf]
    %v175 = vld [vmem:[#allocation7 + $0x78] sm:$0xf]
    %v176 = vld [vmem:[#allocation7 + $0x7c] sm:$0xf]
    %v177 = vld [vmem:[#allocation10] sm:$0xf]
    %v178 = vld [vmem:[#allocation10 + $0x4] sm:$0xf]
    %v179 = vld [vmem:[#allocation10 + $0x8] sm:$0xf]
    %v180 = vld [vmem:[#allocation10 + $0xc] sm:$0xf]
    %v181 = vld [vmem:[#allocation10 + $0x10] sm:$0xf]
    %v182 = vld [vmem:[#allocation10 + $0x14] sm:$0xf]
    %v183 = vld [vmem:[#allocation10 + $0x18] sm:$0xf]
    %v184 = vld [vmem:[#allocation10 + $0x1c] sm:$0xf]
    %v185 = vld [vmem:[#allocation10 + $0x20] sm:$0xf]
    %v186 = vld [vmem:[#allocation10 + $0x24] sm:$0xf]
    %v187 = vld [vmem:[#allocation10 + $0x28] sm:$0xf]
    %v188 = vld [vmem:[#allocation10 + $0x2c] sm:$0xf]
    %v189 = vld [vmem:[#allocation10 + $0x30] sm:$0xf]
    %v190 = vld [vmem:[#allocation10 + $0x34] sm:$0xf]
    %v191 = vld [vmem:[#allocation10 + $0x38] sm:$0xf]
    %v192 = vld [vmem:[#allocation10 + $0x3c] sm:$0xf]
    %v193 = vld [vmem:[#allocation10 + $0x40] sm:$0xf]
    %v194 = vld [vmem:[#allocation10 + $0x44] sm:$0xf]
    %v195 = vld [vmem:[#allocation10 + $0x48] sm:$0xf]
    %v196 = vld [vmem:[#allocation10 + $0x4c] sm:$0xf]
    %v197 = vld [vmem:[#allocation10 + $0x50] sm:$0xf]
    %v198 = vld [vmem:[#allocation10 + $0x54] sm:$0xf]
    %v199 = vld [vmem:[#allocation10 + $0x58] sm:$0xf]
    %v200 = vld [vmem:[#allocation10 + $0x5c] sm:$0xf]
    %v201 = vld [vmem:[#allocation10 + $0x60] sm:$0xf]
    %v202 = vld [vmem:[#allocation10 + $0x64] sm:$0xf]
    %v203 = vld [vmem:[#allocation10 + $0x68] sm:$0xf]
    %v204 = vld [vmem:[#allocation10 + $0x6c] sm:$0xf]
    %v205 = vld [vmem:[#allocation10 + $0x70] sm:$0xf]
    %v206 = vld [vmem:[#allocation10 + $0x74] sm:$0xf]
    %v207 = vld [vmem:[#allocation10 + $0x78] sm:$0xf]
    %v208 = vld [vmem:[#allocation10 + $0x7c] sm:$0xf]
    %v241 = vunpack.c.l.b16 %v79
    %v242 = vunpack.c.l.b16 %v80
    %v243 = vunpack.c.l.b16 %v81
    %v244 = vunpack.c.l.b16 %v82
    %v245 = vunpack.c.l.b16 %v83
    %v246 = vunpack.c.l.b16 %v84
    %v247 = vunpack.c.l.b16 %v85
    %v248 = vunpack.c.l.b16 %v86
    %v249 = vunpack.c.l.b16 %v87
    %v250 = vunpack.c.l.b16 %v88
    %v251 = vunpack.c.l.b16 %v89
    %v252 = vunpack.c.l.b16 %v90
    %v253 = vunpack.c.l.b16 %v91
    %v254 = vunpack.c.l.b16 %v92
    %v255 = vunpack.c.l.b16 %v93
    %v256 = vunpack.c.l.b16 %v94
    %v257 = vunpack.c.l.b16 %v95
    %v258 = vunpack.c.l.b16 %v96
    %v259 = vunpack.c.l.b16 %v97
    %v260 = vunpack.c.l.b16 %v98
    %v261 = vunpack.c.l.b16 %v99
    %v262 = vunpack.c.l.b16 %v100
    %v263 = vunpack.c.l.b16 %v101
    %v264 = vunpack.c.l.b16 %v102
    %v265 = vunpack.c.l.b16 %v103
    %v266 = vunpack.c.l.b16 %v104
    %v267 = vunpack.c.l.b16 %v105
    %v268 = vunpack.c.l.b16 %v106
    %v269 = vunpack.c.l.b16 %v107
    %v270 = vunpack.c.l.b16 %v108
    %v271 = vunpack.c.l.b16 %v109
    %v272 = vunpack.c.l.b16 %v110
    %v273 = vpack.c.b16 %v242, %v241
    %v274 = vpack.c.b16 %v244, %v243
    %v275 = vpack.c.b16 %v246, %v245
    %v276 = vpack.c.b16 %v248, %v247
    %v277 = vpack.c.b16 %v250, %v249
    %v278 = vpack.c.b16 %v252, %v251
    %v279 = vpack.c.b16 %v254, %v253
    %v280 = vpack.c.b16 %v256, %v255
    %v281 = vpack.c.b16 %v258, %v257
    %v282 = vpack.c.b16 %v260, %v259
    %v283 = vpack.c.b16 %v262, %v261
    %v284 = vpack.c.b16 %v264, %v263
    %v285 = vpack.c.b16 %v266, %v265
    %v286 = vpack.c.b16 %v268, %v267
    %v287 = vpack.c.b16 %v270, %v269
    %v288 = vpack.c.b16 %v272, %v271
    %v337 = vunpack.c.l.b16 %v177
    %v338 = vunpack.c.l.b16 %v178
    %v339 = vunpack.c.l.b16 %v179
    %v340 = vunpack.c.l.b16 %v180
    %v341 = vunpack.c.l.b16 %v181
    %v342 = vunpack.c.l.b16 %v182
    %v343 = vunpack.c.l.b16 %v183
    %v344 = vunpack.c.l.b16 %v184
    %v345 = vunpack.c.l.b16 %v185
    %v346 = vunpack.c.l.b16 %v186
    %v347 = vunpack.c.l.b16 %v187
    %v348 = vunpack.c.l.b16 %v188
    %v349 = vunpack.c.l.b16 %v189
    %v350 = vunpack.c.l.b16 %v190
    %v351 = vunpack.c.l.b16 %v191
    %v352 = vunpack.c.l.b16 %v192
    %v353 = vunpack.c.l.b16 %v193
    %v354 = vunpack.c.l.b16 %v194
    %v355 = vunpack.c.l.b16 %v195
    %v356 = vunpack.c.l.b16 %v196
    %v357 = vunpack.c.l.b16 %v197
    %v358 = vunpack.c.l.b16 %v198
    %v359 = vunpack.c.l.b16 %v199
    %v360 = vunpack.c.l.b16 %v200
    %v361 = vunpack.c.l.b16 %v201
    %v362 = vunpack.c.l.b16 %v202
    %v363 = vunpack.c.l.b16 %v203
    %v364 = vunpack.c.l.b16 %v204
    %v365 = vunpack.c.l.b16 %v205
    %v366 = vunpack.c.l.b16 %v206
    %v367 = vunpack.c.l.b16 %v207
    %v368 = vunpack.c.l.b16 %v208
    %v369 = vpack.c.b16 %v338, %v337
    %v370 = vpack.c.b16 %v340, %v339
    %v371 = vpack.c.b16 %v342, %v341
    %v372 = vpack.c.b16 %v344, %v343
    %v373 = vpack.c.b16 %v346, %v345
    %v374 = vpack.c.b16 %v348, %v347
    %v375 = vpack.c.b16 %v350, %v349
    %v376 = vpack.c.b16 %v352, %v351
    %v377 = vpack.c.b16 %v354, %v353
    %v378 = vpack.c.b16 %v356, %v355
    %v379 = vpack.c.b16 %v358, %v357
    %v380 = vpack.c.b16 %v360, %v359
    %v381 = vpack.c.b16 %v362, %v361
    %v382 = vpack.c.b16 %v364, %v363
    %v383 = vpack.c.b16 %v366, %v365
    %v384 = vpack.c.b16 %v368, %v367
    %401 = vmatpush.bf16.xpose.msra.mxu0 %v376
    %402 = vmatpush.bf16.xpose.msra.mxu0 %v375
    %403 = vmatpush.bf16.xpose.msra.mxu0 %v374
    %404 = vmatpush.bf16.xpose.msra.mxu0 %v373
    %405 = vmatpush.bf16.xpose.msra.mxu0 %v372
    %406 = vmatpush.bf16.xpose.msra.mxu0 %v371
    %407 = vmatpush.bf16.xpose.msra.mxu0 %v370
    %408 = vmatpush.bf16.xpose.msra.mxu0 %v369
    %409 = vmatmul.bf16.gmra.mxu0 %v273
    %v410 = vpop.f32.mrf.mxu0
    %v411 = vadd.f32 0.0, %v410
    %v412 = vpop.f32.mrf.mxu0
    %v413 = vadd.f32 0.0, %v412
    %414 = vmatmul.bf16.gmra.mxu0 %v274
    %v415 = vpop.f32.mrf.mxu0
    %v416 = vadd.f32 0.0, %v415
    %v417 = vpop.f32.mrf.mxu0
    %v418 = vadd.f32 0.0, %v417
    %419 = vmatmul.bf16.gmra.mxu0 %v275
    %v420 = vpop.f32.mrf.mxu0
    %v421 = vadd.f32 0.0, %v420
    %v422 = vpop.f32.mrf.mxu0
    %v423 = vadd.f32 0.0, %v422
    %424 = vmatmul.bf16.gmra.mxu0 %v276
    %v425 = vpop.f32.mrf.mxu0
    %v426 = vadd.f32 0.0, %v425
    %v427 = vpop.f32.mrf.mxu0
    %v428 = vadd.f32 0.0, %v427
    %429 = vmatmul.bf16.gmra.mxu0 %v277
    %v430 = vpop.f32.mrf.mxu0
    %v431 = vadd.f32 0.0, %v430
    %v432 = vpop.f32.mrf.mxu0
    %v433 = vadd.f32 0.0, %v432
    %434 = vmatmul.bf16.gmra.mxu0 %v278
    %v435 = vpop.f32.mrf.mxu0
    %v436 = vadd.f32 0.0, %v435
    %v437 = vpop.f32.mrf.mxu0
    %v438 = vadd.f32 0.0, %v437
    %439 = vmatmul.bf16.gmra.mxu0 %v279
    %v440 = vpop.f32.mrf.mxu0
    %v441 = vadd.f32 0.0, %v440
    %v442 = vpop.f32.mrf.mxu0
    %v443 = vadd.f32 0.0, %v442
    %444 = vmatmul.bf16.gmra.mxu0 %v280
    %v445 = vpop.f32.mrf.mxu0
    %v446 = vadd.f32 0.0, %v445
    %v447 = vpop.f32.mrf.mxu0
    %v448 = vadd.f32 0.0, %v447
    %449 = vmatmul.bf16.gmra.mxu0 %v281
    %v450 = vpop.f32.mrf.mxu0
    %v451 = vadd.f32 0.0, %v450
    %v452 = vpop.f32.mrf.mxu0
    %v453 = vadd.f32 0.0, %v452
    %454 = vmatmul.bf16.gmra.mxu0 %v282
    %v455 = vpop.f32.mrf.mxu0
    %v456 = vadd.f32 0.0, %v455
    %v457 = vpop.f32.mrf.mxu0
    %v458 = vadd.f32 0.0, %v457
    %459 = vmatmul.bf16.gmra.mxu0 %v283
    %v460 = vpop.f32.mrf.mxu0
    %v461 = vadd.f32 0.0, %v460
    %v462 = vpop.f32.mrf.mxu0
    %v463 = vadd.f32 0.0, %v462
    %464 = vmatmul.bf16.gmra.mxu0 %v284
    %v465 = vpop.f32.mrf.mxu0
    %v466 = vadd.f32 0.0, %v465
    %v467 = vpop.f32.mrf.mxu0
    %v468 = vadd.f32 0.0, %v467
    %469 = vmatmul.bf16.gmra.mxu0 %v285
    %v470 = vpop.f32.mrf.mxu0
    %v471 = vadd.f32 0.0, %v470
    %v472 = vpop.f32.mrf.mxu0
    %v473 = vadd.f32 0.0, %v472
    %474 = vmatmul.bf16.gmra.mxu0 %v286
    %v475 = vpop.f32.mrf.mxu0
    %v476 = vadd.f32 0.0, %v475
    %v477 = vpop.f32.mrf.mxu0
    %v478 = vadd.f32 0.0, %v477
    %479 = vmatmul.bf16.gmra.mxu0 %v287
    %v480 = vpop.f32.mrf.mxu0
    %v481 = vadd.f32 0.0, %v480
    %v482 = vpop.f32.mrf.mxu0
    %v483 = vadd.f32 0.0, %v482
    %484 = vmatmul.bf16.gmra.mxu0 %v288
    %v485 = vpop.f32.mrf.mxu0
    %v486 = vadd.f32 0.0, %v485
    %v487 = vpop.f32.mrf.mxu0
    %v488 = vadd.f32 0.0, %v487
    %489 = vdwg.mxu0
    %490 = vmatpush.bf16.xpose.msra.mxu0 %v384
    %491 = vmatpush.bf16.xpose.msra.mxu0 %v383
    %492 = vmatpush.bf16.xpose.msra.mxu0 %v382
    %493 = vmatpush.bf16.xpose.msra.mxu0 %v381
    %494 = vmatpush.bf16.xpose.msra.mxu0 %v380
    %495 = vmatpush.bf16.xpose.msra.mxu0 %v379
    %496 = vmatpush.bf16.xpose.msra.mxu0 %v378
    %497 = vmatpush.bf16.xpose.msra.mxu0 %v377
    %498 = vmatmul.bf16.gmra.mxu0 %v273
    %v499 = vpop.f32.mrf.mxu0
    %v500 = vadd.f32 0.0, %v499
    %v501 = vpop.f32.mrf.mxu0
    %v502 = vadd.f32 0.0, %v501
    %503 = vmatmul.bf16.gmra.mxu0 %v274
    %v504 = vpop.f32.mrf.mxu0
    %v505 = vadd.f32 0.0, %v504
    %v506 = vpop.f32.mrf.mxu0
    %v507 = vadd.f32 0.0, %v506
    %508 = vmatmul.bf16.gmra.mxu0 %v275
    %v509 = vpop.f32.mrf.mxu0
    %v510 = vadd.f32 0.0, %v509
    %v511 = vpop.f32.mrf.mxu0
    %v512 = vadd.f32 0.0, %v511
    %513 = vmatmul.bf16.gmra.mxu0 %v276
    %v514 = vpop.f32.mrf.mxu0
    %v515 = vadd.f32 0.0, %v514
    %v516 = vpop.f32.mrf.mxu0
    %v517 = vadd.f32 0.0, %v516
    %518 = vmatmul.bf16.gmra.mxu0 %v277
    %v519 = vpop.f32.mrf.mxu0
    %v520 = vadd.f32 0.0, %v519
    %v521 = vpop.f32.mrf.mxu0
    %v522 = vadd.f32 0.0, %v521
    %523 = vmatmul.bf16.gmra.mxu0 %v278
    %v524 = vpop.f32.mrf.mxu0
    %v525 = vadd.f32 0.0, %v524
    %v526 = vpop.f32.mrf.mxu0
    %v527 = vadd.f32 0.0, %v526
    %528 = vmatmul.bf16.gmra.mxu0 %v279
    %v529 = vpop.f32.mrf.mxu0
    %v530 = vadd.f32 0.0, %v529
    %v531 = vpop.f32.mrf.mxu0
    %v532 = vadd.f32 0.0, %v531
    %533 = vmatmul.bf16.gmra.mxu0 %v280
    %v534 = vpop.f32.mrf.mxu0
    %v535 = vadd.f32 0.0, %v534
    %v536 = vpop.f32.mrf.mxu0
    %v537 = vadd.f32 0.0, %v536
    %538 = vmatmul.bf16.gmra.mxu0 %v281
    %v539 = vpop.f32.mrf.mxu0
    %v540 = vadd.f32 0.0, %v539
    %v541 = vpop.f32.mrf.mxu0
    %v542 = vadd.f32 0.0, %v541
    %543 = vmatmul.bf16.gmra.mxu0 %v282
    %v544 = vpop.f32.mrf.mxu0
    %v545 = vadd.f32 0.0, %v544
    %v546 = vpop.f32.mrf.mxu0
    %v547 = vadd.f32 0.0, %v546
    %548 = vmatmul.bf16.gmra.mxu0 %v283
    %v549 = vpop.f32.mrf.mxu0
    %v550 = vadd.f32 0.0, %v549
    %v551 = vpop.f32.mrf.mxu0
    %v552 = vadd.f32 0.0, %v551
    %553 = vmatmul.bf16.gmra.mxu0 %v284
    %v554 = vpop.f32.mrf.mxu0
    %v555 = vadd.f32 0.0, %v554
    %v556 = vpop.f32.mrf.mxu0
    %v557 = vadd.f32 0.0, %v556
    %558 = vmatmul.bf16.gmra.mxu0 %v285
    %v559 = vpop.f32.mrf.mxu0
    %v560 = vadd.f32 0.0, %v559
    %v561 = vpop.f32.mrf.mxu0
    %v562 = vadd.f32 0.0, %v561
    %563 = vmatmul.bf16.gmra.mxu0 %v286
    %v564 = vpop.f32.mrf.mxu0
    %v565 = vadd.f32 0.0, %v564
    %v566 = vpop.f32.mrf.mxu0
    %v567 = vadd.f32 0.0, %v566
    %568 = vmatmul.bf16.gmra.mxu0 %v287
    %v569 = vpop.f32.mrf.mxu0
    %v570 = vadd.f32 0.0, %v569
    %v571 = vpop.f32.mrf.mxu0
    %v572 = vadd.f32 0.0, %v571
    %573 = vmatmul.bf16.gmra.mxu0 %v288
    %v574 = vpop.f32.mrf.mxu0
    %v575 = vadd.f32 0.0, %v574
    %v576 = vpop.f32.mrf.mxu0
    %v577 = vadd.f32 0.0, %v576
    %578 = vdwg.mxu0
    %v579 = vmul.f32 %v411, 10.0
    %v580 = vmul.f32 %v500, 10.0
    %v581 = vmul.f32 %v413, 10.0
    %v582 = vmul.f32 %v502, 10.0
    %v583 = vmul.f32 %v416, 10.0
    %v584 = vmul.f32 %v505, 10.0
    %v585 = vmul.f32 %v418, 10.0
    %v586 = vmul.f32 %v507, 10.0
    %v587 = vmul.f32 %v421, 10.0
    %v588 = vmul.f32 %v510, 10.0
    %v589 = vmul.f32 %v423, 10.0
    %v590 = vmul.f32 %v512, 10.0
    %v591 = vmul.f32 %v426, 10.0
    %v592 = vmul.f32 %v515, 10.0
    %v593 = vmul.f32 %v428, 10.0
    %v594 = vmul.f32 %v517, 10.0
    %v595 = vmul.f32 %v431, 10.0
    %v596 = vmul.f32 %v520, 10.0
    %v597 = vmul.f32 %v433, 10.0
    %v598 = vmul.f32 %v522, 10.0
    %v599 = vmul.f32 %v436, 10.0
    %v600 = vmul.f32 %v525, 10.0
    %v601 = vmul.f32 %v438, 10.0
    %v602 = vmul.f32 %v527, 10.0
    %v603 = vmul.f32 %v441, 10.0
    %v604 = vmul.f32 %v530, 10.0
    %v605 = vmul.f32 %v443, 10.0
    %v606 = vmul.f32 %v532, 10.0
    %v607 = vmul.f32 %v446, 10.0
    %v608 = vmul.f32 %v535, 10.0
    %v609 = vmul.f32 %v448, 10.0
    %v610 = vmul.f32 %v537, 10.0
    %v611 = vmul.f32 %v451, 10.0
    %v612 = vmul.f32 %v540, 10.0
    %v613 = vmul.f32 %v453, 10.0
    %v614 = vmul.f32 %v542, 10.0
    %v615 = vmul.f32 %v456, 10.0
    %v616 = vmul.f32 %v545, 10.0
    %v617 = vmul.f32 %v458, 10.0
    %v618 = vmul.f32 %v547, 10.0
    %v619 = vmul.f32 %v461, 10.0
    %v620 = vmul.f32 %v550, 10.0
    %v621 = vmul.f32 %v463, 10.0
    %v622 = vmul.f32 %v552, 10.0
    %v623 = vmul.f32 %v466, 10.0
    %v624 = vmul.f32 %v555, 10.0
    %v625 = vmul.f32 %v468, 10.0
    %v626 = vmul.f32 %v557, 10.0
    %v627 = vmul.f32 %v471, 10.0
    %v628 = vmul.f32 %v560, 10.0
    %v629 = vmul.f32 %v473, 10.0
    %v630 = vmul.f32 %v562, 10.0
    %v631 = vmul.f32 %v476, 10.0
    %v632 = vmul.f32 %v565, 10.0
    %v633 = vmul.f32 %v478, 10.0
    %v634 = vmul.f32 %v567, 10.0
    %v635 = vmul.f32 %v481, 10.0
    %v636 = vmul.f32 %v570, 10.0
    %v637 = vmul.f32 %v483, 10.0
    %v638 = vmul.f32 %v572, 10.0
    %v639 = vmul.f32 %v486, 10.0
    %v640 = vmul.f32 %v575, 10.0
    %v641 = vmul.f32 %v488, 10.0
    %v642 = vmul.f32 %v577, 10.0
    %v675 = vunpack.c.l.b16 %v145
    %v676 = vunpack.c.l.b16 %v146
    %v677 = vunpack.c.l.b16 %v147
    %v678 = vunpack.c.l.b16 %v148
    %v679 = vunpack.c.l.b16 %v149
    %v680 = vunpack.c.l.b16 %v150
    %v681 = vunpack.c.l.b16 %v151
    %v682 = vunpack.c.l.b16 %v152
    %v683 = vunpack.c.l.b16 %v153
    %v684 = vunpack.c.l.b16 %v154
    %v685 = vunpack.c.l.b16 %v155
    %v686 = vunpack.c.l.b16 %v156
    %v687 = vunpack.c.l.b16 %v157
    %v688 = vunpack.c.l.b16 %v158
    %v689 = vunpack.c.l.b16 %v159
    %v690 = vunpack.c.l.b16 %v160
    %v691 = vunpack.c.l.b16 %v161
    %v692 = vunpack.c.l.b16 %v162
    %v693 = vunpack.c.l.b16 %v163
    %v694 = vunpack.c.l.b16 %v164
    %v695 = vunpack.c.l.b16 %v165
    %v696 = vunpack.c.l.b16 %v166
    %v697 = vunpack.c.l.b16 %v167
    %v698 = vunpack.c.l.b16 %v168
    %v699 = vunpack.c.l.b16 %v169
    %v700 = vunpack.c.l.b16 %v170
    %v701 = vunpack.c.l.b16 %v171
    %v702 = vunpack.c.l.b16 %v172
    %v703 = vunpack.c.l.b16 %v173
    %v704 = vunpack.c.l.b16 %v174
    %v705 = vunpack.c.l.b16 %v175
    %v706 = vunpack.c.l.b16 %v176
    %v707 = vpack.c.b16 %v676, %v675
    %v708 = vpack.c.b16 %v678, %v677
    %v709 = vpack.c.b16 %v680, %v679
    %v710 = vpack.c.b16 %v682, %v681
    %v711 = vpack.c.b16 %v684, %v683
    %v712 = vpack.c.b16 %v686, %v685
    %v713 = vpack.c.b16 %v688, %v687
    %v714 = vpack.c.b16 %v690, %v689
    %v715 = vpack.c.b16 %v692, %v691
    %v716 = vpack.c.b16 %v694, %v693
    %v717 = vpack.c.b16 %v696, %v695
    %v718 = vpack.c.b16 %v698, %v697
    %v719 = vpack.c.b16 %v700, %v699
    %v720 = vpack.c.b16 %v702, %v701
    %v721 = vpack.c.b16 %v704, %v703
    %v722 = vpack.c.b16 %v706, %v705
    %739 = vmatpush.bf16.xpose.msra.mxu0 %v714
    %740 = vmatpush.bf16.xpose.msra.mxu0 %v713
    %741 = vmatpush.bf16.xpose.msra.mxu0 %v712
    %742 = vmatpush.bf16.xpose.msra.mxu0 %v711
    %743 = vmatpush.bf16.xpose.msra.mxu0 %v710
    %744 = vmatpush.bf16.xpose.msra.mxu0 %v709
    %745 = vmatpush.bf16.xpose.msra.mxu0 %v708
    %746 = vmatpush.bf16.xpose.msra.mxu0 %v707
    %747 = vmatmul.bf16.gmra.mxu0 %v273
    %v748 = vpop.f32.mrf.mxu0
    %v749 = vadd.f32 0.0, %v748
    %v750 = vpop.f32.mrf.mxu0
    %v751 = vadd.f32 0.0, %v750
    %752 = vmatmul.bf16.gmra.mxu0 %v274
    %v753 = vpop.f32.mrf.mxu0
    %v754 = vadd.f32 0.0, %v753
    %v755 = vpop.f32.mrf.mxu0
    %v756 = vadd.f32 0.0, %v755
    %757 = vmatmul.bf16.gmra.mxu0 %v275
    %v758 = vpop.f32.mrf.mxu0
    %v759 = vadd.f32 0.0, %v758
    %v760 = vpop.f32.mrf.mxu0
    %v761 = vadd.f32 0.0, %v760
    %762 = vmatmul.bf16.gmra.mxu0 %v276
    %v763 = vpop.f32.mrf.mxu0
    %v764 = vadd.f32 0.0, %v763
    %v765 = vpop.f32.mrf.mxu0
    %v766 = vadd.f32 0.0, %v765
    %767 = vmatmul.bf16.gmra.mxu0 %v277
    %v768 = vpop.f32.mrf.mxu0
    %v769 = vadd.f32 0.0, %v768
    %v770 = vpop.f32.mrf.mxu0
    %v771 = vadd.f32 0.0, %v770
    %772 = vmatmul.bf16.gmra.mxu0 %v278
    %v773 = vpop.f32.mrf.mxu0
    %v774 = vadd.f32 0.0, %v773
    %v775 = vpop.f32.mrf.mxu0
    %v776 = vadd.f32 0.0, %v775
    %777 = vmatmul.bf16.gmra.mxu0 %v279
    %v778 = vpop.f32.mrf.mxu0
    %v779 = vadd.f32 0.0, %v778
    %v780 = vpop.f32.mrf.mxu0
    %v781 = vadd.f32 0.0, %v780
    %782 = vmatmul.bf16.gmra.mxu0 %v280
    %v783 = vpop.f32.mrf.mxu0
    %v784 = vadd.f32 0.0, %v783
    %v785 = vpop.f32.mrf.mxu0
    %v786 = vadd.f32 0.0, %v785
    %787 = vmatmul.bf16.gmra.mxu0 %v281
    %v788 = vpop.f32.mrf.mxu0
    %v789 = vadd.f32 0.0, %v788
    %v790 = vpop.f32.mrf.mxu0
    %v791 = vadd.f32 0.0, %v790
    %792 = vmatmul.bf16.gmra.mxu0 %v282
    %v793 = vpop.f32.mrf.mxu0
    %v794 = vadd.f32 0.0, %v793
    %v795 = vpop.f32.mrf.mxu0
    %v796 = vadd.f32 0.0, %v795
    %797 = vmatmul.bf16.gmra.mxu0 %v283
    %v798 = vpop.f32.mrf.mxu0
    %v799 = vadd.f32 0.0, %v798
    %v800 = vpop.f32.mrf.mxu0
    %v801 = vadd.f32 0.0, %v800
    %802 = vmatmul.bf16.gmra.mxu0 %v284
    %v803 = vpop.f32.mrf.mxu0
    %v804 = vadd.f32 0.0, %v803
    %v805 = vpop.f32.mrf.mxu0
    %v806 = vadd.f32 0.0, %v805
    %807 = vmatmul.bf16.gmra.mxu0 %v285
    %v808 = vpop.f32.mrf.mxu0
    %v809 = vadd.f32 0.0, %v808
    %v810 = vpop.f32.mrf.mxu0
    %v811 = vadd.f32 0.0, %v810
    %812 = vmatmul.bf16.gmra.mxu0 %v286
    %v813 = vpop.f32.mrf.mxu0
    %v814 = vadd.f32 0.0, %v813
    %v815 = vpop.f32.mrf.mxu0
    %v816 = vadd.f32 0.0, %v815
    %817 = vmatmul.bf16.gmra.mxu0 %v287
    %v818 = vpop.f32.mrf.mxu0
    %v819 = vadd.f32 0.0, %v818
    %v820 = vpop.f32.mrf.mxu0
    %v821 = vadd.f32 0.0, %v820
    %822 = vmatmul.bf16.gmra.mxu0 %v288
    %v823 = vpop.f32.mrf.mxu0
    %v824 = vadd.f32 0.0, %v823
    %v825 = vpop.f32.mrf.mxu0
    %v826 = vadd.f32 0.0, %v825
    %827 = vdwg.mxu0
    %828 = vmatpush.bf16.xpose.msra.mxu0 %v722
    %829 = vmatpush.bf16.xpose.msra.mxu0 %v721
    %830 = vmatpush.bf16.xpose.msra.mxu0 %v720
    %831 = vmatpush.bf16.xpose.msra.mxu0 %v719
    %832 = vmatpush.bf16.xpose.msra.mxu0 %v718
    %833 = vmatpush.bf16.xpose.msra.mxu0 %v717
    %834 = vmatpush.bf16.xpose.msra.mxu0 %v716
    %835 = vmatpush.bf16.xpose.msra.mxu0 %v715
    %836 = vmatmul.bf16.gmra.mxu0 %v273
    %v837 = vpop.f32.mrf.mxu0
    %v838 = vadd.f32 0.0, %v837
    %v839 = vpop.f32.mrf.mxu0
    %v840 = vadd.f32 0.0, %v839
    %841 = vmatmul.bf16.gmra.mxu0 %v274
    %v842 = vpop.f32.mrf.mxu0
    %v843 = vadd.f32 0.0, %v842
    %v844 = vpop.f32.mrf.mxu0
    %v845 = vadd.f32 0.0, %v844
    %846 = vmatmul.bf16.gmra.mxu0 %v275
    %v847 = vpop.f32.mrf.mxu0
    %v848 = vadd.f32 0.0, %v847
    %v849 = vpop.f32.mrf.mxu0
    %v850 = vadd.f32 0.0, %v849
    %851 = vmatmul.bf16.gmra.mxu0 %v276
    %v852 = vpop.f32.mrf.mxu0
    %v853 = vadd.f32 0.0, %v852
    %v854 = vpop.f32.mrf.mxu0
    %v855 = vadd.f32 0.0, %v854
    %856 = vmatmul.bf16.gmra.mxu0 %v277
    %v857 = vpop.f32.mrf.mxu0
    %v858 = vadd.f32 0.0, %v857
    %v859 = vpop.f32.mrf.mxu0
    %v860 = vadd.f32 0.0, %v859
    %861 = vmatmul.bf16.gmra.mxu0 %v278
    %v862 = vpop.f32.mrf.mxu0
    %v863 = vadd.f32 0.0, %v862
    %v864 = vpop.f32.mrf.mxu0
    %v865 = vadd.f32 0.0, %v864
    %866 = vmatmul.bf16.gmra.mxu0 %v279
    %v867 = vpop.f32.mrf.mxu0
    %v868 = vadd.f32 0.0, %v867
    %v869 = vpop.f32.mrf.mxu0
    %v870 = vadd.f32 0.0, %v869
    %871 = vmatmul.bf16.gmra.mxu0 %v280
    %v872 = vpop.f32.mrf.mxu0
    %v873 = vadd.f32 0.0, %v872
    %v874 = vpop.f32.mrf.mxu0
    %v875 = vadd.f32 0.0, %v874
    %876 = vmatmul.bf16.gmra.mxu0 %v281
    %v877 = vpop.f32.mrf.mxu0
    %v878 = vadd.f32 0.0, %v877
    %v879 = vpop.f32.mrf.mxu0
    %v880 = vadd.f32 0.0, %v879
    %881 = vmatmul.bf16.gmra.mxu0 %v282
    %v882 = vpop.f32.mrf.mxu0
    %v883 = vadd.f32 0.0, %v882
    %v884 = vpop.f32.mrf.mxu0
    %v885 = vadd.f32 0.0, %v884
    %886 = vmatmul.bf16.gmra.mxu0 %v283
    %v887 = vpop.f32.mrf.mxu0
    %v888 = vadd.f32 0.0, %v887
    %v889 = vpop.f32.mrf.mxu0
    %v890 = vadd.f32 0.0, %v889
    %891 = vmatmul.bf16.gmra.mxu0 %v284
    %v892 = vpop.f32.mrf.mxu0
    %v893 = vadd.f32 0.0, %v892
    %v894 = vpop.f32.mrf.mxu0
    %v895 = vadd.f32 0.0, %v894
    %896 = vmatmul.bf16.gmra.mxu0 %v285
    %v897 = vpop.f32.mrf.mxu0
    %v898 = vadd.f32 0.0, %v897
    %v899 = vpop.f32.mrf.mxu0
    %v900 = vadd.f32 0.0, %v899
    %901 = vmatmul.bf16.gmra.mxu0 %v286
    %v902 = vpop.f32.mrf.mxu0
    %v903 = vadd.f32 0.0, %v902
    %v904 = vpop.f32.mrf.mxu0
    %v905 = vadd.f32 0.0, %v904
    %906 = vmatmul.bf16.gmra.mxu0 %v287
    %v907 = vpop.f32.mrf.mxu0
    %v908 = vadd.f32 0.0, %v907
    %v909 = vpop.f32.mrf.mxu0
    %v910 = vadd.f32 0.0, %v909
    %911 = vmatmul.bf16.gmra.mxu0 %v288
    %v912 = vpop.f32.mrf.mxu0
    %v913 = vadd.f32 0.0, %v912
    %v914 = vpop.f32.mrf.mxu0
    %v915 = vadd.f32 0.0, %v914
    %916 = vdwg.mxu0
    %v917 = vmul.f32 %v749, 10.0
    %v918 = vmul.f32 %v838, 10.0
    %v919 = vmul.f32 %v751, 10.0
    %v920 = vmul.f32 %v840, 10.0
    %v921 = vmul.f32 %v754, 10.0
    %v922 = vmul.f32 %v843, 10.0
    %v923 = vmul.f32 %v756, 10.0
    %v924 = vmul.f32 %v845, 10.0
    %v925 = vmul.f32 %v759, 10.0
    %v926 = vmul.f32 %v848, 10.0
    %v927 = vmul.f32 %v761, 10.0
    %v928 = vmul.f32 %v850, 10.0
    %v929 = vmul.f32 %v764, 10.0
    %v930 = vmul.f32 %v853, 10.0
    %v931 = vmul.f32 %v766, 10.0
    %v932 = vmul.f32 %v855, 10.0
    %v933 = vmul.f32 %v769, 10.0
    %v934 = vmul.f32 %v858, 10.0
    %v935 = vmul.f32 %v771, 10.0
    %v936 = vmul.f32 %v860, 10.0
    %v937 = vmul.f32 %v774, 10.0
    %v938 = vmul.f32 %v863, 10.0
    %v939 = vmul.f32 %v776, 10.0
    %v940 = vmul.f32 %v865, 10.0
    %v941 = vmul.f32 %v779, 10.0
    %v942 = vmul.f32 %v868, 10.0
    %v943 = vmul.f32 %v781, 10.0
    %v944 = vmul.f32 %v870, 10.0
    %v945 = vmul.f32 %v784, 10.0
    %v946 = vmul.f32 %v873, 10.0
    %v947 = vmul.f32 %v786, 10.0
    %v948 = vmul.f32 %v875, 10.0
    %v949 = vmul.f32 %v789, 10.0
    %v950 = vmul.f32 %v878, 10.0
    %v951 = vmul.f32 %v791, 10.0
    %v952 = vmul.f32 %v880, 10.0
    %v953 = vmul.f32 %v794, 10.0
    %v954 = vmul.f32 %v883, 10.0
    %v955 = vmul.f32 %v796, 10.0
    %v956 = vmul.f32 %v885, 10.0
    %v957 = vmul.f32 %v799, 10.0
    %v958 = vmul.f32 %v888, 10.0
    %v959 = vmul.f32 %v801, 10.0
    %v960 = vmul.f32 %v890, 10.0
    %v961 = vmul.f32 %v804, 10.0
    %v962 = vmul.f32 %v893, 10.0
    %v963 = vmul.f32 %v806, 10.0
    %v964 = vmul.f32 %v895, 10.0
    %v965 = vmul.f32 %v809, 10.0
    %v966 = vmul.f32 %v898, 10.0
    %v967 = vmul.f32 %v811, 10.0
    %v968 = vmul.f32 %v900, 10.0
    %v969 = vmul.f32 %v814, 10.0
    %v970 = vmul.f32 %v903, 10.0
    %v971 = vmul.f32 %v816, 10.0
    %v972 = vmul.f32 %v905, 10.0
    %v973 = vmul.f32 %v819, 10.0
    %v974 = vmul.f32 %v908, 10.0
    %v975 = vmul.f32 %v821, 10.0
    %v976 = vmul.f32 %v910, 10.0
    %v977 = vmul.f32 %v824, 10.0
    %v978 = vmul.f32 %v913, 10.0
    %v979 = vmul.f32 %v826, 10.0
    %v980 = vmul.f32 %v915, 10.0
    %v1013 = vunpack.c.l.b16 %v113
    %v1014 = vunpack.c.l.b16 %v114
    %v1015 = vunpack.c.l.b16 %v115
    %v1016 = vunpack.c.l.b16 %v116
    %v1017 = vunpack.c.l.b16 %v117
    %v1018 = vunpack.c.l.b16 %v118
    %v1019 = vunpack.c.l.b16 %v119
    %v1020 = vunpack.c.l.b16 %v120
    %v1021 = vunpack.c.l.b16 %v121
    %v1022 = vunpack.c.l.b16 %v122
    %v1023 = vunpack.c.l.b16 %v123
    %v1024 = vunpack.c.l.b16 %v124
    %v1025 = vunpack.c.l.b16 %v125
    %v1026 = vunpack.c.l.b16 %v126
    %v1027 = vunpack.c.l.b16 %v127
    %v1028 = vunpack.c.l.b16 %v128
    %v1029 = vunpack.c.l.b16 %v129
    %v1030 = vunpack.c.l.b16 %v130
    %v1031 = vunpack.c.l.b16 %v131
    %v1032 = vunpack.c.l.b16 %v132
    %v1033 = vunpack.c.l.b16 %v133
    %v1034 = vunpack.c.l.b16 %v134
    %v1035 = vunpack.c.l.b16 %v135
    %v1036 = vunpack.c.l.b16 %v136
    %v1037 = vunpack.c.l.b16 %v137
    %v1038 = vunpack.c.l.b16 %v138
    %v1039 = vunpack.c.l.b16 %v139
    %v1040 = vunpack.c.l.b16 %v140
    %v1041 = vunpack.c.l.b16 %v141
    %v1042 = vunpack.c.l.b16 %v142
    %v1043 = vunpack.c.l.b16 %v143
    %v1044 = vunpack.c.l.b16 %v144
    %v1045 = vpack.c.b16 %v1014, %v1013
    %v1046 = vpack.c.b16 %v1016, %v1015
    %v1047 = vpack.c.b16 %v1018, %v1017
    %v1048 = vpack.c.b16 %v1020, %v1019
    %v1049 = vpack.c.b16 %v1022, %v1021
    %v1050 = vpack.c.b16 %v1024, %v1023
    %v1051 = vpack.c.b16 %v1026, %v1025
    %v1052 = vpack.c.b16 %v1028, %v1027
    %v1053 = vpack.c.b16 %v1030, %v1029
    %v1054 = vpack.c.b16 %v1032, %v1031
    %v1055 = vpack.c.b16 %v1034, %v1033
    %v1056 = vpack.c.b16 %v1036, %v1035
    %v1057 = vpack.c.b16 %v1038, %v1037
    %v1058 = vpack.c.b16 %v1040, %v1039
    %v1059 = vpack.c.b16 %v1042, %v1041
    %v1060 = vpack.c.b16 %v1044, %v1043
    %1077 = vmatpush.bf16.xpose.msra.mxu0 %v376
    %1078 = vmatpush.bf16.xpose.msra.mxu0 %v375
    %1079 = vmatpush.bf16.xpose.msra.mxu0 %v374
    %1080 = vmatpush.bf16.xpose.msra.mxu0 %v373
    %1081 = vmatpush.bf16.xpose.msra.mxu0 %v372
    %1082 = vmatpush.bf16.xpose.msra.mxu0 %v371
    %1083 = vmatpush.bf16.xpose.msra.mxu0 %v370
    %1084 = vmatpush.bf16.xpose.msra.mxu0 %v369
    %1085 = vmatmul.bf16.gmra.mxu0 %v1045
    %v1086 = vpop.f32.mrf.mxu0
    %v1087 = vadd.f32 0.0, %v1086
    %v1088 = vpop.f32.mrf.mxu0
    %v1089 = vadd.f32 0.0, %v1088
    %1090 = vmatmul.bf16.gmra.mxu0 %v1046
    %v1091 = vpop.f32.mrf.mxu0
    %v1092 = vadd.f32 0.0, %v1091
    %v1093 = vpop.f32.mrf.mxu0
    %v1094 = vadd.f32 0.0, %v1093
    %1095 = vmatmul.bf16.gmra.mxu0 %v1047
    %v1096 = vpop.f32.mrf.mxu0
    %v1097 = vadd.f32 0.0, %v1096
    %v1098 = vpop.f32.mrf.mxu0
    %v1099 = vadd.f32 0.0, %v1098
    %1100 = vmatmul.bf16.gmra.mxu0 %v1048
    %v1101 = vpop.f32.mrf.mxu0
    %v1102 = vadd.f32 0.0, %v1101
    %v1103 = vpop.f32.mrf.mxu0
    %v1104 = vadd.f32 0.0, %v1103
    %1105 = vmatmul.bf16.gmra.mxu0 %v1049
    %v1106 = vpop.f32.mrf.mxu0
    %v1107 = vadd.f32 0.0, %v1106
    %v1108 = vpop.f32.mrf.mxu0
    %v1109 = vadd.f32 0.0, %v1108
    %1110 = vmatmul.bf16.gmra.mxu0 %v1050
    %v1111 = vpop.f32.mrf.mxu0
    %v1112 = vadd.f32 0.0, %v1111
    %v1113 = vpop.f32.mrf.mxu0
    %v1114 = vadd.f32 0.0, %v1113
    %1115 = vmatmul.bf16.gmra.mxu0 %v1051
    %v1116 = vpop.f32.mrf.mxu0
    %v1117 = vadd.f32 0.0, %v1116
    %v1118 = vpop.f32.mrf.mxu0
    %v1119 = vadd.f32 0.0, %v1118
    %1120 = vmatmul.bf16.gmra.mxu0 %v1052
    %v1121 = vpop.f32.mrf.mxu0
    %v1122 = vadd.f32 0.0, %v1121
    %v1123 = vpop.f32.mrf.mxu0
    %v1124 = vadd.f32 0.0, %v1123
    %1125 = vmatmul.bf16.gmra.mxu0 %v1053
    %v1126 = vpop.f32.mrf.mxu0
    %v1127 = vadd.f32 0.0, %v1126
    %v1128 = vpop.f32.mrf.mxu0
    %v1129 = vadd.f32 0.0, %v1128
    %1130 = vmatmul.bf16.gmra.mxu0 %v1054
    %v1131 = vpop.f32.mrf.mxu0
    %v1132 = vadd.f32 0.0, %v1131
    %v1133 = vpop.f32.mrf.mxu0
    %v1134 = vadd.f32 0.0, %v1133
    %1135 = vmatmul.bf16.gmra.mxu0 %v1055
    %v1136 = vpop.f32.mrf.mxu0
    %v1137 = vadd.f32 0.0, %v1136
    %v1138 = vpop.f32.mrf.mxu0
    %v1139 = vadd.f32 0.0, %v1138
    %1140 = vmatmul.bf16.gmra.mxu0 %v1056
    %v1141 = vpop.f32.mrf.mxu0
    %v1142 = vadd.f32 0.0, %v1141
    %v1143 = vpop.f32.mrf.mxu0
    %v1144 = vadd.f32 0.0, %v1143
    %1145 = vmatmul.bf16.gmra.mxu0 %v1057
    %v1146 = vpop.f32.mrf.mxu0
    %v1147 = vadd.f32 0.0, %v1146
    %v1148 = vpop.f32.mrf.mxu0
    %v1149 = vadd.f32 0.0, %v1148
    %1150 = vmatmul.bf16.gmra.mxu0 %v1058
    %v1151 = vpop.f32.mrf.mxu0
    %v1152 = vadd.f32 0.0, %v1151
    %v1153 = vpop.f32.mrf.mxu0
    %v1154 = vadd.f32 0.0, %v1153
    %1155 = vmatmul.bf16.gmra.mxu0 %v1059
    %v1156 = vpop.f32.mrf.mxu0
    %v1157 = vadd.f32 0.0, %v1156
    %v1158 = vpop.f32.mrf.mxu0
    %v1159 = vadd.f32 0.0, %v1158
    %1160 = vmatmul.bf16.gmra.mxu0 %v1060
    %v1161 = vpop.f32.mrf.mxu0
    %v1162 = vadd.f32 0.0, %v1161
    %v1163 = vpop.f32.mrf.mxu0
    %v1164 = vadd.f32 0.0, %v1163
    %1165 = vdwg.mxu0
    %1166 = vmatpush.bf16.xpose.msra.mxu0 %v384
    %1167 = vmatpush.bf16.xpose.msra.mxu0 %v383
    %1168 = vmatpush.bf16.xpose.msra.mxu0 %v382
    %1169 = vmatpush.bf16.xpose.msra.mxu0 %v381
    %1170 = vmatpush.bf16.xpose.msra.mxu0 %v380
    %1171 = vmatpush.bf16.xpose.msra.mxu0 %v379
    %1172 = vmatpush.bf16.xpose.msra.mxu0 %v378
    %1173 = vmatpush.bf16.xpose.msra.mxu0 %v377
    %1174 = vmatmul.bf16.gmra.mxu0 %v1045
    %v1175 = vpop.f32.mrf.mxu0
    %v1176 = vadd.f32 0.0, %v1175
    %v1177 = vpop.f32.mrf.mxu0
    %v1178 = vadd.f32 0.0, %v1177
    %1179 = vmatmul.bf16.gmra.mxu0 %v1046
    %v1180 = vpop.f32.mrf.mxu0
    %v1181 = vadd.f32 0.0, %v1180
    %v1182 = vpop.f32.mrf.mxu0
    %v1183 = vadd.f32 0.0, %v1182
    %1184 = vmatmul.bf16.gmra.mxu0 %v1047
    %v1185 = vpop.f32.mrf.mxu0
    %v1186 = vadd.f32 0.0, %v1185
    %v1187 = vpop.f32.mrf.mxu0
    %v1188 = vadd.f32 0.0, %v1187
    %1189 = vmatmul.bf16.gmra.mxu0 %v1048
    %v1190 = vpop.f32.mrf.mxu0
    %v1191 = vadd.f32 0.0, %v1190
    %v1192 = vpop.f32.mrf.mxu0
    %v1193 = vadd.f32 0.0, %v1192
    %1194 = vmatmul.bf16.gmra.mxu0 %v1049
    %v1195 = vpop.f32.mrf.mxu0
    %v1196 = vadd.f32 0.0, %v1195
    %v1197 = vpop.f32.mrf.mxu0
    %v1198 = vadd.f32 0.0, %v1197
    %1199 = vmatmul.bf16.gmra.mxu0 %v1050
    %v1200 = vpop.f32.mrf.mxu0
    %v1201 = vadd.f32 0.0, %v1200
    %v1202 = vpop.f32.mrf.mxu0
    %v1203 = vadd.f32 0.0, %v1202
    %1204 = vmatmul.bf16.gmra.mxu0 %v1051
    %v1205 = vpop.f32.mrf.mxu0
    %v1206 = vadd.f32 0.0, %v1205
    %v1207 = vpop.f32.mrf.mxu0
    %v1208 = vadd.f32 0.0, %v1207
    %1209 = vmatmul.bf16.gmra.mxu0 %v1052
    %v1210 = vpop.f32.mrf.mxu0
    %v1211 = vadd.f32 0.0, %v1210
    %v1212 = vpop.f32.mrf.mxu0
    %v1213 = vadd.f32 0.0, %v1212
    %1214 = vmatmul.bf16.gmra.mxu0 %v1053
    %v1215 = vpop.f32.mrf.mxu0
    %v1216 = vadd.f32 0.0, %v1215
    %v1217 = vpop.f32.mrf.mxu0
    %v1218 = vadd.f32 0.0, %v1217
    %1219 = vmatmul.bf16.gmra.mxu0 %v1054
    %v1220 = vpop.f32.mrf.mxu0
    %v1221 = vadd.f32 0.0, %v1220
    %v1222 = vpop.f32.mrf.mxu0
    %v1223 = vadd.f32 0.0, %v1222
    %1224 = vmatmul.bf16.gmra.mxu0 %v1055
    %v1225 = vpop.f32.mrf.mxu0
    %v1226 = vadd.f32 0.0, %v1225
    %v1227 = vpop.f32.mrf.mxu0
    %v1228 = vadd.f32 0.0, %v1227
    %1229 = vmatmul.bf16.gmra.mxu0 %v1056
    %v1230 = vpop.f32.mrf.mxu0
    %v1231 = vadd.f32 0.0, %v1230
    %v1232 = vpop.f32.mrf.mxu0
    %v1233 = vadd.f32 0.0, %v1232
    %1234 = vmatmul.bf16.gmra.mxu0 %v1057
    %v1235 = vpop.f32.mrf.mxu0
    %v1236 = vadd.f32 0.0, %v1235
    %v1237 = vpop.f32.mrf.mxu0
    %v1238 = vadd.f32 0.0, %v1237
    %1239 = vmatmul.bf16.gmra.mxu0 %v1058
    %v1240 = vpop.f32.mrf.mxu0
    %v1241 = vadd.f32 0.0, %v1240
    %v1242 = vpop.f32.mrf.mxu0
    %v1243 = vadd.f32 0.0, %v1242
    %1244 = vmatmul.bf16.gmra.mxu0 %v1059
    %v1245 = vpop.f32.mrf.mxu0
    %v1246 = vadd.f32 0.0, %v1245
    %v1247 = vpop.f32.mrf.mxu0
    %v1248 = vadd.f32 0.0, %v1247
    %1249 = vmatmul.bf16.gmra.mxu0 %v1060
    %v1250 = vpop.f32.mrf.mxu0
    %v1251 = vadd.f32 0.0, %v1250
    %v1252 = vpop.f32.mrf.mxu0
    %v1253 = vadd.f32 0.0, %v1252
    %1254 = vdwg.mxu0
    %v1255 = vmul.f32 %v1087, 10.0
    %v1256 = vmul.f32 %v1176, 10.0
    %v1257 = vmul.f32 %v1089, 10.0
    %v1258 = vmul.f32 %v1178, 10.0
    %v1259 = vmul.f32 %v1092, 10.0
    %v1260 = vmul.f32 %v1181, 10.0
    %v1261 = vmul.f32 %v1094, 10.0
    %v1262 = vmul.f32 %v1183, 10.0
    %v1263 = vmul.f32 %v1097, 10.0
    %v1264 = vmul.f32 %v1186, 10.0
    %v1265 = vmul.f32 %v1099, 10.0
    %v1266 = vmul.f32 %v1188, 10.0
    %v1267 = vmul.f32 %v1102, 10.0
    %v1268 = vmul.f32 %v1191, 10.0
    %v1269 = vmul.f32 %v1104, 10.0
    %v1270 = vmul.f32 %v1193, 10.0
    %v1271 = vmul.f32 %v1107, 10.0
    %v1272 = vmul.f32 %v1196, 10.0
    %v1273 = vmul.f32 %v1109, 10.0
    %v1274 = vmul.f32 %v1198, 10.0
    %v1275 = vmul.f32 %v1112, 10.0
    %v1276 = vmul.f32 %v1201, 10.0
    %v1277 = vmul.f32 %v1114, 10.0
    %v1278 = vmul.f32 %v1203, 10.0
    %v1279 = vmul.f32 %v1117, 10.0
    %v1280 = vmul.f32 %v1206, 10.0
    %v1281 = vmul.f32 %v1119, 10.0
    %v1282 = vmul.f32 %v1208, 10.0
    %v1283 = vmul.f32 %v1122, 10.0
    %v1284 = vmul.f32 %v1211, 10.0
    %v1285 = vmul.f32 %v1124, 10.0
    %v1286 = vmul.f32 %v1213, 10.0
    %v1287 = vmul.f32 %v1127, 10.0
    %v1288 = vmul.f32 %v1216, 10.0
    %v1289 = vmul.f32 %v1129, 10.0
    %v1290 = vmul.f32 %v1218, 10.0
    %v1291 = vmul.f32 %v1132, 10.0
    %v1292 = vmul.f32 %v1221, 10.0
    %v1293 = vmul.f32 %v1134, 10.0
    %v1294 = vmul.f32 %v1223, 10.0
    %v1295 = vmul.f32 %v1137, 10.0
    %v1296 = vmul.f32 %v1226, 10.0
    %v1297 = vmul.f32 %v1139, 10.0
    %v1298 = vmul.f32 %v1228, 10.0
    %v1299 = vmul.f32 %v1142, 10.0
    %v1300 = vmul.f32 %v1231, 10.0
    %v1301 = vmul.f32 %v1144, 10.0
    %v1302 = vmul.f32 %v1233, 10.0
    %v1303 = vmul.f32 %v1147, 10.0
    %v1304 = vmul.f32 %v1236, 10.0
    %v1305 = vmul.f32 %v1149, 10.0
    %v1306 = vmul.f32 %v1238, 10.0
    %v1307 = vmul.f32 %v1152, 10.0
    %v1308 = vmul.f32 %v1241, 10.0
    %v1309 = vmul.f32 %v1154, 10.0
    %v1310 = vmul.f32 %v1243, 10.0
    %v1311 = vmul.f32 %v1157, 10.0
    %v1312 = vmul.f32 %v1246, 10.0
    %v1313 = vmul.f32 %v1159, 10.0
    %v1314 = vmul.f32 %v1248, 10.0
    %v1315 = vmul.f32 %v1162, 10.0
    %v1316 = vmul.f32 %v1251, 10.0
    %v1317 = vmul.f32 %v1164, 10.0
    %v1318 = vmul.f32 %v1253, 10.0
    %v1319 = vlaneseq
    %v1320 = vshrl.u32 %v1319, 7
    %v1321 = vadd.s32 %v1320, 8
    %v1322 = vadd.s32 %v1320, 16
    %v1323 = vadd.s32 %v1320, 24
    %v1324 = vadd.s32 %v1320, 32
    %v1325 = vadd.s32 %v1320, 40
    %v1326 = vadd.s32 %v1320, 48
    %v1327 = vadd.s32 %v1320, 56
    %v1328 = vadd.s32 %v1320, 64
    %v1329 = vadd.s32 %v1320, 72
    %v1330 = vadd.s32 %v1320, 80
    %v1331 = vadd.s32 %v1320, 88
    %v1332 = vadd.s32 %v1320, 96
    %v1333 = vadd.s32 %v1320, 104
    %v1334 = vadd.s32 %v1320, 112
    %v1335 = vadd.s32 %v1320, 120
    %v1336 = vadd.s32 %v1320, 128
    %v1337 = vadd.s32 %v1320, 136
    %v1338 = vadd.s32 %v1320, 144
    %v1339 = vadd.s32 %v1320, 152
    %v1340 = vadd.s32 %v1320, 160
    %v1341 = vadd.s32 %v1320, 168
    %v1342 = vadd.s32 %v1320, 176
    %v1343 = vadd.s32 %v1320, 184
    %v1344 = vadd.s32 %v1320, 192
    %v1345 = vadd.s32 %v1320, 200
    %v1346 = vadd.s32 %v1320, 208
    %v1347 = vadd.s32 %v1320, 216
    %v1348 = vadd.s32 %v1320, 224
    %v1349 = vadd.s32 %v1320, 232
    %v1350 = vadd.s32 %v1320, 240
    %v1351 = vadd.s32 %v1320, 248
    %v1352 = vstv %s74
    %v1353 = vadd.s32 %v1352, %v1320
    %v1354 = vadd.s32 %v1352, %v1321
    %v1355 = vadd.s32 %v1352, %v1322
    %v1356 = vadd.s32 %v1352, %v1323
    %v1357 = vadd.s32 %v1352, %v1324
    %v1358 = vadd.s32 %v1352, %v1325
    %v1359 = vadd.s32 %v1352, %v1326
    %v1360 = vadd.s32 %v1352, %v1327
    %v1361 = vadd.s32 %v1352, %v1328
    %v1362 = vadd.s32 %v1352, %v1329
    %v1363 = vadd.s32 %v1352, %v1330
    %v1364 = vadd.s32 %v1352, %v1331
    %v1365 = vadd.s32 %v1352, %v1332
    %v1366 = vadd.s32 %v1352, %v1333
    %v1367 = vadd.s32 %v1352, %v1334
    %v1368 = vadd.s32 %v1352, %v1335
    %v1369 = vadd.s32 %v1352, %v1336
    %v1370 = vadd.s32 %v1352, %v1337
    %v1371 = vadd.s32 %v1352, %v1338
    %v1372 = vadd.s32 %v1352, %v1339
    %v1373 = vadd.s32 %v1352, %v1340
    %v1374 = vadd.s32 %v1352, %v1341
    %v1375 = vadd.s32 %v1352, %v1342
    %v1376 = vadd.s32 %v1352, %v1343
    %v1377 = vadd.s32 %v1352, %v1344
    %v1378 = vadd.s32 %v1352, %v1345
    %v1379 = vadd.s32 %v1352, %v1346
    %v1380 = vadd.s32 %v1352, %v1347
    %v1381 = vadd.s32 %v1352, %v1348
    %v1382 = vadd.s32 %v1352, %v1349
    %v1383 = vadd.s32 %v1352, %v1350
    %v1384 = vadd.s32 %v1352, %v1351
    %vm1385 = vcmp.lt.s32.totalorder %v1353, 8
    %vm1386 = vcmp.lt.s32.totalorder %v1354, 8
    %vm1387 = vcmp.lt.s32.totalorder %v1355, 8
    %vm1388 = vcmp.lt.s32.totalorder %v1356, 8
    %vm1389 = vcmp.lt.s32.totalorder %v1357, 8
    %vm1390 = vcmp.lt.s32.totalorder %v1358, 8
    %vm1391 = vcmp.lt.s32.totalorder %v1359, 8
    %vm1392 = vcmp.lt.s32.totalorder %v1360, 8
    %vm1393 = vcmp.lt.s32.totalorder %v1361, 8
    %vm1394 = vcmp.lt.s32.totalorder %v1362, 8
    %vm1395 = vcmp.lt.s32.totalorder %v1363, 8
    %vm1396 = vcmp.lt.s32.totalorder %v1364, 8
    %vm1397 = vcmp.lt.s32.totalorder %v1365, 8
    %vm1398 = vcmp.lt.s32.totalorder %v1366, 8
    %vm1399 = vcmp.lt.s32.totalorder %v1367, 8
    %vm1400 = vcmp.lt.s32.totalorder %v1368, 8
    %vm1401 = vcmp.lt.s32.totalorder %v1369, 8
    %vm1402 = vcmp.lt.s32.totalorder %v1370, 8
    %vm1403 = vcmp.lt.s32.totalorder %v1371, 8
    %vm1404 = vcmp.lt.s32.totalorder %v1372, 8
    %vm1405 = vcmp.lt.s32.totalorder %v1373, 8
    %vm1406 = vcmp.lt.s32.totalorder %v1374, 8
    %vm1407 = vcmp.lt.s32.totalorder %v1375, 8
    %vm1408 = vcmp.lt.s32.totalorder %v1376, 8
    %vm1409 = vcmp.lt.s32.totalorder %v1377, 8
    %vm1410 = vcmp.lt.s32.totalorder %v1378, 8
    %vm1411 = vcmp.lt.s32.totalorder %v1379, 8
    %vm1412 = vcmp.lt.s32.totalorder %v1380, 8
    %vm1413 = vcmp.lt.s32.totalorder %v1381, 8
    %vm1414 = vcmp.lt.s32.totalorder %v1382, 8
    %vm1415 = vcmp.lt.s32.totalorder %v1383, 8
    %vm1416 = vcmp.lt.s32.totalorder %v1384, 8
    %v1417 = vld [vmem:[#allocation2] sm:$0x3]
    %v1418 = vsel %vm1385, 0.0, -1e+30
    %v1419 = vsel %vm1386, 0.0, -1e+30
    %v1420 = vsel %vm1387, 0.0, -1e+30
    %v1421 = vsel %vm1388, 0.0, -1e+30
    %v1422 = vsel %vm1389, 0.0, -1e+30
    %v1423 = vsel %vm1390, 0.0, -1e+30
    %v1424 = vsel %vm1391, 0.0, -1e+30
    %v1425 = vsel %vm1392, 0.0, -1e+30
    %v1426 = vsel %vm1393, 0.0, -1e+30
    %v1427 = vsel %vm1394, 0.0, -1e+30
    %v1428 = vsel %vm1395, 0.0, -1e+30
    %v1429 = vsel %vm1396, 0.0, -1e+30
    %v1430 = vsel %vm1397, 0.0, -1e+30
    %v1431 = vsel %vm1398, 0.0, -1e+30
    %v1432 = vsel %vm1399, 0.0, -1e+30
    %v1433 = vsel %vm1400, 0.0, -1e+30
    %v1434 = vsel %vm1401, 0.0, -1e+30
    %v1435 = vsel %vm1402, 0.0, -1e+30
    %v1436 = vsel %vm1403, 0.0, -1e+30
    %v1437 = vsel %vm1404, 0.0, -1e+30
    %v1438 = vsel %vm1405, 0.0, -1e+30
    %v1439 = vsel %vm1406, 0.0, -1e+30
    %v1440 = vsel %vm1407, 0.0, -1e+30
    %v1441 = vsel %vm1408, 0.0, -1e+30
    %v1442 = vsel %vm1409, 0.0, -1e+30
    %v1443 = vsel %vm1410, 0.0, -1e+30
    %v1444 = vsel %vm1411, 0.0, -1e+30
    %v1445 = vsel %vm1412, 0.0, -1e+30
    %v1446 = vsel %vm1413, 0.0, -1e+30
    %v1447 = vsel %vm1414, 0.0, -1e+30
    %v1448 = vsel %vm1415, 0.0, -1e+30
    %v1449 = vsel %vm1416, 0.0, -1e+30
    %v1451 = vperm.slane %v1417, 0
    %v1452 = vperm.slane %v1417, 1
    %v1455 = vadd.f32 %v1451, %v1418
    %v1456 = vadd.f32 %v1452, %v1418
    %v1457 = vadd.f32 %v1451, %v1419
    %v1458 = vadd.f32 %v1452, %v1419
    %v1459 = vadd.f32 %v1451, %v1420
    %v1460 = vadd.f32 %v1452, %v1420
    %v1461 = vadd.f32 %v1451, %v1421
    %v1462 = vadd.f32 %v1452, %v1421
    %v1463 = vadd.f32 %v1451, %v1422
    %v1464 = vadd.f32 %v1452, %v1422
    %v1465 = vadd.f32 %v1451, %v1423
    %v1466 = vadd.f32 %v1452, %v1423
    %v1467 = vadd.f32 %v1451, %v1424
    %v1468 = vadd.f32 %v1452, %v1424
    %v1469 = vadd.f32 %v1451, %v1425
    %v1470 = vadd.f32 %v1452, %v1425
    %v1471 = vadd.f32 %v1451, %v1426
    %v1472 = vadd.f32 %v1452, %v1426
    %v1473 = vadd.f32 %v1451, %v1427
    %v1474 = vadd.f32 %v1452, %v1427
    %v1475 = vadd.f32 %v1451, %v1428
    %v1476 = vadd.f32 %v1452, %v1428
    %v1477 = vadd.f32 %v1451, %v1429
    %v1478 = vadd.f32 %v1452, %v1429
    %v1479 = vadd.f32 %v1451, %v1430
    %v1480 = vadd.f32 %v1452, %v1430
    %v1481 = vadd.f32 %v1451, %v1431
    %v1482 = vadd.f32 %v1452, %v1431
    %v1483 = vadd.f32 %v1451, %v1432
    %v1484 = vadd.f32 %v1452, %v1432
    %v1485 = vadd.f32 %v1451, %v1433
    %v1486 = vadd.f32 %v1452, %v1433
    %v1487 = vadd.f32 %v1451, %v1434
    %v1488 = vadd.f32 %v1452, %v1434
    %v1489 = vadd.f32 %v1451, %v1435
    %v1490 = vadd.f32 %v1452, %v1435
    %v1491 = vadd.f32 %v1451, %v1436
    %v1492 = vadd.f32 %v1452, %v1436
    %v1493 = vadd.f32 %v1451, %v1437
    %v1494 = vadd.f32 %v1452, %v1437
    %v1495 = vadd.f32 %v1451, %v1438
    %v1496 = vadd.f32 %v1452, %v1438
    %v1497 = vadd.f32 %v1451, %v1439
    %v1498 = vadd.f32 %v1452, %v1439
    %v1499 = vadd.f32 %v1451, %v1440
    %v1500 = vadd.f32 %v1452, %v1440
    %v1501 = vadd.f32 %v1451, %v1441
    %v1502 = vadd.f32 %v1452, %v1441
    %v1503 = vadd.f32 %v1451, %v1442
    %v1504 = vadd.f32 %v1452, %v1442
    %v1505 = vadd.f32 %v1451, %v1443
    %v1506 = vadd.f32 %v1452, %v1443
    %v1507 = vadd.f32 %v1451, %v1444
    %v1508 = vadd.f32 %v1452, %v1444
    %v1509 = vadd.f32 %v1451, %v1445
    %v1510 = vadd.f32 %v1452, %v1445
    %v1511 = vadd.f32 %v1451, %v1446
    %v1512 = vadd.f32 %v1452, %v1446
    %v1513 = vadd.f32 %v1451, %v1447
    %v1514 = vadd.f32 %v1452, %v1447
    %v1515 = vadd.f32 %v1451, %v1448
    %v1516 = vadd.f32 %v1452, %v1448
    %v1517 = vadd.f32 %v1451, %v1449
    %v1518 = vadd.f32 %v1452, %v1449
    %v1519 = vlaneseq
    %v1520 = vand.u32 %v1519, 127
    %v1521 = vadd.s32 %v1520, 128
    %vm1522 = vcmp.eq.s32.totalorder %v1520, %v1353
    %vm1523 = vcmp.eq.s32.totalorder %v1521, %v1353
    %vm1524 = vcmp.eq.s32.totalorder %v1520, %v1354
    %vm1525 = vcmp.eq.s32.totalorder %v1521, %v1354
    %vm1526 = vcmp.eq.s32.totalorder %v1520, %v1355
    %vm1527 = vcmp.eq.s32.totalorder %v1521, %v1355
    %vm1528 = vcmp.eq.s32.totalorder %v1520, %v1356
    %vm1529 = vcmp.eq.s32.totalorder %v1521, %v1356
    %vm1530 = vcmp.eq.s32.totalorder %v1520, %v1357
    %vm1531 = vcmp.eq.s32.totalorder %v1521, %v1357
    %vm1532 = vcmp.eq.s32.totalorder %v1520, %v1358
    %vm1533 = vcmp.eq.s32.totalorder %v1521, %v1358
    %vm1534 = vcmp.eq.s32.totalorder %v1520, %v1359
    %vm1535 = vcmp.eq.s32.totalorder %v1521, %v1359
    %vm1536 = vcmp.eq.s32.totalorder %v1520, %v1360
    %vm1537 = vcmp.eq.s32.totalorder %v1521, %v1360
    %vm1538 = vcmp.eq.s32.totalorder %v1520, %v1361
    %vm1539 = vcmp.eq.s32.totalorder %v1521, %v1361
    %vm1540 = vcmp.eq.s32.totalorder %v1520, %v1362
    %vm1541 = vcmp.eq.s32.totalorder %v1521, %v1362
    %vm1542 = vcmp.eq.s32.totalorder %v1520, %v1363
    %vm1543 = vcmp.eq.s32.totalorder %v1521, %v1363
    %vm1544 = vcmp.eq.s32.totalorder %v1520, %v1364
    %vm1545 = vcmp.eq.s32.totalorder %v1521, %v1364
    %vm1546 = vcmp.eq.s32.totalorder %v1520, %v1365
    %vm1547 = vcmp.eq.s32.totalorder %v1521, %v1365
    %vm1548 = vcmp.eq.s32.totalorder %v1520, %v1366
    %vm1549 = vcmp.eq.s32.totalorder %v1521, %v1366
    %vm1550 = vcmp.eq.s32.totalorder %v1520, %v1367
    %vm1551 = vcmp.eq.s32.totalorder %v1521, %v1367
    %vm1552 = vcmp.eq.s32.totalorder %v1520, %v1368
    %vm1553 = vcmp.eq.s32.totalorder %v1521, %v1368
    %vm1554 = vcmp.eq.s32.totalorder %v1520, %v1369
    %vm1555 = vcmp.eq.s32.totalorder %v1521, %v1369
    %vm1556 = vcmp.eq.s32.totalorder %v1520, %v1370
    %vm1557 = vcmp.eq.s32.totalorder %v1521, %v1370
    %vm1558 = vcmp.eq.s32.totalorder %v1520, %v1371
    %vm1559 = vcmp.eq.s32.totalorder %v1521, %v1371
    %vm1560 = vcmp.eq.s32.totalorder %v1520, %v1372
    %vm1561 = vcmp.eq.s32.totalorder %v1521, %v1372
    %vm1562 = vcmp.eq.s32.totalorder %v1520, %v1373
    %vm1563 = vcmp.eq.s32.totalorder %v1521, %v1373
    %vm1564 = vcmp.eq.s32.totalorder %v1520, %v1374
    %vm1565 = vcmp.eq.s32.totalorder %v1521, %v1374
    %vm1566 = vcmp.eq.s32.totalorder %v1520, %v1375
    %vm1567 = vcmp.eq.s32.totalorder %v1521, %v1375
    %vm1568 = vcmp.eq.s32.totalorder %v1520, %v1376
    %vm1569 = vcmp.eq.s32.totalorder %v1521, %v1376
    %vm1570 = vcmp.eq.s32.totalorder %v1520, %v1377
    %vm1571 = vcmp.eq.s32.totalorder %v1521, %v1377
    %vm1572 = vcmp.eq.s32.totalorder %v1520, %v1378
    %vm1573 = vcmp.eq.s32.totalorder %v1521, %v1378
    %vm1574 = vcmp.eq.s32.totalorder %v1520, %v1379
    %vm1575 = vcmp.eq.s32.totalorder %v1521, %v1379
    %vm1576 = vcmp.eq.s32.totalorder %v1520, %v1380
    %vm1577 = vcmp.eq.s32.totalorder %v1521, %v1380
    %vm1578 = vcmp.eq.s32.totalorder %v1520, %v1381
    %vm1579 = vcmp.eq.s32.totalorder %v1521, %v1381
    %vm1580 = vcmp.eq.s32.totalorder %v1520, %v1382
    %vm1581 = vcmp.eq.s32.totalorder %v1521, %v1382
    %vm1582 = vcmp.eq.s32.totalorder %v1520, %v1383
    %vm1583 = vcmp.eq.s32.totalorder %v1521, %v1383
    %vm1584 = vcmp.eq.s32.totalorder %v1520, %v1384
    %vm1585 = vcmp.eq.s32.totalorder %v1521, %v1384
    %v1586 = vsel %vm1522, -1e+08, 0.0
    %v1587 = vsel %vm1523, -1e+08, 0.0
    %v1588 = vsel %vm1524, -1e+08, 0.0
    %v1589 = vsel %vm1525, -1e+08, 0.0
    %v1590 = vsel %vm1526, -1e+08, 0.0
    %v1591 = vsel %vm1527, -1e+08, 0.0
    %v1592 = vsel %vm1528, -1e+08, 0.0
    %v1593 = vsel %vm1529, -1e+08, 0.0
    %v1594 = vsel %vm1530, -1e+08, 0.0
    %v1595 = vsel %vm1531, -1e+08, 0.0
    %v1596 = vsel %vm1532, -1e+08, 0.0
    %v1597 = vsel %vm1533, -1e+08, 0.0
    %v1598 = vsel %vm1534, -1e+08, 0.0
    %v1599 = vsel %vm1535, -1e+08, 0.0
    %v1600 = vsel %vm1536, -1e+08, 0.0
    %v1601 = vsel %vm1537, -1e+08, 0.0
    %v1602 = vsel %vm1538, -1e+08, 0.0
    %v1603 = vsel %vm1539, -1e+08, 0.0
    %v1604 = vsel %vm1540, -1e+08, 0.0
    %v1605 = vsel %vm1541, -1e+08, 0.0
    %v1606 = vsel %vm1542, -1e+08, 0.0
    %v1607 = vsel %vm1543, -1e+08, 0.0
    %v1608 = vsel %vm1544, -1e+08, 0.0
    %v1609 = vsel %vm1545, -1e+08, 0.0
    %v1610 = vsel %vm1546, -1e+08, 0.0
    %v1611 = vsel %vm1547, -1e+08, 0.0
    %v1612 = vsel %vm1548, -1e+08, 0.0
    %v1613 = vsel %vm1549, -1e+08, 0.0
    %v1614 = vsel %vm1550, -1e+08, 0.0
    %v1615 = vsel %vm1551, -1e+08, 0.0
    %v1616 = vsel %vm1552, -1e+08, 0.0
    %v1617 = vsel %vm1553, -1e+08, 0.0
    %v1618 = vsel %vm1554, -1e+08, 0.0
    %v1619 = vsel %vm1555, -1e+08, 0.0
    %v1620 = vsel %vm1556, -1e+08, 0.0
    %v1621 = vsel %vm1557, -1e+08, 0.0
    %v1622 = vsel %vm1558, -1e+08, 0.0
    %v1623 = vsel %vm1559, -1e+08, 0.0
    %v1624 = vsel %vm1560, -1e+08, 0.0
    %v1625 = vsel %vm1561, -1e+08, 0.0
    %v1626 = vsel %vm1562, -1e+08, 0.0
    %v1627 = vsel %vm1563, -1e+08, 0.0
    %v1628 = vsel %vm1564, -1e+08, 0.0
    %v1629 = vsel %vm1565, -1e+08, 0.0
    %v1630 = vsel %vm1566, -1e+08, 0.0
    %v1631 = vsel %vm1567, -1e+08, 0.0
    %v1632 = vsel %vm1568, -1e+08, 0.0
    %v1633 = vsel %vm1569, -1e+08, 0.0
    %v1634 = vsel %vm1570, -1e+08, 0.0
    %v1635 = vsel %vm1571, -1e+08, 0.0
    %v1636 = vsel %vm1572, -1e+08, 0.0
    %v1637 = vsel %vm1573, -1e+08, 0.0
    %v1638 = vsel %vm1574, -1e+08, 0.0
    %v1639 = vsel %vm1575, -1e+08, 0.0
    %v1640 = vsel %vm1576, -1e+08, 0.0
    %v1641 = vsel %vm1577, -1e+08, 0.0
    %v1642 = vsel %vm1578, -1e+08, 0.0
    %v1643 = vsel %vm1579, -1e+08, 0.0
    %v1644 = vsel %vm1580, -1e+08, 0.0
    %v1645 = vsel %vm1581, -1e+08, 0.0
    %v1646 = vsel %vm1582, -1e+08, 0.0
    %v1647 = vsel %vm1583, -1e+08, 0.0
    %v1648 = vsel %vm1584, -1e+08, 0.0
    %v1649 = vsel %vm1585, -1e+08, 0.0
    %v1650 = vadd.f32 %v1455, %v1586
    %v1651 = vadd.f32 %v1456, %v1587
    %v1652 = vadd.f32 %v1457, %v1588
    %v1653 = vadd.f32 %v1458, %v1589
    %v1654 = vadd.f32 %v1459, %v1590
    %v1655 = vadd.f32 %v1460, %v1591
    %v1656 = vadd.f32 %v1461, %v1592
    %v1657 = vadd.f32 %v1462, %v1593
    %v1658 = vadd.f32 %v1463, %v1594
    %v1659 = vadd.f32 %v1464, %v1595
    %v1660 = vadd.f32 %v1465, %v1596
    %v1661 = vadd.f32 %v1466, %v1597
    %v1662 = vadd.f32 %v1467, %v1598
    %v1663 = vadd.f32 %v1468, %v1599
    %v1664 = vadd.f32 %v1469, %v1600
    %v1665 = vadd.f32 %v1470, %v1601
    %v1666 = vadd.f32 %v1471, %v1602
    %v1667 = vadd.f32 %v1472, %v1603
    %v1668 = vadd.f32 %v1473, %v1604
    %v1669 = vadd.f32 %v1474, %v1605
    %v1670 = vadd.f32 %v1475, %v1606
    %v1671 = vadd.f32 %v1476, %v1607
    %v1672 = vadd.f32 %v1477, %v1608
    %v1673 = vadd.f32 %v1478, %v1609
    %v1674 = vadd.f32 %v1479, %v1610
    %v1675 = vadd.f32 %v1480, %v1611
    %v1676 = vadd.f32 %v1481, %v1612
    %v1677 = vadd.f32 %v1482, %v1613
    %v1678 = vadd.f32 %v1483, %v1614
    %v1679 = vadd.f32 %v1484, %v1615
    %v1680 = vadd.f32 %v1485, %v1616
    %v1681 = vadd.f32 %v1486, %v1617
    %v1682 = vadd.f32 %v1487, %v1618
    %v1683 = vadd.f32 %v1488, %v1619
    %v1684 = vadd.f32 %v1489, %v1620
    %v1685 = vadd.f32 %v1490, %v1621
    %v1686 = vadd.f32 %v1491, %v1622
    %v1687 = vadd.f32 %v1492, %v1623
    %v1688 = vadd.f32 %v1493, %v1624
    %v1689 = vadd.f32 %v1494, %v1625
    %v1690 = vadd.f32 %v1495, %v1626
    %v1691 = vadd.f32 %v1496, %v1627
    %v1692 = vadd.f32 %v1497, %v1628
    %v1693 = vadd.f32 %v1498, %v1629
    %v1694 = vadd.f32 %v1499, %v1630
    %v1695 = vadd.f32 %v1500, %v1631
    %v1696 = vadd.f32 %v1501, %v1632
    %v1697 = vadd.f32 %v1502, %v1633
    %v1698 = vadd.f32 %v1503, %v1634
    %v1699 = vadd.f32 %v1504, %v1635
    %v1700 = vadd.f32 %v1505, %v1636
    %v1701 = vadd.f32 %v1506, %v1637
    %v1702 = vadd.f32 %v1507, %v1638
    %v1703 = vadd.f32 %v1508, %v1639
    %v1704 = vadd.f32 %v1509, %v1640
    %v1705 = vadd.f32 %v1510, %v1641
    %v1706 = vadd.f32 %v1511, %v1642
    %v1707 = vadd.f32 %v1512, %v1643
    %v1708 = vadd.f32 %v1513, %v1644
    %v1709 = vadd.f32 %v1514, %v1645
    %v1710 = vadd.f32 %v1515, %v1646
    %v1711 = vadd.f32 %v1516, %v1647
    %v1712 = vadd.f32 %v1517, %v1648
    %v1713 = vadd.f32 %v1518, %v1649
    %v1714 = vadd.f32 %v579, %v1455
    %v1715 = vadd.f32 %v580, %v1456
    %v1716 = vadd.f32 %v581, %v1457
    %v1717 = vadd.f32 %v582, %v1458
    %v1718 = vadd.f32 %v583, %v1459
    %v1719 = vadd.f32 %v584, %v1460
    %v1720 = vadd.f32 %v585, %v1461
    %v1721 = vadd.f32 %v586, %v1462
    %v1722 = vadd.f32 %v587, %v1463
    %v1723 = vadd.f32 %v588, %v1464
    %v1724 = vadd.f32 %v589, %v1465
    %v1725 = vadd.f32 %v590, %v1466
    %v1726 = vadd.f32 %v591, %v1467
    %v1727 = vadd.f32 %v592, %v1468
    %v1728 = vadd.f32 %v593, %v1469
    %v1729 = vadd.f32 %v594, %v1470
    %v1730 = vadd.f32 %v595, %v1471
    %v1731 = vadd.f32 %v596, %v1472
    %v1732 = vadd.f32 %v597, %v1473
    %v1733 = vadd.f32 %v598, %v1474
    %v1734 = vadd.f32 %v599, %v1475
    %v1735 = vadd.f32 %v600, %v1476
    %v1736 = vadd.f32 %v601, %v1477
    %v1737 = vadd.f32 %v602, %v1478
    %v1738 = vadd.f32 %v603, %v1479
    %v1739 = vadd.f32 %v604, %v1480
    %v1740 = vadd.f32 %v605, %v1481
    %v1741 = vadd.f32 %v606, %v1482
    %v1742 = vadd.f32 %v607, %v1483
    %v1743 = vadd.f32 %v608, %v1484
    %v1744 = vadd.f32 %v609, %v1485
    %v1745 = vadd.f32 %v610, %v1486
    %v1746 = vadd.f32 %v611, %v1487
    %v1747 = vadd.f32 %v612, %v1488
    %v1748 = vadd.f32 %v613, %v1489
    %v1749 = vadd.f32 %v614, %v1490
    %v1750 = vadd.f32 %v615, %v1491
    %v1751 = vadd.f32 %v616, %v1492
    %v1752 = vadd.f32 %v617, %v1493
    %v1753 = vadd.f32 %v618, %v1494
    %v1754 = vadd.f32 %v619, %v1495
    %v1755 = vadd.f32 %v620, %v1496
    %v1756 = vadd.f32 %v621, %v1497
    %v1757 = vadd.f32 %v622, %v1498
    %v1758 = vadd.f32 %v623, %v1499
    %v1759 = vadd.f32 %v624, %v1500
    %v1760 = vadd.f32 %v625, %v1501
    %v1761 = vadd.f32 %v626, %v1502
    %v1762 = vadd.f32 %v627, %v1503
    %v1763 = vadd.f32 %v628, %v1504
    %v1764 = vadd.f32 %v629, %v1505
    %v1765 = vadd.f32 %v630, %v1506
    %v1766 = vadd.f32 %v631, %v1507
    %v1767 = vadd.f32 %v632, %v1508
    %v1768 = vadd.f32 %v633, %v1509
    %v1769 = vadd.f32 %v634, %v1510
    %v1770 = vadd.f32 %v635, %v1511
    %v1771 = vadd.f32 %v636, %v1512
    %v1772 = vadd.f32 %v637, %v1513
    %v1773 = vadd.f32 %v638, %v1514
    %v1774 = vadd.f32 %v639, %v1515
    %v1775 = vadd.f32 %v640, %v1516
    %v1776 = vadd.f32 %v641, %v1517
    %v1777 = vadd.f32 %v642, %v1518
    %v1778 = vmul.f32 %v1714, 1.442695
    %v1779 = vpow.pop %v1778
    %v1780 = vmul.f32 %v1715, 1.442695
    %v1781 = vpow.pop %v1780
    %v1782 = vmul.f32 %v1716, 1.442695
    %v1783 = vpow.pop %v1782
    %v1784 = vmul.f32 %v1717, 1.442695
    %v1785 = vpow.pop %v1784
    %v1786 = vmul.f32 %v1718, 1.442695
    %v1787 = vpow.pop %v1786
    %v1788 = vmul.f32 %v1719, 1.442695
    %v1789 = vpow.pop %v1788
    %v1790 = vmul.f32 %v1720, 1.442695
    %v1791 = vpow.pop %v1790
    %v1792 = vmul.f32 %v1721, 1.442695
    %v1793 = vpow.pop %v1792
    %v1794 = vmul.f32 %v1722, 1.442695
    %v1795 = vpow.pop %v1794
    %v1796 = vmul.f32 %v1723, 1.442695
    %v1797 = vpow.pop %v1796
    %v1798 = vmul.f32 %v1724, 1.442695
    %v1799 = vpow.pop %v1798
    %v1800 = vmul.f32 %v1725, 1.442695
    %v1801 = vpow.pop %v1800
    %v1802 = vmul.f32 %v1726, 1.442695
    %v1803 = vpow.pop %v1802
    %v1804 = vmul.f32 %v1727, 1.442695
    %v1805 = vpow.pop %v1804
    %v1806 = vmul.f32 %v1728, 1.442695
    %v1807 = vpow.pop %v1806
    %v1808 = vmul.f32 %v1729, 1.442695
    %v1809 = vpow.pop %v1808
    %v1810 = vmul.f32 %v1730, 1.442695
    %v1811 = vpow.pop %v1810
    %v1812 = vmul.f32 %v1731, 1.442695
    %v1813 = vpow.pop %v1812
    %v1814 = vmul.f32 %v1732, 1.442695
    %v1815 = vpow.pop %v1814
    %v1816 = vmul.f32 %v1733, 1.442695
    %v1817 = vpow.pop %v1816
    %v1818 = vmul.f32 %v1734, 1.442695
    %v1819 = vpow.pop %v1818
    %v1820 = vmul.f32 %v1735, 1.442695
    %v1821 = vpow.pop %v1820
    %v1822 = vmul.f32 %v1736, 1.442695
    %v1823 = vpow.pop %v1822
    %v1824 = vmul.f32 %v1737, 1.442695
    %v1825 = vpow.pop %v1824
    %v1826 = vmul.f32 %v1738, 1.442695
    %v1827 = vpow.pop %v1826
    %v1828 = vmul.f32 %v1739, 1.442695
    %v1829 = vpow.pop %v1828
    %v1830 = vmul.f32 %v1740, 1.442695
    %v1831 = vpow.pop %v1830
    %v1832 = vmul.f32 %v1741, 1.442695
    %v1833 = vpow.pop %v1832
    %v1834 = vmul.f32 %v1742, 1.442695
    %v1835 = vpow.pop %v1834
    %v1836 = vmul.f32 %v1743, 1.442695
    %v1837 = vpow.pop %v1836
    %v1838 = vmul.f32 %v1744, 1.442695
    %v1839 = vpow.pop %v1838
    %v1840 = vmul.f32 %v1745, 1.442695
    %v1841 = vpow.pop %v1840
    %v1842 = vmul.f32 %v1746, 1.442695
    %v1843 = vpow.pop %v1842
    %v1844 = vmul.f32 %v1747, 1.442695
    %v1845 = vpow.pop %v1844
    %v1846 = vmul.f32 %v1748, 1.442695
    %v1847 = vpow.pop %v1846
    %v1848 = vmul.f32 %v1749, 1.442695
    %v1849 = vpow.pop %v1848
    %v1850 = vmul.f32 %v1750, 1.442695
    %v1851 = vpow.pop %v1850
    %v1852 = vmul.f32 %v1751, 1.442695
    %v1853 = vpow.pop %v1852
    %v1854 = vmul.f32 %v1752, 1.442695
    %v1855 = vpow.pop %v1854
    %v1856 = vmul.f32 %v1753, 1.442695
    %v1857 = vpow.pop %v1856
    %v1858 = vmul.f32 %v1754, 1.442695
    %v1859 = vpow.pop %v1858
    %v1860 = vmul.f32 %v1755, 1.442695
    %v1861 = vpow.pop %v1860
    %v1862 = vmul.f32 %v1756, 1.442695
    %v1863 = vpow.pop %v1862
    %v1864 = vmul.f32 %v1757, 1.442695
    %v1865 = vpow.pop %v1864
    %v1866 = vmul.f32 %v1758, 1.442695
    %v1867 = vpow.pop %v1866
    %v1868 = vmul.f32 %v1759, 1.442695
    %v1869 = vpow.pop %v1868
    %v1870 = vmul.f32 %v1760, 1.442695
    %v1871 = vpow.pop %v1870
    %v1872 = vmul.f32 %v1761, 1.442695
    %v1873 = vpow.pop %v1872
    %v1874 = vmul.f32 %v1762, 1.442695
    %v1875 = vpow.pop %v1874
    %v1876 = vmul.f32 %v1763, 1.442695
    %v1877 = vpow.pop %v1876
    %v1878 = vmul.f32 %v1764, 1.442695
    %v1879 = vpow.pop %v1878
    %v1880 = vmul.f32 %v1765, 1.442695
    %v1881 = vpow.pop %v1880
    %v1882 = vmul.f32 %v1766, 1.442695
    %v1883 = vpow.pop %v1882
    %v1884 = vmul.f32 %v1767, 1.442695
    %v1885 = vpow.pop %v1884
    %v1886 = vmul.f32 %v1768, 1.442695
    %v1887 = vpow.pop %v1886
    %v1888 = vmul.f32 %v1769, 1.442695
    %v1889 = vpow.pop %v1888
    %v1890 = vmul.f32 %v1770, 1.442695
    %v1891 = vpow.pop %v1890
    %v1892 = vmul.f32 %v1771, 1.442695
    %v1893 = vpow.pop %v1892
    %v1894 = vmul.f32 %v1772, 1.442695
    %v1895 = vpow.pop %v1894
    %v1896 = vmul.f32 %v1773, 1.442695
    %v1897 = vpow.pop %v1896
    %v1898 = vmul.f32 %v1774, 1.442695
    %v1899 = vpow.pop %v1898
    %v1900 = vmul.f32 %v1775, 1.442695
    %v1901 = vpow.pop %v1900
    %v1902 = vmul.f32 %v1776, 1.442695
    %v1903 = vpow.pop %v1902
    %v1904 = vmul.f32 %v1777, 1.442695
    %v1905 = vpow.pop %v1904
    %v1906 = vadd.f32 %v917, %v1650
    %v1907 = vadd.f32 %v918, %v1651
    %v1908 = vadd.f32 %v919, %v1652
    %v1909 = vadd.f32 %v920, %v1653
    %v1910 = vadd.f32 %v921, %v1654
    %v1911 = vadd.f32 %v922, %v1655
    %v1912 = vadd.f32 %v923, %v1656
    %v1913 = vadd.f32 %v924, %v1657
    %v1914 = vadd.f32 %v925, %v1658
    %v1915 = vadd.f32 %v926, %v1659
    %v1916 = vadd.f32 %v927, %v1660
    %v1917 = vadd.f32 %v928, %v1661
    %v1918 = vadd.f32 %v929, %v1662
    %v1919 = vadd.f32 %v930, %v1663
    %v1920 = vadd.f32 %v931, %v1664
    %v1921 = vadd.f32 %v932, %v1665
    %v1922 = vadd.f32 %v933, %v1666
    %v1923 = vadd.f32 %v934, %v1667
    %v1924 = vadd.f32 %v935, %v1668
    %v1925 = vadd.f32 %v936, %v1669
    %v1926 = vadd.f32 %v937, %v1670
    %v1927 = vadd.f32 %v938, %v1671
    %v1928 = vadd.f32 %v939, %v1672
    %v1929 = vadd.f32 %v940, %v1673
    %v1930 = vadd.f32 %v941, %v1674
    %v1931 = vadd.f32 %v942, %v1675
    %v1932 = vadd.f32 %v943, %v1676
    %v1933 = vadd.f32 %v944, %v1677
    %v1934 = vadd.f32 %v945, %v1678
    %v1935 = vadd.f32 %v946, %v1679
    %v1936 = vadd.f32 %v947, %v1680
    %v1937 = vadd.f32 %v948, %v1681
    %v1938 = vadd.f32 %v949, %v1682
    %v1939 = vadd.f32 %v950, %v1683
    %v1940 = vadd.f32 %v951, %v1684
    %v1941 = vadd.f32 %v952, %v1685
    %v1942 = vadd.f32 %v953, %v1686
    %v1943 = vadd.f32 %v954, %v1687
    %v1944 = vadd.f32 %v955, %v1688
    %v1945 = vadd.f32 %v956, %v1689
    %v1946 = vadd.f32 %v957, %v1690
    %v1947 = vadd.f32 %v958, %v1691
    %v1948 = vadd.f32 %v959, %v1692
    %v1949 = vadd.f32 %v960, %v1693
    %v1950 = vadd.f32 %v961, %v1694
    %v1951 = vadd.f32 %v962, %v1695
    %v1952 = vadd.f32 %v963, %v1696
    %v1953 = vadd.f32 %v964, %v1697
    %v1954 = vadd.f32 %v965, %v1698
    %v1955 = vadd.f32 %v966, %v1699
    %v1956 = vadd.f32 %v967, %v1700
    %v1957 = vadd.f32 %v968, %v1701
    %v1958 = vadd.f32 %v969, %v1702
    %v1959 = vadd.f32 %v970, %v1703
    %v1960 = vadd.f32 %v971, %v1704
    %v1961 = vadd.f32 %v972, %v1705
    %v1962 = vadd.f32 %v973, %v1706
    %v1963 = vadd.f32 %v974, %v1707
    %v1964 = vadd.f32 %v975, %v1708
    %v1965 = vadd.f32 %v976, %v1709
    %v1966 = vadd.f32 %v977, %v1710
    %v1967 = vadd.f32 %v978, %v1711
    %v1968 = vadd.f32 %v979, %v1712
    %v1969 = vadd.f32 %v980, %v1713
    %v1970 = vmul.f32 %v1906, 1.442695
    %v1971 = vpow.pop %v1970
    %v1972 = vmul.f32 %v1907, 1.442695
    %v1973 = vpow.pop %v1972
    %v1974 = vmul.f32 %v1908, 1.442695
    %v1975 = vpow.pop %v1974
    %v1976 = vmul.f32 %v1909, 1.442695
    %v1977 = vpow.pop %v1976
    %v1978 = vmul.f32 %v1910, 1.442695
    %v1979 = vpow.pop %v1978
    %v1980 = vmul.f32 %v1911, 1.442695
    %v1981 = vpow.pop %v1980
    %v1982 = vmul.f32 %v1912, 1.442695
    %v1983 = vpow.pop %v1982
    %v1984 = vmul.f32 %v1913, 1.442695
    %v1985 = vpow.pop %v1984
    %v1986 = vmul.f32 %v1914, 1.442695
    %v1987 = vpow.pop %v1986
    %v1988 = vmul.f32 %v1915, 1.442695
    %v1989 = vpow.pop %v1988
    %v1990 = vmul.f32 %v1916, 1.442695
    %v1991 = vpow.pop %v1990
    %v1992 = vmul.f32 %v1917, 1.442695
    %v1993 = vpow.pop %v1992
    %v1994 = vmul.f32 %v1918, 1.442695
    %v1995 = vpow.pop %v1994
    %v1996 = vmul.f32 %v1919, 1.442695
    %v1997 = vpow.pop %v1996
    %v1998 = vmul.f32 %v1920, 1.442695
    %v1999 = vpow.pop %v1998
    %v2000 = vmul.f32 %v1921, 1.442695
    %v2001 = vpow.pop %v2000
    %v2002 = vmul.f32 %v1922, 1.442695
    %v2003 = vpow.pop %v2002
    %v2004 = vmul.f32 %v1923, 1.442695
    %v2005 = vpow.pop %v2004
    %v2006 = vmul.f32 %v1924, 1.442695
    %v2007 = vpow.pop %v2006
    %v2008 = vmul.f32 %v1925, 1.442695
    %v2009 = vpow.pop %v2008
    %v2010 = vmul.f32 %v1926, 1.442695
    %v2011 = vpow.pop %v2010
    %v2012 = vmul.f32 %v1927, 1.442695
    %v2013 = vpow.pop %v2012
    %v2014 = vmul.f32 %v1928, 1.442695
    %v2015 = vpow.pop %v2014
    %v2016 = vmul.f32 %v1929, 1.442695
    %v2017 = vpow.pop %v2016
    %v2018 = vmul.f32 %v1930, 1.442695
    %v2019 = vpow.pop %v2018
    %v2020 = vmul.f32 %v1931, 1.442695
    %v2021 = vpow.pop %v2020
    %v2022 = vmul.f32 %v1932, 1.442695
    %v2023 = vpow.pop %v2022
    %v2024 = vmul.f32 %v1933, 1.442695
    %v2025 = vpow.pop %v2024
    %v2026 = vmul.f32 %v1934, 1.442695
    %v2027 = vpow.pop %v2026
    %v2028 = vmul.f32 %v1935, 1.442695
    %v2029 = vpow.pop %v2028
    %v2030 = vmul.f32 %v1936, 1.442695
    %v2031 = vpow.pop %v2030
    %v2032 = vmul.f32 %v1937, 1.442695
    %v2033 = vpow.pop %v2032
    %v2034 = vmul.f32 %v1938, 1.442695
    %v2035 = vpow.pop %v2034
    %v2036 = vmul.f32 %v1939, 1.442695
    %v2037 = vpow.pop %v2036
    %v2038 = vmul.f32 %v1940, 1.442695
    %v2039 = vpow.pop %v2038
    %v2040 = vmul.f32 %v1941, 1.442695
    %v2041 = vpow.pop %v2040
    %v2042 = vmul.f32 %v1942, 1.442695
    %v2043 = vpow.pop %v2042
    %v2044 = vmul.f32 %v1943, 1.442695
    %v2045 = vpow.pop %v2044
    %v2046 = vmul.f32 %v1944, 1.442695
    %v2047 = vpow.pop %v2046
    %v2048 = vmul.f32 %v1945, 1.442695
    %v2049 = vpow.pop %v2048
    %v2050 = vmul.f32 %v1946, 1.442695
    %v2051 = vpow.pop %v2050
    %v2052 = vmul.f32 %v1947, 1.442695
    %v2053 = vpow.pop %v2052
    %v2054 = vmul.f32 %v1948, 1.442695
    %v2055 = vpow.pop %v2054
    %v2056 = vmul.f32 %v1949, 1.442695
    %v2057 = vpow.pop %v2056
    %v2058 = vmul.f32 %v1950, 1.442695
    %v2059 = vpow.pop %v2058
    %v2060 = vmul.f32 %v1951, 1.442695
    %v2061 = vpow.pop %v2060
    %v2062 = vmul.f32 %v1952, 1.442695
    %v2063 = vpow.pop %v2062
    %v2064 = vmul.f32 %v1953, 1.442695
    %v2065 = vpow.pop %v2064
    %v2066 = vmul.f32 %v1954, 1.442695
    %v2067 = vpow.pop %v2066
    %v2068 = vmul.f32 %v1955, 1.442695
    %v2069 = vpow.pop %v2068
    %v2070 = vmul.f32 %v1956, 1.442695
    %v2071 = vpow.pop %v2070
    %v2072 = vmul.f32 %v1957, 1.442695
    %v2073 = vpow.pop %v2072
    %v2074 = vmul.f32 %v1958, 1.442695
    %v2075 = vpow.pop %v2074
    %v2076 = vmul.f32 %v1959, 1.442695
    %v2077 = vpow.pop %v2076
    %v2078 = vmul.f32 %v1960, 1.442695
    %v2079 = vpow.pop %v2078
    %v2080 = vmul.f32 %v1961, 1.442695
    %v2081 = vpow.pop %v2080
    %v2082 = vmul.f32 %v1962, 1.442695
    %v2083 = vpow.pop %v2082
    %v2084 = vmul.f32 %v1963, 1.442695
    %v2085 = vpow.pop %v2084
    %v2086 = vmul.f32 %v1964, 1.442695
    %v2087 = vpow.pop %v2086
    %v2088 = vmul.f32 %v1965, 1.442695
    %v2089 = vpow.pop %v2088
    %v2090 = vmul.f32 %v1966, 1.442695
    %v2091 = vpow.pop %v2090
    %v2092 = vmul.f32 %v1967, 1.442695
    %v2093 = vpow.pop %v2092
    %v2094 = vmul.f32 %v1968, 1.442695
    %v2095 = vpow.pop %v2094
    %v2096 = vmul.f32 %v1969, 1.442695
    %v2097 = vpow.pop %v2096
    %v2098 = vadd.f32 %v1255, %v1650
    %v2099 = vadd.f32 %v1256, %v1651
    %v2100 = vadd.f32 %v1257, %v1652
    %v2101 = vadd.f32 %v1258, %v1653
    %v2102 = vadd.f32 %v1259, %v1654
    %v2103 = vadd.f32 %v1260, %v1655
    %v2104 = vadd.f32 %v1261, %v1656
    %v2105 = vadd.f32 %v1262, %v1657
    %v2106 = vadd.f32 %v1263, %v1658
    %v2107 = vadd.f32 %v1264, %v1659
    %v2108 = vadd.f32 %v1265, %v1660
    %v2109 = vadd.f32 %v1266, %v1661
    %v2110 = vadd.f32 %v1267, %v1662
    %v2111 = vadd.f32 %v1268, %v1663
    %v2112 = vadd.f32 %v1269, %v1664
    %v2113 = vadd.f32 %v1270, %v1665
    %v2114 = vadd.f32 %v1271, %v1666
    %v2115 = vadd.f32 %v1272, %v1667
    %v2116 = vadd.f32 %v1273, %v1668
    %v2117 = vadd.f32 %v1274, %v1669
    %v2118 = vadd.f32 %v1275, %v1670
    %v2119 = vadd.f32 %v1276, %v1671
    %v2120 = vadd.f32 %v1277, %v1672
    %v2121 = vadd.f32 %v1278, %v1673
    %v2122 = vadd.f32 %v1279, %v1674
    %v2123 = vadd.f32 %v1280, %v1675
    %v2124 = vadd.f32 %v1281, %v1676
    %v2125 = vadd.f32 %v1282, %v1677
    %v2126 = vadd.f32 %v1283, %v1678
    %v2127 = vadd.f32 %v1284, %v1679
    %v2128 = vadd.f32 %v1285, %v1680
    %v2129 = vadd.f32 %v1286, %v1681
    %v2130 = vadd.f32 %v1287, %v1682
    %v2131 = vadd.f32 %v1288, %v1683
    %v2132 = vadd.f32 %v1289, %v1684
    %v2133 = vadd.f32 %v1290, %v1685
    %v2134 = vadd.f32 %v1291, %v1686
    %v2135 = vadd.f32 %v1292, %v1687
    %v2136 = vadd.f32 %v1293, %v1688
    %v2137 = vadd.f32 %v1294, %v1689
    %v2138 = vadd.f32 %v1295, %v1690
    %v2139 = vadd.f32 %v1296, %v1691
    %v2140 = vadd.f32 %v1297, %v1692
    %v2141 = vadd.f32 %v1298, %v1693
    %v2142 = vadd.f32 %v1299, %v1694
    %v2143 = vadd.f32 %v1300, %v1695
    %v2144 = vadd.f32 %v1301, %v1696
    %v2145 = vadd.f32 %v1302, %v1697
    %v2146 = vadd.f32 %v1303, %v1698
    %v2147 = vadd.f32 %v1304, %v1699
    %v2148 = vadd.f32 %v1305, %v1700
    %v2149 = vadd.f32 %v1306, %v1701
    %v2150 = vadd.f32 %v1307, %v1702
    %v2151 = vadd.f32 %v1308, %v1703
    %v2152 = vadd.f32 %v1309, %v1704
    %v2153 = vadd.f32 %v1310, %v1705
    %v2154 = vadd.f32 %v1311, %v1706
    %v2155 = vadd.f32 %v1312, %v1707
    %v2156 = vadd.f32 %v1313, %v1708
    %v2157 = vadd.f32 %v1314, %v1709
    %v2158 = vadd.f32 %v1315, %v1710
    %v2159 = vadd.f32 %v1316, %v1711
    %v2160 = vadd.f32 %v1317, %v1712
    %v2161 = vadd.f32 %v1318, %v1713
    %v2162 = vmul.f32 %v2098, 1.442695
    %v2163 = vpow.pop %v2162
    %v2164 = vmul.f32 %v2099, 1.442695
    %v2165 = vpow.pop %v2164
    %v2166 = vmul.f32 %v2100, 1.442695
    %v2167 = vpow.pop %v2166
    %v2168 = vmul.f32 %v2101, 1.442695
    %v2169 = vpow.pop %v2168
    %v2170 = vmul.f32 %v2102, 1.442695
    %v2171 = vpow.pop %v2170
    %v2172 = vmul.f32 %v2103, 1.442695
    %v2173 = vpow.pop %v2172
    %v2174 = vmul.f32 %v2104, 1.442695
    %v2175 = vpow.pop %v2174
    %v2176 = vmul.f32 %v2105, 1.442695
    %v2177 = vpow.pop %v2176
    %v2178 = vmul.f32 %v2106, 1.442695
    %v2179 = vpow.pop %v2178
    %v2180 = vmul.f32 %v2107, 1.442695
    %v2181 = vpow.pop %v2180
    %v2182 = vmul.f32 %v2108, 1.442695
    %v2183 = vpow.pop %v2182
    %v2184 = vmul.f32 %v2109, 1.442695
    %v2185 = vpow.pop %v2184
    %v2186 = vmul.f32 %v2110, 1.442695
    %v2187 = vpow.pop %v2186
    %v2188 = vmul.f32 %v2111, 1.442695
    %v2189 = vpow.pop %v2188
    %v2190 = vmul.f32 %v2112, 1.442695
    %v2191 = vpow.pop %v2190
    %v2192 = vmul.f32 %v2113, 1.442695
    %v2193 = vpow.pop %v2192
    %v2194 = vmul.f32 %v2114, 1.442695
    %v2195 = vpow.pop %v2194
    %v2196 = vmul.f32 %v2115, 1.442695
    %v2197 = vpow.pop %v2196
    %v2198 = vmul.f32 %v2116, 1.442695
    %v2199 = vpow.pop %v2198
    %v2200 = vmul.f32 %v2117, 1.442695
    %v2201 = vpow.pop %v2200
    %v2202 = vmul.f32 %v2118, 1.442695
    %v2203 = vpow.pop %v2202
    %v2204 = vmul.f32 %v2119, 1.442695
    %v2205 = vpow.pop %v2204
    %v2206 = vmul.f32 %v2120, 1.442695
    %v2207 = vpow.pop %v2206
    %v2208 = vmul.f32 %v2121, 1.442695
    %v2209 = vpow.pop %v2208
    %v2210 = vmul.f32 %v2122, 1.442695
    %v2211 = vpow.pop %v2210
    %v2212 = vmul.f32 %v2123, 1.442695
    %v2213 = vpow.pop %v2212
    %v2214 = vmul.f32 %v2124, 1.442695
    %v2215 = vpow.pop %v2214
    %v2216 = vmul.f32 %v2125, 1.442695
    %v2217 = vpow.pop %v2216
    %v2218 = vmul.f32 %v2126, 1.442695
    %v2219 = vpow.pop %v2218
    %v2220 = vmul.f32 %v2127, 1.442695
    %v2221 = vpow.pop %v2220
    %v2222 = vmul.f32 %v2128, 1.442695
    %v2223 = vpow.pop %v2222
    %v2224 = vmul.f32 %v2129, 1.442695
    %v2225 = vpow.pop %v2224
    %v2226 = vmul.f32 %v2130, 1.442695
    %v2227 = vpow.pop %v2226
    %v2228 = vmul.f32 %v2131, 1.442695
    %v2229 = vpow.pop %v2228
    %v2230 = vmul.f32 %v2132, 1.442695
    %v2231 = vpow.pop %v2230
    %v2232 = vmul.f32 %v2133, 1.442695
    %v2233 = vpow.pop %v2232
    %v2234 = vmul.f32 %v2134, 1.442695
    %v2235 = vpow.pop %v2234
    %v2236 = vmul.f32 %v2135, 1.442695
    %v2237 = vpow.pop %v2236
    %v2238 = vmul.f32 %v2136, 1.442695
    %v2239 = vpow.pop %v2238
    %v2240 = vmul.f32 %v2137, 1.442695
    %v2241 = vpow.pop %v2240
    %v2242 = vmul.f32 %v2138, 1.442695
    %v2243 = vpow.pop %v2242
    %v2244 = vmul.f32 %v2139, 1.442695
    %v2245 = vpow.pop %v2244
    %v2246 = vmul.f32 %v2140, 1.442695
    %v2247 = vpow.pop %v2246
    %v2248 = vmul.f32 %v2141, 1.442695
    %v2249 = vpow.pop %v2248
    %v2250 = vmul.f32 %v2142, 1.442695
    %v2251 = vpow.pop %v2250
    %v2252 = vmul.f32 %v2143, 1.442695
    %v2253 = vpow.pop %v2252
    %v2254 = vmul.f32 %v2144, 1.442695
    %v2255 = vpow.pop %v2254
    %v2256 = vmul.f32 %v2145, 1.442695
    %v2257 = vpow.pop %v2256
    %v2258 = vmul.f32 %v2146, 1.442695
    %v2259 = vpow.pop %v2258
    %v2260 = vmul.f32 %v2147, 1.442695
    %v2261 = vpow.pop %v2260
    %v2262 = vmul.f32 %v2148, 1.442695
    %v2263 = vpow.pop %v2262
    %v2264 = vmul.f32 %v2149, 1.442695
    %v2265 = vpow.pop %v2264
    %v2266 = vmul.f32 %v2150, 1.442695
    %v2267 = vpow.pop %v2266
    %v2268 = vmul.f32 %v2151, 1.442695
    %v2269 = vpow.pop %v2268
    %v2270 = vmul.f32 %v2152, 1.442695
    %v2271 = vpow.pop %v2270
    %v2272 = vmul.f32 %v2153, 1.442695
    %v2273 = vpow.pop %v2272
    %v2274 = vmul.f32 %v2154, 1.442695
    %v2275 = vpow.pop %v2274
    %v2276 = vmul.f32 %v2155, 1.442695
    %v2277 = vpow.pop %v2276
    %v2278 = vmul.f32 %v2156, 1.442695
    %v2279 = vpow.pop %v2278
    %v2280 = vmul.f32 %v2157, 1.442695
    %v2281 = vpow.pop %v2280
    %v2282 = vmul.f32 %v2158, 1.442695
    %v2283 = vpow.pop %v2282
    %v2284 = vmul.f32 %v2159, 1.442695
    %v2285 = vpow.pop %v2284
    %v2286 = vmul.f32 %v2160, 1.442695
    %v2287 = vpow.pop %v2286
    %v2288 = vmul.f32 %v2161, 1.442695
    %v2289 = vpow.pop %v2288
    %v2290 = vunpack.c.l.bf16 %v79
    %v2291 = vunpack.c.l.bf16 %v80
    %v2292 = vunpack.c.l.bf16 %v81
    %v2293 = vunpack.c.l.bf16 %v82
    %v2294 = vunpack.c.l.bf16 %v83
    %v2295 = vunpack.c.l.bf16 %v84
    %v2296 = vunpack.c.l.bf16 %v85
    %v2297 = vunpack.c.l.bf16 %v86
    %v2298 = vunpack.c.l.bf16 %v87
    %v2299 = vunpack.c.l.bf16 %v88
    %v2300 = vunpack.c.l.bf16 %v89
    %v2301 = vunpack.c.l.bf16 %v90
    %v2302 = vunpack.c.l.bf16 %v91
    %v2303 = vunpack.c.l.bf16 %v92
    %v2304 = vunpack.c.l.bf16 %v93
    %v2305 = vunpack.c.l.bf16 %v94
    %v2306 = vunpack.c.l.bf16 %v95
    %v2307 = vunpack.c.l.bf16 %v96
    %v2308 = vunpack.c.l.bf16 %v97
    %v2309 = vunpack.c.l.bf16 %v98
    %v2310 = vunpack.c.l.bf16 %v99
    %v2311 = vunpack.c.l.bf16 %v100
    %v2312 = vunpack.c.l.bf16 %v101
    %v2313 = vunpack.c.l.bf16 %v102
    %v2314 = vunpack.c.l.bf16 %v103
    %v2315 = vunpack.c.l.bf16 %v104
    %v2316 = vunpack.c.l.bf16 %v105
    %v2317 = vunpack.c.l.bf16 %v106
    %v2318 = vunpack.c.l.bf16 %v107
    %v2319 = vunpack.c.l.bf16 %v108
    %v2320 = vunpack.c.l.bf16 %v109
    %v2321 = vunpack.c.l.bf16 %v110
    %v2322 = vunpack.c.l.bf16 %v113
    %v2323 = vunpack.c.l.bf16 %v114
    %v2324 = vunpack.c.l.bf16 %v115
    %v2325 = vunpack.c.l.bf16 %v116
    %v2326 = vunpack.c.l.bf16 %v117
    %v2327 = vunpack.c.l.bf16 %v118
    %v2328 = vunpack.c.l.bf16 %v119
    %v2329 = vunpack.c.l.bf16 %v120
    %v2330 = vunpack.c.l.bf16 %v121
    %v2331 = vunpack.c.l.bf16 %v122
    %v2332 = vunpack.c.l.bf16 %v123
    %v2333 = vunpack.c.l.bf16 %v124
    %v2334 = vunpack.c.l.bf16 %v125
    %v2335 = vunpack.c.l.bf16 %v126
    %v2336 = vunpack.c.l.bf16 %v127
    %v2337 = vunpack.c.l.bf16 %v128
    %v2338 = vunpack.c.l.bf16 %v129
    %v2339 = vunpack.c.l.bf16 %v130
    %v2340 = vunpack.c.l.bf16 %v131
    %v2341 = vunpack.c.l.bf16 %v132
    %v2342 = vunpack.c.l.bf16 %v133
    %v2343 = vunpack.c.l.bf16 %v134
    %v2344 = vunpack.c.l.bf16 %v135
    %v2345 = vunpack.c.l.bf16 %v136
    %v2346 = vunpack.c.l.bf16 %v137
    %v2347 = vunpack.c.l.bf16 %v138
    %v2348 = vunpack.c.l.bf16 %v139
    %v2349 = vunpack.c.l.bf16 %v140
    %v2350 = vunpack.c.l.bf16 %v141
    %v2351 = vunpack.c.l.bf16 %v142
    %v2352 = vunpack.c.l.bf16 %v143
    %v2353 = vunpack.c.l.bf16 %v144
    %v2354 = vmul.f32 %v2290, %v2322
    %v2355 = vmul.f32 %v2291, %v2323
    %v2356 = vmul.f32 %v2292, %v2324
    %v2357 = vmul.f32 %v2293, %v2325
    %v2358 = vmul.f32 %v2294, %v2326
    %v2359 = vmul.f32 %v2295, %v2327
    %v2360 = vmul.f32 %v2296, %v2328
    %v2361 = vmul.f32 %v2297, %v2329
    %v2362 = vmul.f32 %v2298, %v2330
    %v2363 = vmul.f32 %v2299, %v2331
    %v2364 = vmul.f32 %v2300, %v2332
    %v2365 = vmul.f32 %v2301, %v2333
    %v2366 = vmul.f32 %v2302, %v2334
    %v2367 = vmul.f32 %v2303, %v2335
    %v2368 = vmul.f32 %v2304, %v2336
    %v2369 = vmul.f32 %v2305, %v2337
    %v2370 = vmul.f32 %v2306, %v2338
    %v2371 = vmul.f32 %v2307, %v2339
    %v2372 = vmul.f32 %v2308, %v2340
    %v2373 = vmul.f32 %v2309, %v2341
    %v2374 = vmul.f32 %v2310, %v2342
    %v2375 = vmul.f32 %v2311, %v2343
    %v2376 = vmul.f32 %v2312, %v2344
    %v2377 = vmul.f32 %v2313, %v2345
    %v2378 = vmul.f32 %v2314, %v2346
    %v2379 = vmul.f32 %v2315, %v2347
    %v2380 = vmul.f32 %v2316, %v2348
    %v2381 = vmul.f32 %v2317, %v2349
    %v2382 = vmul.f32 %v2318, %v2350
    %v2383 = vmul.f32 %v2319, %v2351
    %v2384 = vmul.f32 %v2320, %v2352
    %v2385 = vmul.f32 %v2321, %v2353
    %2386 = vadd.xlane.f32.xlu0 %v2354
    %v2387 = vpop.xlane.xlu0 %2386
    %2388 = vadd.xlane.f32.xlu0 %v2355
    %v2389 = vpop.xlane.xlu0 %2388
    %2390 = vadd.xlane.f32.xlu0 %v2356
    %v2391 = vpop.xlane.xlu0 %2390
    %2392 = vadd.xlane.f32.xlu0 %v2357
    %v2393 = vpop.xlane.xlu0 %2392
    %2394 = vadd.xlane.f32.xlu0 %v2358
    %v2395 = vpop.xlane.xlu0 %2394
    %2396 = vadd.xlane.f32.xlu0 %v2359
    %v2397 = vpop.xlane.xlu0 %2396
    %2398 = vadd.xlane.f32.xlu0 %v2360
    %v2399 = vpop.xlane.xlu0 %2398
    %2400 = vadd.xlane.f32.xlu0 %v2361
    %v2401 = vpop.xlane.xlu0 %2400
    %2402 = vadd.xlane.f32.xlu0 %v2362
    %v2403 = vpop.xlane.xlu0 %2402
    %2404 = vadd.xlane.f32.xlu0 %v2363
    %v2405 = vpop.xlane.xlu0 %2404
    %2406 = vadd.xlane.f32.xlu0 %v2364
    %v2407 = vpop.xlane.xlu0 %2406
    %2408 = vadd.xlane.f32.xlu0 %v2365
    %v2409 = vpop.xlane.xlu0 %2408
    %2410 = vadd.xlane.f32.xlu0 %v2366
    %v2411 = vpop.xlane.xlu0 %2410
    %2412 = vadd.xlane.f32.xlu0 %v2367
    %v2413 = vpop.xlane.xlu0 %2412
    %2414 = vadd.xlane.f32.xlu0 %v2368
    %v2415 = vpop.xlane.xlu0 %2414
    %2416 = vadd.xlane.f32.xlu0 %v2369
    %v2417 = vpop.xlane.xlu0 %2416
    %2418 = vadd.xlane.f32.xlu0 %v2370
    %v2419 = vpop.xlane.xlu0 %2418
    %2420 = vadd.xlane.f32.xlu0 %v2371
    %v2421 = vpop.xlane.xlu0 %2420
    %2422 = vadd.xlane.f32.xlu0 %v2372
    %v2423 = vpop.xlane.xlu0 %2422
    %2424 = vadd.xlane.f32.xlu0 %v2373
    %v2425 = vpop.xlane.xlu0 %2424
    %2426 = vadd.xlane.f32.xlu0 %v2374
    %v2427 = vpop.xlane.xlu0 %2426
    %2428 = vadd.xlane.f32.xlu0 %v2375
    %v2429 = vpop.xlane.xlu0 %2428
    %2430 = vadd.xlane.f32.xlu0 %v2376
    %v2431 = vpop.xlane.xlu0 %2430
    %2432 = vadd.xlane.f32.xlu0 %v2377
    %v2433 = vpop.xlane.xlu0 %2432
    %2434 = vadd.xlane.f32.xlu0 %v2378
    %v2435 = vpop.xlane.xlu0 %2434
    %2436 = vadd.xlane.f32.xlu0 %v2379
    %v2437 = vpop.xlane.xlu0 %2436
    %2438 = vadd.xlane.f32.xlu0 %v2380
    %v2439 = vpop.xlane.xlu0 %2438
    %2440 = vadd.xlane.f32.xlu0 %v2381
    %v2441 = vpop.xlane.xlu0 %2440
    %2442 = vadd.xlane.f32.xlu0 %v2382
    %v2443 = vpop.xlane.xlu0 %2442
    %2444 = vadd.xlane.f32.xlu0 %v2383
    %v2445 = vpop.xlane.xlu0 %2444
    %2446 = vadd.xlane.f32.xlu0 %v2384
    %v2447 = vpop.xlane.xlu0 %2446
    %2448 = vadd.xlane.f32.xlu0 %v2385
    %v2449 = vpop.xlane.xlu0 %2448
    %v2450 = vmul.f32 %v2387, 10.0
    %v2451 = vmul.f32 %v2389, 10.0
    %v2452 = vmul.f32 %v2391, 10.0
    %v2453 = vmul.f32 %v2393, 10.0
    %v2454 = vmul.f32 %v2395, 10.0
    %v2455 = vmul.f32 %v2397, 10.0
    %v2456 = vmul.f32 %v2399, 10.0
    %v2457 = vmul.f32 %v2401, 10.0
    %v2458 = vmul.f32 %v2403, 10.0
    %v2459 = vmul.f32 %v2405, 10.0
    %v2460 = vmul.f32 %v2407, 10.0
    %v2461 = vmul.f32 %v2409, 10.0
    %v2462 = vmul.f32 %v2411, 10.0
    %v2463 = vmul.f32 %v2413, 10.0
    %v2464 = vmul.f32 %v2415, 10.0
    %v2465 = vmul.f32 %v2417, 10.0
    %v2466 = vmul.f32 %v2419, 10.0
    %v2467 = vmul.f32 %v2421, 10.0
    %v2468 = vmul.f32 %v2423, 10.0
    %v2469 = vmul.f32 %v2425, 10.0
    %v2470 = vmul.f32 %v2427, 10.0
    %v2471 = vmul.f32 %v2429, 10.0
    %v2472 = vmul.f32 %v2431, 10.0
    %v2473 = vmul.f32 %v2433, 10.0
    %v2474 = vmul.f32 %v2435, 10.0
    %v2475 = vmul.f32 %v2437, 10.0
    %v2476 = vmul.f32 %v2439, 10.0
    %v2477 = vmul.f32 %v2441, 10.0
    %v2478 = vmul.f32 %v2443, 10.0
    %v2479 = vmul.f32 %v2445, 10.0
    %v2480 = vmul.f32 %v2447, 10.0
    %v2481 = vmul.f32 %v2449, 10.0
    %v2482 = vadd.f32 %v1779, %v1781
    %2483 = vadd.xlane.f32.xlu0 %v2482
    %v2484 = vpop.xlane.xlu0 %2483
    %v2485 = vadd.f32 %v1783, %v1785
    %2486 = vadd.xlane.f32.xlu0 %v2485
    %v2487 = vpop.xlane.xlu0 %2486
    %v2488 = vadd.f32 %v1787, %v1789
    %2489 = vadd.xlane.f32.xlu0 %v2488
    %v2490 = vpop.xlane.xlu0 %2489
    %v2491 = vadd.f32 %v1791, %v1793
    %2492 = vadd.xlane.f32.xlu0 %v2491
    %v2493 = vpop.xlane.xlu0 %2492
    %v2494 = vadd.f32 %v1795, %v1797
    %2495 = vadd.xlane.f32.xlu0 %v2494
    %v2496 = vpop.xlane.xlu0 %2495
    %v2497 = vadd.f32 %v1799, %v1801
    %2498 = vadd.xlane.f32.xlu0 %v2497
    %v2499 = vpop.xlane.xlu0 %2498
    %v2500 = vadd.f32 %v1803, %v1805
    %2501 = vadd.xlane.f32.xlu0 %v2500
    %v2502 = vpop.xlane.xlu0 %2501
    %v2503 = vadd.f32 %v1807, %v1809
    %2504 = vadd.xlane.f32.xlu0 %v2503
    %v2505 = vpop.xlane.xlu0 %2504
    %v2506 = vadd.f32 %v1811, %v1813
    %2507 = vadd.xlane.f32.xlu0 %v2506
    %v2508 = vpop.xlane.xlu0 %2507
    %v2509 = vadd.f32 %v1815, %v1817
    %2510 = vadd.xlane.f32.xlu0 %v2509
    %v2511 = vpop.xlane.xlu0 %2510
    %v2512 = vadd.f32 %v1819, %v1821
    %2513 = vadd.xlane.f32.xlu0 %v2512
    %v2514 = vpop.xlane.xlu0 %2513
    %v2515 = vadd.f32 %v1823, %v1825
    %2516 = vadd.xlane.f32.xlu0 %v2515
    %v2517 = vpop.xlane.xlu0 %2516
    %v2518 = vadd.f32 %v1827, %v1829
    %2519 = vadd.xlane.f32.xlu0 %v2518
    %v2520 = vpop.xlane.xlu0 %2519
    %v2521 = vadd.f32 %v1831, %v1833
    %2522 = vadd.xlane.f32.xlu0 %v2521
    %v2523 = vpop.xlane.xlu0 %2522
    %v2524 = vadd.f32 %v1835, %v1837
    %2525 = vadd.xlane.f32.xlu0 %v2524
    %v2526 = vpop.xlane.xlu0 %2525
    %v2527 = vadd.f32 %v1839, %v1841
    %2528 = vadd.xlane.f32.xlu0 %v2527
    %v2529 = vpop.xlane.xlu0 %2528
    %v2530 = vadd.f32 %v1843, %v1845
    %2531 = vadd.xlane.f32.xlu0 %v2530
    %v2532 = vpop.xlane.xlu0 %2531
    %v2533 = vadd.f32 %v1847, %v1849
    %2534 = vadd.xlane.f32.xlu0 %v2533
    %v2535 = vpop.xlane.xlu0 %2534
    %v2536 = vadd.f32 %v1851, %v1853
    %2537 = vadd.xlane.f32.xlu0 %v2536
    %v2538 = vpop.xlane.xlu0 %2537
    %v2539 = vadd.f32 %v1855, %v1857
    %2540 = vadd.xlane.f32.xlu0 %v2539
    %v2541 = vpop.xlane.xlu0 %2540
    %v2542 = vadd.f32 %v1859, %v1861
    %2543 = vadd.xlane.f32.xlu0 %v2542
    %v2544 = vpop.xlane.xlu0 %2543
    %v2545 = vadd.f32 %v1863, %v1865
    %2546 = vadd.xlane.f32.xlu0 %v2545
    %v2547 = vpop.xlane.xlu0 %2546
    %v2548 = vadd.f32 %v1867, %v1869
    %2549 = vadd.xlane.f32.xlu0 %v2548
    %v2550 = vpop.xlane.xlu0 %2549
    %v2551 = vadd.f32 %v1871, %v1873
    %2552 = vadd.xlane.f32.xlu0 %v2551
    %v2553 = vpop.xlane.xlu0 %2552
    %v2554 = vadd.f32 %v1875, %v1877
    %2555 = vadd.xlane.f32.xlu0 %v2554
    %v2556 = vpop.xlane.xlu0 %2555
    %v2557 = vadd.f32 %v1879, %v1881
    %2558 = vadd.xlane.f32.xlu0 %v2557
    %v2559 = vpop.xlane.xlu0 %2558
    %v2560 = vadd.f32 %v1883, %v1885
    %2561 = vadd.xlane.f32.xlu0 %v2560
    %v2562 = vpop.xlane.xlu0 %2561
    %v2563 = vadd.f32 %v1887, %v1889
    %2564 = vadd.xlane.f32.xlu0 %v2563
    %v2565 = vpop.xlane.xlu0 %2564
    %v2566 = vadd.f32 %v1891, %v1893
    %2567 = vadd.xlane.f32.xlu0 %v2566
    %v2568 = vpop.xlane.xlu0 %2567
    %v2569 = vadd.f32 %v1895, %v1897
    %2570 = vadd.xlane.f32.xlu0 %v2569
    %v2571 = vpop.xlane.xlu0 %2570
    %v2572 = vadd.f32 %v1899, %v1901
    %2573 = vadd.xlane.f32.xlu0 %v2572
    %v2574 = vpop.xlane.xlu0 %2573
    %v2575 = vadd.f32 %v1903, %v1905
    %2576 = vadd.xlane.f32.xlu0 %v2575
    %v2577 = vpop.xlane.xlu0 %2576
    %v2578 = vadd.f32 %v1971, %v1973
    %2579 = vadd.xlane.f32.xlu0 %v2578
    %v2580 = vpop.xlane.xlu0 %2579
    %v2581 = vadd.f32 %v1975, %v1977
    %2582 = vadd.xlane.f32.xlu0 %v2581
    %v2583 = vpop.xlane.xlu0 %2582
    %v2584 = vadd.f32 %v1979, %v1981
    %2585 = vadd.xlane.f32.xlu0 %v2584
    %v2586 = vpop.xlane.xlu0 %2585
    %v2587 = vadd.f32 %v1983, %v1985
    %2588 = vadd.xlane.f32.xlu0 %v2587
    %v2589 = vpop.xlane.xlu0 %2588
    %v2590 = vadd.f32 %v1987, %v1989
    %2591 = vadd.xlane.f32.xlu0 %v2590
    %v2592 = vpop.xlane.xlu0 %2591
    %v2593 = vadd.f32 %v1991, %v1993
    %2594 = vadd.xlane.f32.xlu0 %v2593
    %v2595 = vpop.xlane.xlu0 %2594
    %v2596 = vadd.f32 %v1995, %v1997
    %2597 = vadd.xlane.f32.xlu0 %v2596
    %v2598 = vpop.xlane.xlu0 %2597
    %v2599 = vadd.f32 %v1999, %v2001
    %2600 = vadd.xlane.f32.xlu0 %v2599
    %v2601 = vpop.xlane.xlu0 %2600
    %v2602 = vadd.f32 %v2003, %v2005
    %2603 = vadd.xlane.f32.xlu0 %v2602
    %v2604 = vpop.xlane.xlu0 %2603
    %v2605 = vadd.f32 %v2007, %v2009
    %2606 = vadd.xlane.f32.xlu0 %v2605
    %v2607 = vpop.xlane.xlu0 %2606
    %v2608 = vadd.f32 %v2011, %v2013
    %2609 = vadd.xlane.f32.xlu0 %v2608
    %v2610 = vpop.xlane.xlu0 %2609
    %v2611 = vadd.f32 %v2015, %v2017
    %2612 = vadd.xlane.f32.xlu0 %v2611
    %v2613 = vpop.xlane.xlu0 %2612
    %v2614 = vadd.f32 %v2019, %v2021
    %2615 = vadd.xlane.f32.xlu0 %v2614
    %v2616 = vpop.xlane.xlu0 %2615
    %v2617 = vadd.f32 %v2023, %v2025
    %2618 = vadd.xlane.f32.xlu0 %v2617
    %v2619 = vpop.xlane.xlu0 %2618
    %v2620 = vadd.f32 %v2027, %v2029
    %2621 = vadd.xlane.f32.xlu0 %v2620
    %v2622 = vpop.xlane.xlu0 %2621
    %v2623 = vadd.f32 %v2031, %v2033
    %2624 = vadd.xlane.f32.xlu0 %v2623
    %v2625 = vpop.xlane.xlu0 %2624
    %v2626 = vadd.f32 %v2035, %v2037
    %2627 = vadd.xlane.f32.xlu0 %v2626
    %v2628 = vpop.xlane.xlu0 %2627
    %v2629 = vadd.f32 %v2039, %v2041
    %2630 = vadd.xlane.f32.xlu0 %v2629
    %v2631 = vpop.xlane.xlu0 %2630
    %v2632 = vadd.f32 %v2043, %v2045
    %2633 = vadd.xlane.f32.xlu0 %v2632
    %v2634 = vpop.xlane.xlu0 %2633
    %v2635 = vadd.f32 %v2047, %v2049
    %2636 = vadd.xlane.f32.xlu0 %v2635
    %v2637 = vpop.xlane.xlu0 %2636
    %v2638 = vadd.f32 %v2051, %v2053
    %2639 = vadd.xlane.f32.xlu0 %v2638
    %v2640 = vpop.xlane.xlu0 %2639
    %v2641 = vadd.f32 %v2055, %v2057
    %2642 = vadd.xlane.f32.xlu0 %v2641
    %v2643 = vpop.xlane.xlu0 %2642
    %v2644 = vadd.f32 %v2059, %v2061
    %2645 = vadd.xlane.f32.xlu0 %v2644
    %v2646 = vpop.xlane.xlu0 %2645
    %v2647 = vadd.f32 %v2063, %v2065
    %2648 = vadd.xlane.f32.xlu0 %v2647
    %v2649 = vpop.xlane.xlu0 %2648
    %v2650 = vadd.f32 %v2067, %v2069
    %2651 = vadd.xlane.f32.xlu0 %v2650
    %v2652 = vpop.xlane.xlu0 %2651
    %v2653 = vadd.f32 %v2071, %v2073
    %2654 = vadd.xlane.f32.xlu0 %v2653
    %v2655 = vpop.xlane.xlu0 %2654
    %v2656 = vadd.f32 %v2075, %v2077
    %2657 = vadd.xlane.f32.xlu0 %v2656
    %v2658 = vpop.xlane.xlu0 %2657
    %v2659 = vadd.f32 %v2079, %v2081
    %2660 = vadd.xlane.f32.xlu0 %v2659
    %v2661 = vpop.xlane.xlu0 %2660
    %v2662 = vadd.f32 %v2083, %v2085
    %2663 = vadd.xlane.f32.xlu0 %v2662
    %v2664 = vpop.xlane.xlu0 %2663
    %v2665 = vadd.f32 %v2087, %v2089
    %2666 = vadd.xlane.f32.xlu0 %v2665
    %v2667 = vpop.xlane.xlu0 %2666
    %v2668 = vadd.f32 %v2091, %v2093
    %2669 = vadd.xlane.f32.xlu0 %v2668
    %v2670 = vpop.xlane.xlu0 %2669
    %v2671 = vadd.f32 %v2095, %v2097
    %2672 = vadd.xlane.f32.xlu0 %v2671
    %v2673 = vpop.xlane.xlu0 %2672
    %v2674 = vadd.f32 %v2484, %v2580
    %v2675 = vadd.f32 %v2487, %v2583
    %v2676 = vadd.f32 %v2490, %v2586
    %v2677 = vadd.f32 %v2493, %v2589
    %v2678 = vadd.f32 %v2496, %v2592
    %v2679 = vadd.f32 %v2499, %v2595
    %v2680 = vadd.f32 %v2502, %v2598
    %v2681 = vadd.f32 %v2505, %v2601
    %v2682 = vadd.f32 %v2508, %v2604
    %v2683 = vadd.f32 %v2511, %v2607
    %v2684 = vadd.f32 %v2514, %v2610
    %v2685 = vadd.f32 %v2517, %v2613
    %v2686 = vadd.f32 %v2520, %v2616
    %v2687 = vadd.f32 %v2523, %v2619
    %v2688 = vadd.f32 %v2526, %v2622
    %v2689 = vadd.f32 %v2529, %v2625
    %v2690 = vadd.f32 %v2532, %v2628
    %v2691 = vadd.f32 %v2535, %v2631
    %v2692 = vadd.f32 %v2538, %v2634
    %v2693 = vadd.f32 %v2541, %v2637
    %v2694 = vadd.f32 %v2544, %v2640
    %v2695 = vadd.f32 %v2547, %v2643
    %v2696 = vadd.f32 %v2550, %v2646
    %v2697 = vadd.f32 %v2553, %v2649
    %v2698 = vadd.f32 %v2556, %v2652
    %v2699 = vadd.f32 %v2559, %v2655
    %v2700 = vadd.f32 %v2562, %v2658
    %v2701 = vadd.f32 %v2565, %v2661
    %v2702 = vadd.f32 %v2568, %v2664
    %v2703 = vadd.f32 %v2571, %v2667
    %v2704 = vadd.f32 %v2574, %v2670
    %v2705 = vadd.f32 %v2577, %v2673
    %v2706 = vsel %vm1385, %v2674, 1.0
    %v2707 = vsel %vm1386, %v2675, 1.0
    %v2708 = vsel %vm1387, %v2676, 1.0
    %v2709 = vsel %vm1388, %v2677, 1.0
    %v2710 = vsel %vm1389, %v2678, 1.0
    %v2711 = vsel %vm1390, %v2679, 1.0
    %v2712 = vsel %vm1391, %v2680, 1.0
    %v2713 = vsel %vm1392, %v2681, 1.0
    %v2714 = vsel %vm1393, %v2682, 1.0
    %v2715 = vsel %vm1394, %v2683, 1.0
    %v2716 = vsel %vm1395, %v2684, 1.0
    %v2717 = vsel %vm1396, %v2685, 1.0
    %v2718 = vsel %vm1397, %v2686, 1.0
    %v2719 = vsel %vm1398, %v2687, 1.0
    %v2720 = vsel %vm1399, %v2688, 1.0
    %v2721 = vsel %vm1400, %v2689, 1.0
    %v2722 = vsel %vm1401, %v2690, 1.0
    %v2723 = vsel %vm1402, %v2691, 1.0
    %v2724 = vsel %vm1403, %v2692, 1.0
    %v2725 = vsel %vm1404, %v2693, 1.0
    %v2726 = vsel %vm1405, %v2694, 1.0
    %v2727 = vsel %vm1406, %v2695, 1.0
    %v2728 = vsel %vm1407, %v2696, 1.0
    %v2729 = vsel %vm1408, %v2697, 1.0
    %v2730 = vsel %vm1409, %v2698, 1.0
    %v2731 = vsel %vm1410, %v2699, 1.0
    %v2732 = vsel %vm1411, %v2700, 1.0
    %v2733 = vsel %vm1412, %v2701, 1.0
    %v2734 = vsel %vm1413, %v2702, 1.0
    %v2735 = vsel %vm1414, %v2703, 1.0
    %v2736 = vsel %vm1415, %v2704, 1.0
    %v2737 = vsel %vm1416, %v2705, 1.0
    %v2738 = vlog2.pop %v2706
    %v2739 = vmul.f32 %v2738, 0.6931472
    %v2740 = vlog2.pop %v2707
    %v2741 = vmul.f32 %v2740, 0.6931472
    %v2742 = vlog2.pop %v2708
    %v2743 = vmul.f32 %v2742, 0.6931472
    %v2744 = vlog2.pop %v2709
    %v2745 = vmul.f32 %v2744, 0.6931472
    %v2746 = vlog2.pop %v2710
    %v2747 = vmul.f32 %v2746, 0.6931472
    %v2748 = vlog2.pop %v2711
    %v2749 = vmul.f32 %v2748, 0.6931472
    %v2750 = vlog2.pop %v2712
    %v2751 = vmul.f32 %v2750, 0.6931472
    %v2752 = vlog2.pop %v2713
    %v2753 = vmul.f32 %v2752, 0.6931472
    %v2754 = vlog2.pop %v2714
    %v2755 = vmul.f32 %v2754, 0.6931472
    %v2756 = vlog2.pop %v2715
    %v2757 = vmul.f32 %v2756, 0.6931472
    %v2758 = vlog2.pop %v2716
    %v2759 = vmul.f32 %v2758, 0.6931472
    %v2760 = vlog2.pop %v2717
    %v2761 = vmul.f32 %v2760, 0.6931472
    %v2762 = vlog2.pop %v2718
    %v2763 = vmul.f32 %v2762, 0.6931472
    %v2764 = vlog2.pop %v2719
    %v2765 = vmul.f32 %v2764, 0.6931472
    %v2766 = vlog2.pop %v2720
    %v2767 = vmul.f32 %v2766, 0.6931472
    %v2768 = vlog2.pop %v2721
    %v2769 = vmul.f32 %v2768, 0.6931472
    %v2770 = vlog2.pop %v2722
    %v2771 = vmul.f32 %v2770, 0.6931472
    %v2772 = vlog2.pop %v2723
    %v2773 = vmul.f32 %v2772, 0.6931472
    %v2774 = vlog2.pop %v2724
    %v2775 = vmul.f32 %v2774, 0.6931472
    %v2776 = vlog2.pop %v2725
    %v2777 = vmul.f32 %v2776, 0.6931472
    %v2778 = vlog2.pop %v2726
    %v2779 = vmul.f32 %v2778, 0.6931472
    %v2780 = vlog2.pop %v2727
    %v2781 = vmul.f32 %v2780, 0.6931472
    %v2782 = vlog2.pop %v2728
    %v2783 = vmul.f32 %v2782, 0.6931472
    %v2784 = vlog2.pop %v2729
    %v2785 = vmul.f32 %v2784, 0.6931472
    %v2786 = vlog2.pop %v2730
    %v2787 = vmul.f32 %v2786, 0.6931472
    %v2788 = vlog2.pop %v2731
    %v2789 = vmul.f32 %v2788, 0.6931472
    %v2790 = vlog2.pop %v2732
    %v2791 = vmul.f32 %v2790, 0.6931472
    %v2792 = vlog2.pop %v2733
    %v2793 = vmul.f32 %v2792, 0.6931472
    %v2794 = vlog2.pop %v2734
    %v2795 = vmul.f32 %v2794, 0.6931472
    %v2796 = vlog2.pop %v2735
    %v2797 = vmul.f32 %v2796, 0.6931472
    %v2798 = vlog2.pop %v2736
    %v2799 = vmul.f32 %v2798, 0.6931472
    %v2800 = vlog2.pop %v2737
    %v2801 = vmul.f32 %v2800, 0.6931472
    %v2802 = vadd.f32 %v2739, 10.0
    %v2803 = vadd.f32 %v2741, 10.0
    %v2804 = vadd.f32 %v2743, 10.0
    %v2805 = vadd.f32 %v2745, 10.0
    %v2806 = vadd.f32 %v2747, 10.0
    %v2807 = vadd.f32 %v2749, 10.0
    %v2808 = vadd.f32 %v2751, 10.0
    %v2809 = vadd.f32 %v2753, 10.0
    %v2810 = vadd.f32 %v2755, 10.0
    %v2811 = vadd.f32 %v2757, 10.0
    %v2812 = vadd.f32 %v2759, 10.0
    %v2813 = vadd.f32 %v2761, 10.0
    %v2814 = vadd.f32 %v2763, 10.0
    %v2815 = vadd.f32 %v2765, 10.0
    %v2816 = vadd.f32 %v2767, 10.0
    %v2817 = vadd.f32 %v2769, 10.0
    %v2818 = vadd.f32 %v2771, 10.0
    %v2819 = vadd.f32 %v2773, 10.0
    %v2820 = vadd.f32 %v2775, 10.0
    %v2821 = vadd.f32 %v2777, 10.0
    %v2822 = vadd.f32 %v2779, 10.0
    %v2823 = vadd.f32 %v2781, 10.0
    %v2824 = vadd.f32 %v2783, 10.0
    %v2825 = vadd.f32 %v2785, 10.0
    %v2826 = vadd.f32 %v2787, 10.0
    %v2827 = vadd.f32 %v2789, 10.0
    %v2828 = vadd.f32 %v2791, 10.0
    %v2829 = vadd.f32 %v2793, 10.0
    %v2830 = vadd.f32 %v2795, 10.0
    %v2831 = vadd.f32 %v2797, 10.0
    %v2832 = vadd.f32 %v2799, 10.0
    %v2833 = vadd.f32 %v2801, 10.0
    %v2834 = vld [vmem:[#allocation4] sm:$0x1]
    %v2835 = vsub.f32 %v2802, %v2450
    %v2836 = vsub.f32 %v2803, %v2451
    %v2837 = vsub.f32 %v2804, %v2452
    %v2838 = vsub.f32 %v2805, %v2453
    %v2839 = vsub.f32 %v2806, %v2454
    %v2840 = vsub.f32 %v2807, %v2455
    %v2841 = vsub.f32 %v2808, %v2456
    %v2842 = vsub.f32 %v2809, %v2457
    %v2843 = vsub.f32 %v2810, %v2458
    %v2844 = vsub.f32 %v2811, %v2459
    %v2845 = vsub.f32 %v2812, %v2460
    %v2846 = vsub.f32 %v2813, %v2461
    %v2847 = vsub.f32 %v2814, %v2462
    %v2848 = vsub.f32 %v2815, %v2463
    %v2849 = vsub.f32 %v2816, %v2464
    %v2850 = vsub.f32 %v2817, %v2465
    %v2851 = vsub.f32 %v2818, %v2466
    %v2852 = vsub.f32 %v2819, %v2467
    %v2853 = vsub.f32 %v2820, %v2468
    %v2854 = vsub.f32 %v2821, %v2469
    %v2855 = vsub.f32 %v2822, %v2470
    %v2856 = vsub.f32 %v2823, %v2471
    %v2857 = vsub.f32 %v2824, %v2472
    %v2858 = vsub.f32 %v2825, %v2473
    %v2859 = vsub.f32 %v2826, %v2474
    %v2860 = vsub.f32 %v2827, %v2475
    %v2861 = vsub.f32 %v2828, %v2476
    %v2862 = vsub.f32 %v2829, %v2477
    %v2863 = vsub.f32 %v2830, %v2478
    %v2864 = vsub.f32 %v2831, %v2479
    %v2865 = vsub.f32 %v2832, %v2480
    %v2866 = vsub.f32 %v2833, %v2481
    %v2867 = vsel %vm1385, %v2835, 0.0
    %v2868 = vsel %vm1386, %v2836, 0.0
    %v2869 = vsel %vm1387, %v2837, 0.0
    %v2870 = vsel %vm1388, %v2838, 0.0
    %v2871 = vsel %vm1389, %v2839, 0.0
    %v2872 = vsel %vm1390, %v2840, 0.0
    %v2873 = vsel %vm1391, %v2841, 0.0
    %v2874 = vsel %vm1392, %v2842, 0.0
    %v2875 = vsel %vm1393, %v2843, 0.0
    %v2876 = vsel %vm1394, %v2844, 0.0
    %v2877 = vsel %vm1395, %v2845, 0.0
    %v2878 = vsel %vm1396, %v2846, 0.0
    %v2879 = vsel %vm1397, %v2847, 0.0
    %v2880 = vsel %vm1398, %v2848, 0.0
    %v2881 = vsel %vm1399, %v2849, 0.0
    %v2882 = vsel %vm1400, %v2850, 0.0
    %v2883 = vsel %vm1401, %v2851, 0.0
    %v2884 = vsel %vm1402, %v2852, 0.0
    %v2885 = vsel %vm1403, %v2853, 0.0
    %v2886 = vsel %vm1404, %v2854, 0.0
    %v2887 = vsel %vm1405, %v2855, 0.0
    %v2888 = vsel %vm1406, %v2856, 0.0
    %v2889 = vsel %vm1407, %v2857, 0.0
    %v2890 = vsel %vm1408, %v2858, 0.0
    %v2891 = vsel %vm1409, %v2859, 0.0
    %v2892 = vsel %vm1410, %v2860, 0.0
    %v2893 = vsel %vm1411, %v2861, 0.0
    %v2894 = vsel %vm1412, %v2862, 0.0
    %v2895 = vsel %vm1413, %v2863, 0.0
    %v2896 = vsel %vm1414, %v2864, 0.0
    %v2897 = vsel %vm1415, %v2865, 0.0
    %v2898 = vsel %vm1416, %v2866, 0.0
    %vm2899 = vcmask 7168
    %v2900 = vsel %vm2899, %v2867, 0.0
    %v2901 = vsel %vm2899, %v2868, 0.0
    %v2902 = vadd.f32 %v2900, %v2901
    %v2903 = vsel %vm2899, %v2869, 0.0
    %v2904 = vadd.f32 %v2902, %v2903
    %v2905 = vsel %vm2899, %v2870, 0.0
    %v2906 = vadd.f32 %v2904, %v2905
    %v2907 = vsel %vm2899, %v2871, 0.0
    %v2908 = vadd.f32 %v2906, %v2907
    %v2909 = vsel %vm2899, %v2872, 0.0
    %v2910 = vadd.f32 %v2908, %v2909
    %v2911 = vsel %vm2899, %v2873, 0.0
    %v2912 = vadd.f32 %v2910, %v2911
    %v2913 = vsel %vm2899, %v2874, 0.0
    %v2914 = vadd.f32 %v2912, %v2913
    %v2915 = vsel %vm2899, %v2875, 0.0
    %v2916 = vadd.f32 %v2914, %v2915
    %v2917 = vsel %vm2899, %v2876, 0.0
    %v2918 = vadd.f32 %v2916, %v2917
    %v2919 = vsel %vm2899, %v2877, 0.0
    %v2920 = vadd.f32 %v2918, %v2919
    %v2921 = vsel %vm2899, %v2878, 0.0
    %v2922 = vadd.f32 %v2920, %v2921
    %v2923 = vsel %vm2899, %v2879, 0.0
    %v2924 = vadd.f32 %v2922, %v2923
    %v2925 = vsel %vm2899, %v2880, 0.0
    %v2926 = vadd.f32 %v2924, %v2925
    %v2927 = vsel %vm2899, %v2881, 0.0
    %v2928 = vadd.f32 %v2926, %v2927
    %v2929 = vsel %vm2899, %v2882, 0.0
    %v2930 = vadd.f32 %v2928, %v2929
    %v2931 = vsel %vm2899, %v2883, 0.0
    %v2932 = vadd.f32 %v2930, %v2931
    %v2933 = vsel %vm2899, %v2884, 0.0
    %v2934 = vadd.f32 %v2932, %v2933
    %v2935 = vsel %vm2899, %v2885, 0.0
    %v2936 = vadd.f32 %v2934, %v2935
    %v2937 = vsel %vm2899, %v2886, 0.0
    %v2938 = vadd.f32 %v2936, %v2937
    %v2939 = vsel %vm2899, %v2887, 0.0
    %v2940 = vadd.f32 %v2938, %v2939
    %v2941 = vsel %vm2899, %v2888, 0.0
    %v2942 = vadd.f32 %v2940, %v2941
    %v2943 = vsel %vm2899, %v2889, 0.0
    %v2944 = vadd.f32 %v2942, %v2943
    %v2945 = vsel %vm2899, %v2890, 0.0
    %v2946 = vadd.f32 %v2944, %v2945
    %v2947 = vsel %vm2899, %v2891, 0.0
    %v2948 = vadd.f32 %v2946, %v2947
    %v2949 = vsel %vm2899, %v2892, 0.0
    %v2950 = vadd.f32 %v2948, %v2949
    %v2951 = vsel %vm2899, %v2893, 0.0
    %v2952 = vadd.f32 %v2950, %v2951
    %v2953 = vsel %vm2899, %v2894, 0.0
    %v2954 = vadd.f32 %v2952, %v2953
    %v2955 = vsel %vm2899, %v2895, 0.0
    %v2956 = vadd.f32 %v2954, %v2955
    %v2957 = vsel %vm2899, %v2896, 0.0
    %v2958 = vadd.f32 %v2956, %v2957
    %v2959 = vsel %vm2899, %v2897, 0.0
    %v2960 = vadd.f32 %v2958, %v2959
    %v2961 = vsel %vm2899, %v2898, 0.0
    %v2962 = vadd.f32 %v2960, %v2961
    %2963 = vadd.xlane.f32.xlu0 %v2962
    %v2964 = vpop.xlane.xlu0 %2963
    %v2965 = vrot.slane %v2964, 4
    %v2966 = vadd.f32 %v2964, %v2965
    %v2967 = vrot.slane %v2966, 2
    %v2968 = vadd.f32 %v2966, %v2967
    %v2969 = vrot.slane %v2968, 1
    %v2970 = vadd.f32 %v2968, %v2969
    %s2971 = vtos %v2970
    %v2972 = vstv %s2971
    %v2973 = vadd.f32 %v2834, %v2972
    %vm2974 = vcmask 0
    %2975 = vst.msk [vmem:[#allocation4] sm:$0x1] %vm2974, %v2973
    %v2976 = vld [vmem:[#allocation5] sm:$0x1]
    %v2977 = vsel %vm1385, %v2450, 0.0
    %v2978 = vsel %vm1386, %v2451, 0.0
    %v2979 = vsel %vm1387, %v2452, 0.0
    %v2980 = vsel %vm1388, %v2453, 0.0
    %v2981 = vsel %vm1389, %v2454, 0.0
    %v2982 = vsel %vm1390, %v2455, 0.0
    %v2983 = vsel %vm1391, %v2456, 0.0
    %v2984 = vsel %vm1392, %v2457, 0.0
    %v2985 = vsel %vm1393, %v2458, 0.0
    %v2986 = vsel %vm1394, %v2459, 0.0
    %v2987 = vsel %vm1395, %v2460, 0.0
    %v2988 = vsel %vm1396, %v2461, 0.0
    %v2989 = vsel %vm1397, %v2462, 0.0
    %v2990 = vsel %vm1398, %v2463, 0.0
    %v2991 = vsel %vm1399, %v2464, 0.0
    %v2992 = vsel %vm1400, %v2465, 0.0
    %v2993 = vsel %vm1401, %v2466, 0.0
    %v2994 = vsel %vm1402, %v2467, 0.0
    %v2995 = vsel %vm1403, %v2468, 0.0
    %v2996 = vsel %vm1404, %v2469, 0.0
    %v2997 = vsel %vm1405, %v2470, 0.0
    %v2998 = vsel %vm1406, %v2471, 0.0
    %v2999 = vsel %vm1407, %v2472, 0.0
    %v3000 = vsel %vm1408, %v2473, 0.0
    %v3001 = vsel %vm1409, %v2474, 0.0
    %v3002 = vsel %vm1410, %v2475, 0.0
    %v3003 = vsel %vm1411, %v2476, 0.0
    %v3004 = vsel %vm1412, %v2477, 0.0
    %v3005 = vsel %vm1413, %v2478, 0.0
    %v3006 = vsel %vm1414, %v2479, 0.0
    %v3007 = vsel %vm1415, %v2480, 0.0
    %v3008 = vsel %vm1416, %v2481, 0.0
    %v3009 = vsel %vm2899, %v2977, 0.0
    %v3010 = vsel %vm2899, %v2978, 0.0
    %v3011 = vadd.f32 %v3009, %v3010
    %v3012 = vsel %vm2899, %v2979, 0.0
    %v3013 = vadd.f32 %v3011, %v3012
    %v3014 = vsel %vm2899, %v2980, 0.0
    %v3015 = vadd.f32 %v3013, %v3014
    %v3016 = vsel %vm2899, %v2981, 0.0
    %v3017 = vadd.f32 %v3015, %v3016
    %v3018 = vsel %vm2899, %v2982, 0.0
    %v3019 = vadd.f32 %v3017, %v3018
    %v3020 = vsel %vm2899, %v2983, 0.0
    %v3021 = vadd.f32 %v3019, %v3020
    %v3022 = vsel %vm2899, %v2984, 0.0
    %v3023 = vadd.f32 %v3021, %v3022
    %v3024 = vsel %vm2899, %v2985, 0.0
    %v3025 = vadd.f32 %v3023, %v3024
    %v3026 = vsel %vm2899, %v2986, 0.0
    %v3027 = vadd.f32 %v3025, %v3026
    %v3028 = vsel %vm2899, %v2987, 0.0
    %v3029 = vadd.f32 %v3027, %v3028
    %v3030 = vsel %vm2899, %v2988, 0.0
    %v3031 = vadd.f32 %v3029, %v3030
    %v3032 = vsel %vm2899, %v2989, 0.0
    %v3033 = vadd.f32 %v3031, %v3032
    %v3034 = vsel %vm2899, %v2990, 0.0
    %v3035 = vadd.f32 %v3033, %v3034
    %v3036 = vsel %vm2899, %v2991, 0.0
    %v3037 = vadd.f32 %v3035, %v3036
    %v3038 = vsel %vm2899, %v2992, 0.0
    %v3039 = vadd.f32 %v3037, %v3038
    %v3040 = vsel %vm2899, %v2993, 0.0
    %v3041 = vadd.f32 %v3039, %v3040
    %v3042 = vsel %vm2899, %v2994, 0.0
    %v3043 = vadd.f32 %v3041, %v3042
    %v3044 = vsel %vm2899, %v2995, 0.0
    %v3045 = vadd.f32 %v3043, %v3044
    %v3046 = vsel %vm2899, %v2996, 0.0
    %v3047 = vadd.f32 %v3045, %v3046
    %v3048 = vsel %vm2899, %v2997, 0.0
    %v3049 = vadd.f32 %v3047, %v3048
    %v3050 = vsel %vm2899, %v2998, 0.0
    %v3051 = vadd.f32 %v3049, %v3050
    %v3052 = vsel %vm2899, %v2999, 0.0
    %v3053 = vadd.f32 %v3051, %v3052
    %v3054 = vsel %vm2899, %v3000, 0.0
    %v3055 = vadd.f32 %v3053, %v3054
    %v3056 = vsel %vm2899, %v3001, 0.0
    %v3057 = vadd.f32 %v3055, %v3056
    %v3058 = vsel %vm2899, %v3002, 0.0
    %v3059 = vadd.f32 %v3057, %v3058
    %v3060 = vsel %vm2899, %v3003, 0.0
    %v3061 = vadd.f32 %v3059, %v3060
    %v3062 = vsel %vm2899, %v3004, 0.0
    %v3063 = vadd.f32 %v3061, %v3062
    %v3064 = vsel %vm2899, %v3005, 0.0
    %v3065 = vadd.f32 %v3063, %v3064
    %v3066 = vsel %vm2899, %v3006, 0.0
    %v3067 = vadd.f32 %v3065, %v3066
    %v3068 = vsel %vm2899, %v3007, 0.0
    %v3069 = vadd.f32 %v3067, %v3068
    %v3070 = vsel %vm2899, %v3008, 0.0
    %v3071 = vadd.f32 %v3069, %v3070
    %3072 = vadd.xlane.f32.xlu0 %v3071
    %v3073 = vpop.xlane.xlu0 %3072
    %v3074 = vrot.slane %v3073, 4
    %v3075 = vadd.f32 %v3073, %v3074
    %v3076 = vrot.slane %v3075, 2
    %v3077 = vadd.f32 %v3075, %v3076
    %v3078 = vrot.slane %v3077, 1
    %v3079 = vadd.f32 %v3077, %v3078
    %s3080 = vtos %v3079
    %v3081 = vstv %s3080
    %v3082 = vadd.f32 %v2976, %v3081
    %3083 = vst.msk [vmem:[#allocation5] sm:$0x1] %vm2974, %v3082
    %v3084 = vmax.f32 %v1714, %v1715
    %3085 = vmax.xlane.f32.xlu0 %v3084
    %v3086 = vpop.xlane.xlu0 %3085
    %v3087 = vmax.f32 %v1716, %v1717
    %3088 = vmax.xlane.f32.xlu0 %v3087
    %v3089 = vpop.xlane.xlu0 %3088
    %v3090 = vmax.f32 %v1718, %v1719
    %3091 = vmax.xlane.f32.xlu0 %v3090
    %v3092 = vpop.xlane.xlu0 %3091
    %v3093 = vmax.f32 %v1720, %v1721
    %3094 = vmax.xlane.f32.xlu0 %v3093
    %v3095 = vpop.xlane.xlu0 %3094
    %v3096 = vmax.f32 %v1722, %v1723
    %3097 = vmax.xlane.f32.xlu0 %v3096
    %v3098 = vpop.xlane.xlu0 %3097
    %v3099 = vmax.f32 %v1724, %v1725
    %3100 = vmax.xlane.f32.xlu0 %v3099
    %v3101 = vpop.xlane.xlu0 %3100
    %v3102 = vmax.f32 %v1726, %v1727
    %3103 = vmax.xlane.f32.xlu0 %v3102
    %v3104 = vpop.xlane.xlu0 %3103
    %v3105 = vmax.f32 %v1728, %v1729
    %3106 = vmax.xlane.f32.xlu0 %v3105
    %v3107 = vpop.xlane.xlu0 %3106
    %v3108 = vmax.f32 %v1730, %v1731
    %3109 = vmax.xlane.f32.xlu0 %v3108
    %v3110 = vpop.xlane.xlu0 %3109
    %v3111 = vmax.f32 %v1732, %v1733
    %3112 = vmax.xlane.f32.xlu0 %v3111
    %v3113 = vpop.xlane.xlu0 %3112
    %v3114 = vmax.f32 %v1734, %v1735
    %3115 = vmax.xlane.f32.xlu0 %v3114
    %v3116 = vpop.xlane.xlu0 %3115
    %v3117 = vmax.f32 %v1736, %v1737
    %3118 = vmax.xlane.f32.xlu0 %v3117
    %v3119 = vpop.xlane.xlu0 %3118
    %v3120 = vmax.f32 %v1738, %v1739
    %3121 = vmax.xlane.f32.xlu0 %v3120
    %v3122 = vpop.xlane.xlu0 %3121
    %v3123 = vmax.f32 %v1740, %v1741
    %3124 = vmax.xlane.f32.xlu0 %v3123
    %v3125 = vpop.xlane.xlu0 %3124
    %v3126 = vmax.f32 %v1742, %v1743
    %3127 = vmax.xlane.f32.xlu0 %v3126
    %v3128 = vpop.xlane.xlu0 %3127
    %v3129 = vmax.f32 %v1744, %v1745
    %3130 = vmax.xlane.f32.xlu0 %v3129
    %v3131 = vpop.xlane.xlu0 %3130
    %v3132 = vmax.f32 %v1746, %v1747
    %3133 = vmax.xlane.f32.xlu0 %v3132
    %v3134 = vpop.xlane.xlu0 %3133
    %v3135 = vmax.f32 %v1748, %v1749
    %3136 = vmax.xlane.f32.xlu0 %v3135
    %v3137 = vpop.xlane.xlu0 %3136
    %v3138 = vmax.f32 %v1750, %v1751
    %3139 = vmax.xlane.f32.xlu0 %v3138
    %v3140 = vpop.xlane.xlu0 %3139
    %v3141 = vmax.f32 %v1752, %v1753
    %3142 = vmax.xlane.f32.xlu0 %v3141
    %v3143 = vpop.xlane.xlu0 %3142
    %v3144 = vmax.f32 %v1754, %v1755
    %3145 = vmax.xlane.f32.xlu0 %v3144
    %v3146 = vpop.xlane.xlu0 %3145
    %v3147 = vmax.f32 %v1756, %v1757
    %3148 = vmax.xlane.f32.xlu0 %v3147
    %v3149 = vpop.xlane.xlu0 %3148
    %v3150 = vmax.f32 %v1758, %v1759
    %3151 = vmax.xlane.f32.xlu0 %v3150
    %v3152 = vpop.xlane.xlu0 %3151
    %v3153 = vmax.f32 %v1760, %v1761
    %3154 = vmax.xlane.f32.xlu0 %v3153
    %v3155 = vpop.xlane.xlu0 %3154
    %v3156 = vmax.f32 %v1762, %v1763
    %3157 = vmax.xlane.f32.xlu0 %v3156
    %v3158 = vpop.xlane.xlu0 %3157
    %v3159 = vmax.f32 %v1764, %v1765
    %3160 = vmax.xlane.f32.xlu0 %v3159
    %v3161 = vpop.xlane.xlu0 %3160
    %v3162 = vmax.f32 %v1766, %v1767
    %3163 = vmax.xlane.f32.xlu0 %v3162
    %v3164 = vpop.xlane.xlu0 %3163
    %v3165 = vmax.f32 %v1768, %v1769
    %3166 = vmax.xlane.f32.xlu0 %v3165
    %v3167 = vpop.xlane.xlu0 %3166
    %v3168 = vmax.f32 %v1770, %v1771
    %3169 = vmax.xlane.f32.xlu0 %v3168
    %v3170 = vpop.xlane.xlu0 %3169
    %v3171 = vmax.f32 %v1772, %v1773
    %3172 = vmax.xlane.f32.xlu0 %v3171
    %v3173 = vpop.xlane.xlu0 %3172
    %v3174 = vmax.f32 %v1774, %v1775
    %3175 = vmax.xlane.f32.xlu0 %v3174
    %v3176 = vpop.xlane.xlu0 %3175
    %v3177 = vmax.f32 %v1776, %v1777
    %3178 = vmax.xlane.f32.xlu0 %v3177
    %v3179 = vpop.xlane.xlu0 %3178
    %vm3180 = vcmp.eq.f32.partialorder %v1714, %v3086
    %vm3181 = vcmp.eq.f32.partialorder %v1715, %v3086
    %vm3182 = vcmp.eq.f32.partialorder %v1716, %v3089
    %vm3183 = vcmp.eq.f32.partialorder %v1717, %v3089
    %vm3184 = vcmp.eq.f32.partialorder %v1718, %v3092
    %vm3185 = vcmp.eq.f32.partialorder %v1719, %v3092
    %vm3186 = vcmp.eq.f32.partialorder %v1720, %v3095
    %vm3187 = vcmp.eq.f32.partialorder %v1721, %v3095
    %vm3188 = vcmp.eq.f32.partialorder %v1722, %v3098
    %vm3189 = vcmp.eq.f32.partialorder %v1723, %v3098
    %vm3190 = vcmp.eq.f32.partialorder %v1724, %v3101
    %vm3191 = vcmp.eq.f32.partialorder %v1725, %v3101
    %vm3192 = vcmp.eq.f32.partialorder %v1726, %v3104
    %vm3193 = vcmp.eq.f32.partialorder %v1727, %v3104
    %vm3194 = vcmp.eq.f32.partialorder %v1728, %v3107
    %vm3195 = vcmp.eq.f32.partialorder %v1729, %v3107
    %vm3196 = vcmp.eq.f32.partialorder %v1730, %v3110
    %vm3197 = vcmp.eq.f32.partialorder %v1731, %v3110
    %vm3198 = vcmp.eq.f32.partialorder %v1732, %v3113
    %vm3199 = vcmp.eq.f32.partialorder %v1733, %v3113
    %vm3200 = vcmp.eq.f32.partialorder %v1734, %v3116
    %vm3201 = vcmp.eq.f32.partialorder %v1735, %v3116
    %vm3202 = vcmp.eq.f32.partialorder %v1736, %v3119
    %vm3203 = vcmp.eq.f32.partialorder %v1737, %v3119
    %vm3204 = vcmp.eq.f32.partialorder %v1738, %v3122
    %vm3205 = vcmp.eq.f32.partialorder %v1739, %v3122
    %vm3206 = vcmp.eq.f32.partialorder %v1740, %v3125
    %vm3207 = vcmp.eq.f32.partialorder %v1741, %v3125
    %vm3208 = vcmp.eq.f32.partialorder %v1742, %v3128
    %vm3209 = vcmp.eq.f32.partialorder %v1743, %v3128
    %vm3210 = vcmp.eq.f32.partialorder %v1744, %v3131
    %vm3211 = vcmp.eq.f32.partialorder %v1745, %v3131
    %vm3212 = vcmp.eq.f32.partialorder %v1746, %v3134
    %vm3213 = vcmp.eq.f32.partialorder %v1747, %v3134
    %vm3214 = vcmp.eq.f32.partialorder %v1748, %v3137
    %vm3215 = vcmp.eq.f32.partialorder %v1749, %v3137
    %vm3216 = vcmp.eq.f32.partialorder %v1750, %v3140
    %vm3217 = vcmp.eq.f32.partialorder %v1751, %v3140
    %vm3218 = vcmp.eq.f32.partialorder %v1752, %v3143
    %vm3219 = vcmp.eq.f32.partialorder %v1753, %v3143
    %vm3220 = vcmp.eq.f32.partialorder %v1754, %v3146
    %vm3221 = vcmp.eq.f32.partialorder %v1755, %v3146
    %vm3222 = vcmp.eq.f32.partialorder %v1756, %v3149
    %vm3223 = vcmp.eq.f32.partialorder %v1757, %v3149
    %vm3224 = vcmp.eq.f32.partialorder %v1758, %v3152
    %vm3225 = vcmp.eq.f32.partialorder %v1759, %v3152
    %vm3226 = vcmp.eq.f32.partialorder %v1760, %v3155
    %vm3227 = vcmp.eq.f32.partialorder %v1761, %v3155
    %vm3228 = vcmp.eq.f32.partialorder %v1762, %v3158
    %vm3229 = vcmp.eq.f32.partialorder %v1763, %v3158
    %vm3230 = vcmp.eq.f32.partialorder %v1764, %v3161
    %vm3231 = vcmp.eq.f32.partialorder %v1765, %v3161
    %vm3232 = vcmp.eq.f32.partialorder %v1766, %v3164
    %vm3233 = vcmp.eq.f32.partialorder %v1767, %v3164
    %vm3234 = vcmp.eq.f32.partialorder %v1768, %v3167
    %vm3235 = vcmp.eq.f32.partialorder %v1769, %v3167
    %vm3236 = vcmp.eq.f32.partialorder %v1770, %v3170
    %vm3237 = vcmp.eq.f32.partialorder %v1771, %v3170
    %vm3238 = vcmp.eq.f32.partialorder %v1772, %v3173
    %vm3239 = vcmp.eq.f32.partialorder %v1773, %v3173
    %vm3240 = vcmp.eq.f32.partialorder %v1774, %v3176
    %vm3241 = vcmp.eq.f32.partialorder %v1775, %v3176
    %vm3242 = vcmp.eq.f32.partialorder %v1776, %v3179
    %vm3243 = vcmp.eq.f32.partialorder %v1777, %v3179
    %v3244 = vsel %vm3180, %v1520, 256
    %v3245 = vsel %vm3181, %v1521, 256
    %v3246 = vsel %vm3182, %v1520, 256
    %v3247 = vsel %vm3183, %v1521, 256
    %v3248 = vsel %vm3184, %v1520, 256
    %v3249 = vsel %vm3185, %v1521, 256
    %v3250 = vsel %vm3186, %v1520, 256
    %v3251 = vsel %vm3187, %v1521, 256
    %v3252 = vsel %vm3188, %v1520, 256
    %v3253 = vsel %vm3189, %v1521, 256
    %v3254 = vsel %vm3190, %v1520, 256
    %v3255 = vsel %vm3191, %v1521, 256
    %v3256 = vsel %vm3192, %v1520, 256
    %v3257 = vsel %vm3193, %v1521, 256
    %v3258 = vsel %vm3194, %v1520, 256
    %v3259 = vsel %vm3195, %v1521, 256
    %v3260 = vsel %vm3196, %v1520, 256
    %v3261 = vsel %vm3197, %v1521, 256
    %v3262 = vsel %vm3198, %v1520, 256
    %v3263 = vsel %vm3199, %v1521, 256
    %v3264 = vsel %vm3200, %v1520, 256
    %v3265 = vsel %vm3201, %v1521, 256
    %v3266 = vsel %vm3202, %v1520, 256
    %v3267 = vsel %vm3203, %v1521, 256
    %v3268 = vsel %vm3204, %v1520, 256
    %v3269 = vsel %vm3205, %v1521, 256
    %v3270 = vsel %vm3206, %v1520, 256
    %v3271 = vsel %vm3207, %v1521, 256
    %v3272 = vsel %vm3208, %v1520, 256
    %v3273 = vsel %vm3209, %v1521, 256
    %v3274 = vsel %vm3210, %v1520, 256
    %v3275 = vsel %vm3211, %v1521, 256
    %v3276 = vsel %vm3212, %v1520, 256
    %v3277 = vsel %vm3213, %v1521, 256
    %v3278 = vsel %vm3214, %v1520, 256
    %v3279 = vsel %vm3215, %v1521, 256
    %v3280 = vsel %vm3216, %v1520, 256
    %v3281 = vsel %vm3217, %v1521, 256
    %v3282 = vsel %vm3218, %v1520, 256
    %v3283 = vsel %vm3219, %v1521, 256
    %v3284 = vsel %vm3220, %v1520, 256
    %v3285 = vsel %vm3221, %v1521, 256
    %v3286 = vsel %vm3222, %v1520, 256
    %v3287 = vsel %vm3223, %v1521, 256
    %v3288 = vsel %vm3224, %v1520, 256
    %v3289 = vsel %vm3225, %v1521, 256
    %v3290 = vsel %vm3226, %v1520, 256
    %v3291 = vsel %vm3227, %v1521, 256
    %v3292 = vsel %vm3228, %v1520, 256
    %v3293 = vsel %vm3229, %v1521, 256
    %v3294 = vsel %vm3230, %v1520, 256
    %v3295 = vsel %vm3231, %v1521, 256
    %v3296 = vsel %vm3232, %v1520, 256
    %v3297 = vsel %vm3233, %v1521, 256
    %v3298 = vsel %vm3234, %v1520, 256
    %v3299 = vsel %vm3235, %v1521, 256
    %v3300 = vsel %vm3236, %v1520, 256
    %v3301 = vsel %vm3237, %v1521, 256
    %v3302 = vsel %vm3238, %v1520, 256
    %v3303 = vsel %vm3239, %v1521, 256
    %v3304 = vsel %vm3240, %v1520, 256
    %v3305 = vsel %vm3241, %v1521, 256
    %v3306 = vsel %vm3242, %v1520, 256
    %v3307 = vsel %vm3243, %v1521, 256
    %vm3308 = vcmp.lt.s32.totalorder %v3244, %v3245
    %v3309 = vsel %vm3308, %v3244, %v3245
    %v3310 = vand.u32 %v3309, 65535
    %v3311 = vshra.s32 %v3309, 16
    %v3312 = vcvt.s32.f32 %v3310
    %v3313 = vcvt.s32.f32 %v3311
    %3314 = vmin.xlane.f32.xlu0 %v3313
    %v3315 = vpop.xlane.xlu0 %3314
    %vm3316 = vcmp.eq.f32.partialorder %v3313, %v3315
    %v3317 = vsel %vm3316, %v3312, inf
    %3318 = vmin.xlane.f32.xlu0 %v3317
    %v3319 = vpop.xlane.xlu0 %3318
    %v3320 = vcvt.f32.s32 %v3319
    %v3321 = vcvt.f32.s32 %v3315
    %v3322 = vshll.u32 %v3321, 16
    %v3323 = vadd.s32 %v3322, %v3320
    %vm3324 = vcmp.lt.s32.totalorder %v3246, %v3247
    %v3325 = vsel %vm3324, %v3246, %v3247
    %v3326 = vand.u32 %v3325, 65535
    %v3327 = vshra.s32 %v3325, 16
    %v3328 = vcvt.s32.f32 %v3326
    %v3329 = vcvt.s32.f32 %v3327
    %3330 = vmin.xlane.f32.xlu0 %v3329
    %v3331 = vpop.xlane.xlu0 %3330
    %vm3332 = vcmp.eq.f32.partialorder %v3329, %v3331
    %v3333 = vsel %vm3332, %v3328, inf
    %3334 = vmin.xlane.f32.xlu0 %v3333
    %v3335 = vpop.xlane.xlu0 %3334
    %v3336 = vcvt.f32.s32 %v3335
    %v3337 = vcvt.f32.s32 %v3331
    %v3338 = vshll.u32 %v3337, 16
    %v3339 = vadd.s32 %v3338, %v3336
    %vm3340 = vcmp.lt.s32.totalorder %v3248, %v3249
    %v3341 = vsel %vm3340, %v3248, %v3249
    %v3342 = vand.u32 %v3341, 65535
    %v3343 = vshra.s32 %v3341, 16
    %v3344 = vcvt.s32.f32 %v3342
    %v3345 = vcvt.s32.f32 %v3343
    %3346 = vmin.xlane.f32.xlu0 %v3345
    %v3347 = vpop.xlane.xlu0 %3346
    %vm3348 = vcmp.eq.f32.partialorder %v3345, %v3347
    %v3349 = vsel %vm3348, %v3344, inf
    %3350 = vmin.xlane.f32.xlu0 %v3349
    %v3351 = vpop.xlane.xlu0 %3350
    %v3352 = vcvt.f32.s32 %v3351
    %v3353 = vcvt.f32.s32 %v3347
    %v3354 = vshll.u32 %v3353, 16
    %v3355 = vadd.s32 %v3354, %v3352
    %vm3356 = vcmp.lt.s32.totalorder %v3250, %v3251
    %v3357 = vsel %vm3356, %v3250, %v3251
    %v3358 = vand.u32 %v3357, 65535
    %v3359 = vshra.s32 %v3357, 16
    %v3360 = vcvt.s32.f32 %v3358
    %v3361 = vcvt.s32.f32 %v3359
    %3362 = vmin.xlane.f32.xlu0 %v3361
    %v3363 = vpop.xlane.xlu0 %3362
    %vm3364 = vcmp.eq.f32.partialorder %v3361, %v3363
    %v3365 = vsel %vm3364, %v3360, inf
    %3366 = vmin.xlane.f32.xlu0 %v3365
    %v3367 = vpop.xlane.xlu0 %3366
    %v3368 = vcvt.f32.s32 %v3367
    %v3369 = vcvt.f32.s32 %v3363
    %v3370 = vshll.u32 %v3369, 16
    %v3371 = vadd.s32 %v3370, %v3368
    %vm3372 = vcmp.lt.s32.totalorder %v3252, %v3253
    %v3373 = vsel %vm3372, %v3252, %v3253
    %v3374 = vand.u32 %v3373, 65535
    %v3375 = vshra.s32 %v3373, 16
    %v3376 = vcvt.s32.f32 %v3374
    %v3377 = vcvt.s32.f32 %v3375
    %3378 = vmin.xlane.f32.xlu0 %v3377
    %v3379 = vpop.xlane.xlu0 %3378
    %vm3380 = vcmp.eq.f32.partialorder %v3377, %v3379
    %v3381 = vsel %vm3380, %v3376, inf
    %3382 = vmin.xlane.f32.xlu0 %v3381
    %v3383 = vpop.xlane.xlu0 %3382
    %v3384 = vcvt.f32.s32 %v3383
    %v3385 = vcvt.f32.s32 %v3379
    %v3386 = vshll.u32 %v3385, 16
    %v3387 = vadd.s32 %v3386, %v3384
    %vm3388 = vcmp.lt.s32.totalorder %v3254, %v3255
    %v3389 = vsel %vm3388, %v3254, %v3255
    %v3390 = vand.u32 %v3389, 65535
    %v3391 = vshra.s32 %v3389, 16
    %v3392 = vcvt.s32.f32 %v3390
    %v3393 = vcvt.s32.f32 %v3391
    %3394 = vmin.xlane.f32.xlu0 %v3393
    %v3395 = vpop.xlane.xlu0 %3394
    %vm3396 = vcmp.eq.f32.partialorder %v3393, %v3395
    %v3397 = vsel %vm3396, %v3392, inf
    %3398 = vmin.xlane.f32.xlu0 %v3397
    %v3399 = vpop.xlane.xlu0 %3398
    %v3400 = vcvt.f32.s32 %v3399
    %v3401 = vcvt.f32.s32 %v3395
    %v3402 = vshll.u32 %v3401, 16
    %v3403 = vadd.s32 %v3402, %v3400
    %vm3404 = vcmp.lt.s32.totalorder %v3256, %v3257
    %v3405 = vsel %vm3404, %v3256, %v3257
    %v3406 = vand.u32 %v3405, 65535
    %v3407 = vshra.s32 %v3405, 16
    %v3408 = vcvt.s32.f32 %v3406
    %v3409 = vcvt.s32.f32 %v3407
    %3410 = vmin.xlane.f32.xlu0 %v3409
    %v3411 = vpop.xlane.xlu0 %3410
    %vm3412 = vcmp.eq.f32.partialorder %v3409, %v3411
    %v3413 = vsel %vm3412, %v3408, inf
    %3414 = vmin.xlane.f32.xlu0 %v3413
    %v3415 = vpop.xlane.xlu0 %3414
    %v3416 = vcvt.f32.s32 %v3415
    %v3417 = vcvt.f32.s32 %v3411
    %v3418 = vshll.u32 %v3417, 16
    %v3419 = vadd.s32 %v3418, %v3416
    %vm3420 = vcmp.lt.s32.totalorder %v3258, %v3259
    %v3421 = vsel %vm3420, %v3258, %v3259
    %v3422 = vand.u32 %v3421, 65535
    %v3423 = vshra.s32 %v3421, 16
    %v3424 = vcvt.s32.f32 %v3422
    %v3425 = vcvt.s32.f32 %v3423
    %3426 = vmin.xlane.f32.xlu0 %v3425
    %v3427 = vpop.xlane.xlu0 %3426
    %vm3428 = vcmp.eq.f32.partialorder %v3425, %v3427
    %v3429 = vsel %vm3428, %v3424, inf
    %3430 = vmin.xlane.f32.xlu0 %v3429
    %v3431 = vpop.xlane.xlu0 %3430
    %v3432 = vcvt.f32.s32 %v3431
    %v3433 = vcvt.f32.s32 %v3427
    %v3434 = vshll.u32 %v3433, 16
    %v3435 = vadd.s32 %v3434, %v3432
    %vm3436 = vcmp.lt.s32.totalorder %v3260, %v3261
    %v3437 = vsel %vm3436, %v3260, %v3261
    %v3438 = vand.u32 %v3437, 65535
    %v3439 = vshra.s32 %v3437, 16
    %v3440 = vcvt.s32.f32 %v3438
    %v3441 = vcvt.s32.f32 %v3439
    %3442 = vmin.xlane.f32.xlu0 %v3441
    %v3443 = vpop.xlane.xlu0 %3442
    %vm3444 = vcmp.eq.f32.partialorder %v3441, %v3443
    %v3445 = vsel %vm3444, %v3440, inf
    %3446 = vmin.xlane.f32.xlu0 %v3445
    %v3447 = vpop.xlane.xlu0 %3446
    %v3448 = vcvt.f32.s32 %v3447
    %v3449 = vcvt.f32.s32 %v3443
    %v3450 = vshll.u32 %v3449, 16
    %v3451 = vadd.s32 %v3450, %v3448
    %vm3452 = vcmp.lt.s32.totalorder %v3262, %v3263
    %v3453 = vsel %vm3452, %v3262, %v3263
    %v3454 = vand.u32 %v3453, 65535
    %v3455 = vshra.s32 %v3453, 16
    %v3456 = vcvt.s32.f32 %v3454
    %v3457 = vcvt.s32.f32 %v3455
    %3458 = vmin.xlane.f32.xlu0 %v3457
    %v3459 = vpop.xlane.xlu0 %3458
    %vm3460 = vcmp.eq.f32.partialorder %v3457, %v3459
    %v3461 = vsel %vm3460, %v3456, inf
    %3462 = vmin.xlane.f32.xlu0 %v3461
    %v3463 = vpop.xlane.xlu0 %3462
    %v3464 = vcvt.f32.s32 %v3463
    %v3465 = vcvt.f32.s32 %v3459
    %v3466 = vshll.u32 %v3465, 16
    %v3467 = vadd.s32 %v3466, %v3464
    %vm3468 = vcmp.lt.s32.totalorder %v3264, %v3265
    %v3469 = vsel %vm3468, %v3264, %v3265
    %v3470 = vand.u32 %v3469, 65535
    %v3471 = vshra.s32 %v3469, 16
    %v3472 = vcvt.s32.f32 %v3470
    %v3473 = vcvt.s32.f32 %v3471
    %3474 = vmin.xlane.f32.xlu0 %v3473
    %v3475 = vpop.xlane.xlu0 %3474
    %vm3476 = vcmp.eq.f32.partialorder %v3473, %v3475
    %v3477 = vsel %vm3476, %v3472, inf
    %3478 = vmin.xlane.f32.xlu0 %v3477
    %v3479 = vpop.xlane.xlu0 %3478
    %v3480 = vcvt.f32.s32 %v3479
    %v3481 = vcvt.f32.s32 %v3475
    %v3482 = vshll.u32 %v3481, 16
    %v3483 = vadd.s32 %v3482, %v3480
    %vm3484 = vcmp.lt.s32.totalorder %v3266, %v3267
    %v3485 = vsel %vm3484, %v3266, %v3267
    %v3486 = vand.u32 %v3485, 65535
    %v3487 = vshra.s32 %v3485, 16
    %v3488 = vcvt.s32.f32 %v3486
    %v3489 = vcvt.s32.f32 %v3487
    %3490 = vmin.xlane.f32.xlu0 %v3489
    %v3491 = vpop.xlane.xlu0 %3490
    %vm3492 = vcmp.eq.f32.partialorder %v3489, %v3491
    %v3493 = vsel %vm3492, %v3488, inf
    %3494 = vmin.xlane.f32.xlu0 %v3493
    %v3495 = vpop.xlane.xlu0 %3494
    %v3496 = vcvt.f32.s32 %v3495
    %v3497 = vcvt.f32.s32 %v3491
    %v3498 = vshll.u32 %v3497, 16
    %v3499 = vadd.s32 %v3498, %v3496
    %vm3500 = vcmp.lt.s32.totalorder %v3268, %v3269
    %v3501 = vsel %vm3500, %v3268, %v3269
    %v3502 = vand.u32 %v3501, 65535
    %v3503 = vshra.s32 %v3501, 16
    %v3504 = vcvt.s32.f32 %v3502
    %v3505 = vcvt.s32.f32 %v3503
    %3506 = vmin.xlane.f32.xlu0 %v3505
    %v3507 = vpop.xlane.xlu0 %3506
    %vm3508 = vcmp.eq.f32.partialorder %v3505, %v3507
    %v3509 = vsel %vm3508, %v3504, inf
    %3510 = vmin.xlane.f32.xlu0 %v3509
    %v3511 = vpop.xlane.xlu0 %3510
    %v3512 = vcvt.f32.s32 %v3511
    %v3513 = vcvt.f32.s32 %v3507
    %v3514 = vshll.u32 %v3513, 16
    %v3515 = vadd.s32 %v3514, %v3512
    %vm3516 = vcmp.lt.s32.totalorder %v3270, %v3271
    %v3517 = vsel %vm3516, %v3270, %v3271
    %v3518 = vand.u32 %v3517, 65535
    %v3519 = vshra.s32 %v3517, 16
    %v3520 = vcvt.s32.f32 %v3518
    %v3521 = vcvt.s32.f32 %v3519
    %3522 = vmin.xlane.f32.xlu0 %v3521
    %v3523 = vpop.xlane.xlu0 %3522
    %vm3524 = vcmp.eq.f32.partialorder %v3521, %v3523
    %v3525 = vsel %vm3524, %v3520, inf
    %3526 = vmin.xlane.f32.xlu0 %v3525
    %v3527 = vpop.xlane.xlu0 %3526
    %v3528 = vcvt.f32.s32 %v3527
    %v3529 = vcvt.f32.s32 %v3523
    %v3530 = vshll.u32 %v3529, 16
    %v3531 = vadd.s32 %v3530, %v3528
    %vm3532 = vcmp.lt.s32.totalorder %v3272, %v3273
    %v3533 = vsel %vm3532, %v3272, %v3273
    %v3534 = vand.u32 %v3533, 65535
    %v3535 = vshra.s32 %v3533, 16
    %v3536 = vcvt.s32.f32 %v3534
    %v3537 = vcvt.s32.f32 %v3535
    %3538 = vmin.xlane.f32.xlu0 %v3537
    %v3539 = vpop.xlane.xlu0 %3538
    %vm3540 = vcmp.eq.f32.partialorder %v3537, %v3539
    %v3541 = vsel %vm3540, %v3536, inf
    %3542 = vmin.xlane.f32.xlu0 %v3541
    %v3543 = vpop.xlane.xlu0 %3542
    %v3544 = vcvt.f32.s32 %v3543
    %v3545 = vcvt.f32.s32 %v3539
    %v3546 = vshll.u32 %v3545, 16
    %v3547 = vadd.s32 %v3546, %v3544
    %vm3548 = vcmp.lt.s32.totalorder %v3274, %v3275
    %v3549 = vsel %vm3548, %v3274, %v3275
    %v3550 = vand.u32 %v3549, 65535
    %v3551 = vshra.s32 %v3549, 16
    %v3552 = vcvt.s32.f32 %v3550
    %v3553 = vcvt.s32.f32 %v3551
    %3554 = vmin.xlane.f32.xlu0 %v3553
    %v3555 = vpop.xlane.xlu0 %3554
    %vm3556 = vcmp.eq.f32.partialorder %v3553, %v3555
    %v3557 = vsel %vm3556, %v3552, inf
    %3558 = vmin.xlane.f32.xlu0 %v3557
    %v3559 = vpop.xlane.xlu0 %3558
    %v3560 = vcvt.f32.s32 %v3559
    %v3561 = vcvt.f32.s32 %v3555
    %v3562 = vshll.u32 %v3561, 16
    %v3563 = vadd.s32 %v3562, %v3560
    %vm3564 = vcmp.lt.s32.totalorder %v3276, %v3277
    %v3565 = vsel %vm3564, %v3276, %v3277
    %v3566 = vand.u32 %v3565, 65535
    %v3567 = vshra.s32 %v3565, 16
    %v3568 = vcvt.s32.f32 %v3566
    %v3569 = vcvt.s32.f32 %v3567
    %3570 = vmin.xlane.f32.xlu0 %v3569
    %v3571 = vpop.xlane.xlu0 %3570
    %vm3572 = vcmp.eq.f32.partialorder %v3569, %v3571
    %v3573 = vsel %vm3572, %v3568, inf
    %3574 = vmin.xlane.f32.xlu0 %v3573
    %v3575 = vpop.xlane.xlu0 %3574
    %v3576 = vcvt.f32.s32 %v3575
    %v3577 = vcvt.f32.s32 %v3571
    %v3578 = vshll.u32 %v3577, 16
    %v3579 = vadd.s32 %v3578, %v3576
    %vm3580 = vcmp.lt.s32.totalorder %v3278, %v3279
    %v3581 = vsel %vm3580, %v3278, %v3279
    %v3582 = vand.u32 %v3581, 65535
    %v3583 = vshra.s32 %v3581, 16
    %v3584 = vcvt.s32.f32 %v3582
    %v3585 = vcvt.s32.f32 %v3583
    %3586 = vmin.xlane.f32.xlu0 %v3585
    %v3587 = vpop.xlane.xlu0 %3586
    %vm3588 = vcmp.eq.f32.partialorder %v3585, %v3587
    %v3589 = vsel %vm3588, %v3584, inf
    %3590 = vmin.xlane.f32.xlu0 %v3589
    %v3591 = vpop.xlane.xlu0 %3590
    %v3592 = vcvt.f32.s32 %v3591
    %v3593 = vcvt.f32.s32 %v3587
    %v3594 = vshll.u32 %v3593, 16
    %v3595 = vadd.s32 %v3594, %v3592
    %vm3596 = vcmp.lt.s32.totalorder %v3280, %v3281
    %v3597 = vsel %vm3596, %v3280, %v3281
    %v3598 = vand.u32 %v3597, 65535
    %v3599 = vshra.s32 %v3597, 16
    %v3600 = vcvt.s32.f32 %v3598
    %v3601 = vcvt.s32.f32 %v3599
    %3602 = vmin.xlane.f32.xlu0 %v3601
    %v3603 = vpop.xlane.xlu0 %3602
    %vm3604 = vcmp.eq.f32.partialorder %v3601, %v3603
    %v3605 = vsel %vm3604, %v3600, inf
    %3606 = vmin.xlane.f32.xlu0 %v3605
    %v3607 = vpop.xlane.xlu0 %3606
    %v3608 = vcvt.f32.s32 %v3607
    %v3609 = vcvt.f32.s32 %v3603
    %v3610 = vshll.u32 %v3609, 16
    %v3611 = vadd.s32 %v3610, %v3608
    %vm3612 = vcmp.lt.s32.totalorder %v3282, %v3283
    %v3613 = vsel %vm3612, %v3282, %v3283
    %v3614 = vand.u32 %v3613, 65535
    %v3615 = vshra.s32 %v3613, 16
    %v3616 = vcvt.s32.f32 %v3614
    %v3617 = vcvt.s32.f32 %v3615
    %3618 = vmin.xlane.f32.xlu0 %v3617
    %v3619 = vpop.xlane.xlu0 %3618
    %vm3620 = vcmp.eq.f32.partialorder %v3617, %v3619
    %v3621 = vsel %vm3620, %v3616, inf
    %3622 = vmin.xlane.f32.xlu0 %v3621
    %v3623 = vpop.xlane.xlu0 %3622
    %v3624 = vcvt.f32.s32 %v3623
    %v3625 = vcvt.f32.s32 %v3619
    %v3626 = vshll.u32 %v3625, 16
    %v3627 = vadd.s32 %v3626, %v3624
    %vm3628 = vcmp.lt.s32.totalorder %v3284, %v3285
    %v3629 = vsel %vm3628, %v3284, %v3285
    %v3630 = vand.u32 %v3629, 65535
    %v3631 = vshra.s32 %v3629, 16
    %v3632 = vcvt.s32.f32 %v3630
    %v3633 = vcvt.s32.f32 %v3631
    %3634 = vmin.xlane.f32.xlu0 %v3633
    %v3635 = vpop.xlane.xlu0 %3634
    %vm3636 = vcmp.eq.f32.partialorder %v3633, %v3635
    %v3637 = vsel %vm3636, %v3632, inf
    %3638 = vmin.xlane.f32.xlu0 %v3637
    %v3639 = vpop.xlane.xlu0 %3638
    %v3640 = vcvt.f32.s32 %v3639
    %v3641 = vcvt.f32.s32 %v3635
    %v3642 = vshll.u32 %v3641, 16
    %v3643 = vadd.s32 %v3642, %v3640
    %vm3644 = vcmp.lt.s32.totalorder %v3286, %v3287
    %v3645 = vsel %vm3644, %v3286, %v3287
    %v3646 = vand.u32 %v3645, 65535
    %v3647 = vshra.s32 %v3645, 16
    %v3648 = vcvt.s32.f32 %v3646
    %v3649 = vcvt.s32.f32 %v3647
    %3650 = vmin.xlane.f32.xlu0 %v3649
    %v3651 = vpop.xlane.xlu0 %3650
    %vm3652 = vcmp.eq.f32.partialorder %v3649, %v3651
    %v3653 = vsel %vm3652, %v3648, inf
    %3654 = vmin.xlane.f32.xlu0 %v3653
    %v3655 = vpop.xlane.xlu0 %3654
    %v3656 = vcvt.f32.s32 %v3655
    %v3657 = vcvt.f32.s32 %v3651
    %v3658 = vshll.u32 %v3657, 16
    %v3659 = vadd.s32 %v3658, %v3656
    %vm3660 = vcmp.lt.s32.totalorder %v3288, %v3289
    %v3661 = vsel %vm3660, %v3288, %v3289
    %v3662 = vand.u32 %v3661, 65535
    %v3663 = vshra.s32 %v3661, 16
    %v3664 = vcvt.s32.f32 %v3662
    %v3665 = vcvt.s32.f32 %v3663
    %3666 = vmin.xlane.f32.xlu0 %v3665
    %v3667 = vpop.xlane.xlu0 %3666
    %vm3668 = vcmp.eq.f32.partialorder %v3665, %v3667
    %v3669 = vsel %vm3668, %v3664, inf
    %3670 = vmin.xlane.f32.xlu0 %v3669
    %v3671 = vpop.xlane.xlu0 %3670
    %v3672 = vcvt.f32.s32 %v3671
    %v3673 = vcvt.f32.s32 %v3667
    %v3674 = vshll.u32 %v3673, 16
    %v3675 = vadd.s32 %v3674, %v3672
    %vm3676 = vcmp.lt.s32.totalorder %v3290, %v3291
    %v3677 = vsel %vm3676, %v3290, %v3291
    %v3678 = vand.u32 %v3677, 65535
    %v3679 = vshra.s32 %v3677, 16
    %v3680 = vcvt.s32.f32 %v3678
    %v3681 = vcvt.s32.f32 %v3679
    %3682 = vmin.xlane.f32.xlu0 %v3681
    %v3683 = vpop.xlane.xlu0 %3682
    %vm3684 = vcmp.eq.f32.partialorder %v3681, %v3683
    %v3685 = vsel %vm3684, %v3680, inf
    %3686 = vmin.xlane.f32.xlu0 %v3685
    %v3687 = vpop.xlane.xlu0 %3686
    %v3688 = vcvt.f32.s32 %v3687
    %v3689 = vcvt.f32.s32 %v3683
    %v3690 = vshll.u32 %v3689, 16
    %v3691 = vadd.s32 %v3690, %v3688
    %vm3692 = vcmp.lt.s32.totalorder %v3292, %v3293
    %v3693 = vsel %vm3692, %v3292, %v3293
    %v3694 = vand.u32 %v3693, 65535
    %v3695 = vshra.s32 %v3693, 16
    %v3696 = vcvt.s32.f32 %v3694
    %v3697 = vcvt.s32.f32 %v3695
    %3698 = vmin.xlane.f32.xlu0 %v3697
    %v3699 = vpop.xlane.xlu0 %3698
    %vm3700 = vcmp.eq.f32.partialorder %v3697, %v3699
    %v3701 = vsel %vm3700, %v3696, inf
    %3702 = vmin.xlane.f32.xlu0 %v3701
    %v3703 = vpop.xlane.xlu0 %3702
    %v3704 = vcvt.f32.s32 %v3703
    %v3705 = vcvt.f32.s32 %v3699
    %v3706 = vshll.u32 %v3705, 16
    %v3707 = vadd.s32 %v3706, %v3704
    %vm3708 = vcmp.lt.s32.totalorder %v3294, %v3295
    %v3709 = vsel %vm3708, %v3294, %v3295
    %v3710 = vand.u32 %v3709, 65535
    %v3711 = vshra.s32 %v3709, 16
    %v3712 = vcvt.s32.f32 %v3710
    %v3713 = vcvt.s32.f32 %v3711
    %3714 = vmin.xlane.f32.xlu0 %v3713
    %v3715 = vpop.xlane.xlu0 %3714
    %vm3716 = vcmp.eq.f32.partialorder %v3713, %v3715
    %v3717 = vsel %vm3716, %v3712, inf
    %3718 = vmin.xlane.f32.xlu0 %v3717
    %v3719 = vpop.xlane.xlu0 %3718
    %v3720 = vcvt.f32.s32 %v3719
    %v3721 = vcvt.f32.s32 %v3715
    %v3722 = vshll.u32 %v3721, 16
    %v3723 = vadd.s32 %v3722, %v3720
    %vm3724 = vcmp.lt.s32.totalorder %v3296, %v3297
    %v3725 = vsel %vm3724, %v3296, %v3297
    %v3726 = vand.u32 %v3725, 65535
    %v3727 = vshra.s32 %v3725, 16
    %v3728 = vcvt.s32.f32 %v3726
    %v3729 = vcvt.s32.f32 %v3727
    %3730 = vmin.xlane.f32.xlu0 %v3729
    %v3731 = vpop.xlane.xlu0 %3730
    %vm3732 = vcmp.eq.f32.partialorder %v3729, %v3731
    %v3733 = vsel %vm3732, %v3728, inf
    %3734 = vmin.xlane.f32.xlu0 %v3733
    %v3735 = vpop.xlane.xlu0 %3734
    %v3736 = vcvt.f32.s32 %v3735
    %v3737 = vcvt.f32.s32 %v3731
    %v3738 = vshll.u32 %v3737, 16
    %v3739 = vadd.s32 %v3738, %v3736
    %vm3740 = vcmp.lt.s32.totalorder %v3298, %v3299
    %v3741 = vsel %vm3740, %v3298, %v3299
    %v3742 = vand.u32 %v3741, 65535
    %v3743 = vshra.s32 %v3741, 16
    %v3744 = vcvt.s32.f32 %v3742
    %v3745 = vcvt.s32.f32 %v3743
    %3746 = vmin.xlane.f32.xlu0 %v3745
    %v3747 = vpop.xlane.xlu0 %3746
    %vm3748 = vcmp.eq.f32.partialorder %v3745, %v3747
    %v3749 = vsel %vm3748, %v3744, inf
    %3750 = vmin.xlane.f32.xlu0 %v3749
    %v3751 = vpop.xlane.xlu0 %3750
    %v3752 = vcvt.f32.s32 %v3751
    %v3753 = vcvt.f32.s32 %v3747
    %v3754 = vshll.u32 %v3753, 16
    %v3755 = vadd.s32 %v3754, %v3752
    %vm3756 = vcmp.lt.s32.totalorder %v3300, %v3301
    %v3757 = vsel %vm3756, %v3300, %v3301
    %v3758 = vand.u32 %v3757, 65535
    %v3759 = vshra.s32 %v3757, 16
    %v3760 = vcvt.s32.f32 %v3758
    %v3761 = vcvt.s32.f32 %v3759
    %3762 = vmin.xlane.f32.xlu0 %v3761
    %v3763 = vpop.xlane.xlu0 %3762
    %vm3764 = vcmp.eq.f32.partialorder %v3761, %v3763
    %v3765 = vsel %vm3764, %v3760, inf
    %3766 = vmin.xlane.f32.xlu0 %v3765
    %v3767 = vpop.xlane.xlu0 %3766
    %v3768 = vcvt.f32.s32 %v3767
    %v3769 = vcvt.f32.s32 %v3763
    %v3770 = vshll.u32 %v3769, 16
    %v3771 = vadd.s32 %v3770, %v3768
    %vm3772 = vcmp.lt.s32.totalorder %v3302, %v3303
    %v3773 = vsel %vm3772, %v3302, %v3303
    %v3774 = vand.u32 %v3773, 65535
    %v3775 = vshra.s32 %v3773, 16
    %v3776 = vcvt.s32.f32 %v3774
    %v3777 = vcvt.s32.f32 %v3775
    %3778 = vmin.xlane.f32.xlu0 %v3777
    %v3779 = vpop.xlane.xlu0 %3778
    %vm3780 = vcmp.eq.f32.partialorder %v3777, %v3779
    %v3781 = vsel %vm3780, %v3776, inf
    %3782 = vmin.xlane.f32.xlu0 %v3781
    %v3783 = vpop.xlane.xlu0 %3782
    %v3784 = vcvt.f32.s32 %v3783
    %v3785 = vcvt.f32.s32 %v3779
    %v3786 = vshll.u32 %v3785, 16
    %v3787 = vadd.s32 %v3786, %v3784
    %vm3788 = vcmp.lt.s32.totalorder %v3304, %v3305
    %v3789 = vsel %vm3788, %v3304, %v3305
    %v3790 = vand.u32 %v3789, 65535
    %v3791 = vshra.s32 %v3789, 16
    %v3792 = vcvt.s32.f32 %v3790
    %v3793 = vcvt.s32.f32 %v3791
    %3794 = vmin.xlane.f32.xlu0 %v3793
    %v3795 = vpop.xlane.xlu0 %3794
    %vm3796 = vcmp.eq.f32.partialorder %v3793, %v3795
    %v3797 = vsel %vm3796, %v3792, inf
    %3798 = vmin.xlane.f32.xlu0 %v3797
    %v3799 = vpop.xlane.xlu0 %3798
    %v3800 = vcvt.f32.s32 %v3799
    %v3801 = vcvt.f32.s32 %v3795
    %v3802 = vshll.u32 %v3801, 16
    %v3803 = vadd.s32 %v3802, %v3800
    %vm3804 = vcmp.lt.s32.totalorder %v3306, %v3307
    %v3805 = vsel %vm3804, %v3306, %v3307
    %v3806 = vand.u32 %v3805, 65535
    %v3807 = vshra.s32 %v3805, 16
    %v3808 = vcvt.s32.f32 %v3806
    %v3809 = vcvt.s32.f32 %v3807
    %3810 = vmin.xlane.f32.xlu0 %v3809
    %v3811 = vpop.xlane.xlu0 %3810
    %vm3812 = vcmp.eq.f32.partialorder %v3809, %v3811
    %v3813 = vsel %vm3812, %v3808, inf
    %3814 = vmin.xlane.f32.xlu0 %v3813
    %v3815 = vpop.xlane.xlu0 %3814
    %v3816 = vcvt.f32.s32 %v3815
    %v3817 = vcvt.f32.s32 %v3811
    %v3818 = vshll.u32 %v3817, 16
    %v3819 = vadd.s32 %v3818, %v3816
    %v3820 = vld [vmem:[#allocation6] sm:$0x1]
    %vm3821 = vcmp.eq.s32.totalorder %v3323, %v1353
    %vm3822 = vcmp.eq.s32.totalorder %v3339, %v1354
    %vm3823 = vcmp.eq.s32.totalorder %v3355, %v1355
    %vm3824 = vcmp.eq.s32.totalorder %v3371, %v1356
    %vm3825 = vcmp.eq.s32.totalorder %v3387, %v1357
    %vm3826 = vcmp.eq.s32.totalorder %v3403, %v1358
    %vm3827 = vcmp.eq.s32.totalorder %v3419, %v1359
    %vm3828 = vcmp.eq.s32.totalorder %v3435, %v1360
    %vm3829 = vcmp.eq.s32.totalorder %v3451, %v1361
    %vm3830 = vcmp.eq.s32.totalorder %v3467, %v1362
    %vm3831 = vcmp.eq.s32.totalorder %v3483, %v1363
    %vm3832 = vcmp.eq.s32.totalorder %v3499, %v1364
    %vm3833 = vcmp.eq.s32.totalorder %v3515, %v1365
    %vm3834 = vcmp.eq.s32.totalorder %v3531, %v1366
    %vm3835 = vcmp.eq.s32.totalorder %v3547, %v1367
    %vm3836 = vcmp.eq.s32.totalorder %v3563, %v1368
    %vm3837 = vcmp.eq.s32.totalorder %v3579, %v1369
    %vm3838 = vcmp.eq.s32.totalorder %v3595, %v1370
    %vm3839 = vcmp.eq.s32.totalorder %v3611, %v1371
    %vm3840 = vcmp.eq.s32.totalorder %v3627, %v1372
    %vm3841 = vcmp.eq.s32.totalorder %v3643, %v1373
    %vm3842 = vcmp.eq.s32.totalorder %v3659, %v1374
    %vm3843 = vcmp.eq.s32.totalorder %v3675, %v1375
    %vm3844 = vcmp.eq.s32.totalorder %v3691, %v1376
    %vm3845 = vcmp.eq.s32.totalorder %v3707, %v1377
    %vm3846 = vcmp.eq.s32.totalorder %v3723, %v1378
    %vm3847 = vcmp.eq.s32.totalorder %v3739, %v1379
    %vm3848 = vcmp.eq.s32.totalorder %v3755, %v1380
    %vm3849 = vcmp.eq.s32.totalorder %v3771, %v1381
    %vm3850 = vcmp.eq.s32.totalorder %v3787, %v1382
    %vm3851 = vcmp.eq.s32.totalorder %v3803, %v1383
    %vm3852 = vcmp.eq.s32.totalorder %v3819, %v1384
    %vm3853 = vmand %vm3821, %vm1385
    %vm3854 = vmand %vm3822, %vm1386
    %vm3855 = vmand %vm3823, %vm1387
    %vm3856 = vmand %vm3824, %vm1388
    %vm3857 = vmand %vm3825, %vm1389
    %vm3858 = vmand %vm3826, %vm1390
    %vm3859 = vmand %vm3827, %vm1391
    %vm3860 = vmand %vm3828, %vm1392
    %vm3861 = vmand %vm3829, %vm1393
    %vm3862 = vmand %vm3830, %vm1394
    %vm3863 = vmand %vm3831, %vm1395
    %vm3864 = vmand %vm3832, %vm1396
    %vm3865 = vmand %vm3833, %vm1397
    %vm3866 = vmand %vm3834, %vm1398
    %vm3867 = vmand %vm3835, %vm1399
    %vm3868 = vmand %vm3836, %vm1400
    %vm3869 = vmand %vm3837, %vm1401
    %vm3870 = vmand %vm3838, %vm1402
    %vm3871 = vmand %vm3839, %vm1403
    %vm3872 = vmand %vm3840, %vm1404
    %vm3873 = vmand %vm3841, %vm1405
    %vm3874 = vmand %vm3842, %vm1406
    %vm3875 = vmand %vm3843, %vm1407
    %vm3876 = vmand %vm3844, %vm1408
    %vm3877 = vmand %vm3845, %vm1409
    %vm3878 = vmand %vm3846, %vm1410
    %vm3879 = vmand %vm3847, %vm1411
    %vm3880 = vmand %vm3848, %vm1412
    %vm3881 = vmand %vm3849, %vm1413
    %vm3882 = vmand %vm3850, %vm1414
    %vm3883 = vmand %vm3851, %vm1415
    %vm3884 = vmand %vm3852, %vm1416
    %v3885 = vsel %vm3853, 1.0, 0.0
    %v3886 = vsel %vm3854, 1.0, 0.0
    %v3887 = vsel %vm3855, 1.0, 0.0
    %v3888 = vsel %vm3856, 1.0, 0.0
    %v3889 = vsel %vm3857, 1.0, 0.0
    %v3890 = vsel %vm3858, 1.0, 0.0
    %v3891 = vsel %vm3859, 1.0, 0.0
    %v3892 = vsel %vm3860, 1.0, 0.0
    %v3893 = vsel %vm3861, 1.0, 0.0
    %v3894 = vsel %vm3862, 1.0, 0.0
    %v3895 = vsel %vm3863, 1.0, 0.0
    %v3896 = vsel %vm3864, 1.0, 0.0
    %v3897 = vsel %vm3865, 1.0, 0.0
    %v3898 = vsel %vm3866, 1.0, 0.0
    %v3899 = vsel %vm3867, 1.0, 0.0
    %v3900 = vsel %vm3868, 1.0, 0.0
    %v3901 = vsel %vm3869, 1.0, 0.0
    %v3902 = vsel %vm3870, 1.0, 0.0
    %v3903 = vsel %vm3871, 1.0, 0.0
    %v3904 = vsel %vm3872, 1.0, 0.0
    %v3905 = vsel %vm3873, 1.0, 0.0
    %v3906 = vsel %vm3874, 1.0, 0.0
    %v3907 = vsel %vm3875, 1.0, 0.0
    %v3908 = vsel %vm3876, 1.0, 0.0
    %v3909 = vsel %vm3877, 1.0, 0.0
    %v3910 = vsel %vm3878, 1.0, 0.0
    %v3911 = vsel %vm3879, 1.0, 0.0
    %v3912 = vsel %vm3880, 1.0, 0.0
    %v3913 = vsel %vm3881, 1.0, 0.0
    %v3914 = vsel %vm3882, 1.0, 0.0
    %v3915 = vsel %vm3883, 1.0, 0.0
    %v3916 = vsel %vm3884, 1.0, 0.0
    %v3917 = vsel %vm2899, %v3885, 0.0
    %v3918 = vsel %vm2899, %v3886, 0.0
    %v3919 = vadd.f32 %v3917, %v3918
    %v3920 = vsel %vm2899, %v3887, 0.0
    %v3921 = vadd.f32 %v3919, %v3920
    %v3922 = vsel %vm2899, %v3888, 0.0
    %v3923 = vadd.f32 %v3921, %v3922
    %v3924 = vsel %vm2899, %v3889, 0.0
    %v3925 = vadd.f32 %v3923, %v3924
    %v3926 = vsel %vm2899, %v3890, 0.0
    %v3927 = vadd.f32 %v3925, %v3926
    %v3928 = vsel %vm2899, %v3891, 0.0
    %v3929 = vadd.f32 %v3927, %v3928
    %v3930 = vsel %vm2899, %v3892, 0.0
    %v3931 = vadd.f32 %v3929, %v3930
    %v3932 = vsel %vm2899, %v3893, 0.0
    %v3933 = vadd.f32 %v3931, %v3932
    %v3934 = vsel %vm2899, %v3894, 0.0
    %v3935 = vadd.f32 %v3933, %v3934
    %v3936 = vsel %vm2899, %v3895, 0.0
    %v3937 = vadd.f32 %v3935, %v3936
    %v3938 = vsel %vm2899, %v3896, 0.0
    %v3939 = vadd.f32 %v3937, %v3938
    %v3940 = vsel %vm2899, %v3897, 0.0
    %v3941 = vadd.f32 %v3939, %v3940
    %v3942 = vsel %vm2899, %v3898, 0.0
    %v3943 = vadd.f32 %v3941, %v3942
    %v3944 = vsel %vm2899, %v3899, 0.0
    %v3945 = vadd.f32 %v3943, %v3944
    %v3946 = vsel %vm2899, %v3900, 0.0
    %v3947 = vadd.f32 %v3945, %v3946
    %v3948 = vsel %vm2899, %v3901, 0.0
    %v3949 = vadd.f32 %v3947, %v3948
    %v3950 = vsel %vm2899, %v3902, 0.0
    %v3951 = vadd.f32 %v3949, %v3950
    %v3952 = vsel %vm2899, %v3903, 0.0
    %v3953 = vadd.f32 %v3951, %v3952
    %v3954 = vsel %vm2899, %v3904, 0.0
    %v3955 = vadd.f32 %v3953, %v3954
    %v3956 = vsel %vm2899, %v3905, 0.0
    %v3957 = vadd.f32 %v3955, %v3956
    %v3958 = vsel %vm2899, %v3906, 0.0
    %v3959 = vadd.f32 %v3957, %v3958
    %v3960 = vsel %vm2899, %v3907, 0.0
    %v3961 = vadd.f32 %v3959, %v3960
    %v3962 = vsel %vm2899, %v3908, 0.0
    %v3963 = vadd.f32 %v3961, %v3962
    %v3964 = vsel %vm2899, %v3909, 0.0
    %v3965 = vadd.f32 %v3963, %v3964
    %v3966 = vsel %vm2899, %v3910, 0.0
    %v3967 = vadd.f32 %v3965, %v3966
    %v3968 = vsel %vm2899, %v3911, 0.0
    %v3969 = vadd.f32 %v3967, %v3968
    %v3970 = vsel %vm2899, %v3912, 0.0
    %v3971 = vadd.f32 %v3969, %v3970
    %v3972 = vsel %vm2899, %v3913, 0.0
    %v3973 = vadd.f32 %v3971, %v3972
    %v3974 = vsel %vm2899, %v3914, 0.0
    %v3975 = vadd.f32 %v3973, %v3974
    %v3976 = vsel %vm2899, %v3915, 0.0
    %v3977 = vadd.f32 %v3975, %v3976
    %v3978 = vsel %vm2899, %v3916, 0.0
    %v3979 = vadd.f32 %v3977, %v3978
    %3980 = vadd.xlane.f32.xlu0 %v3979
    %v3981 = vpop.xlane.xlu0 %3980
    %v3982 = vrot.slane %v3981, 4
    %v3983 = vadd.f32 %v3981, %v3982
    %v3984 = vrot.slane %v3983, 2
    %v3985 = vadd.f32 %v3983, %v3984
    %v3986 = vrot.slane %v3985, 1
    %v3987 = vadd.f32 %v3985, %v3986
    %s3988 = vtos %v3987
    %v3989 = vstv %s3988
    %v3990 = vadd.f32 %v3820, %v3989
    %3991 = vst.msk [vmem:[#allocation6] sm:$0x1] %vm2974, %v3990
    %v3992 = vld [vmem:[#allocation3] sm:$0x3]
    %v3993 = vadd.f32 %v1779, %v1783
    %v3994 = vadd.f32 %v3993, %v1787
    %v3995 = vadd.f32 %v3994, %v1791
    %v3996 = vadd.f32 %v3995, %v1795
    %v3997 = vadd.f32 %v3996, %v1799
    %v3998 = vadd.f32 %v3997, %v1803
    %v3999 = vadd.f32 %v3998, %v1807
    %v4000 = vadd.f32 %v3999, %v1811
    %v4001 = vadd.f32 %v4000, %v1815
    %v4002 = vadd.f32 %v4001, %v1819
    %v4003 = vadd.f32 %v4002, %v1823
    %v4004 = vadd.f32 %v4003, %v1827
    %v4005 = vadd.f32 %v4004, %v1831
    %v4006 = vadd.f32 %v4005, %v1835
    %v4007 = vadd.f32 %v4006, %v1839
    %v4008 = vadd.f32 %v4007, %v1843
    %v4009 = vadd.f32 %v4008, %v1847
    %v4010 = vadd.f32 %v4009, %v1851
    %v4011 = vadd.f32 %v4010, %v1855
    %v4012 = vadd.f32 %v4011, %v1859
    %v4013 = vadd.f32 %v4012, %v1863
    %v4014 = vadd.f32 %v4013, %v1867
    %v4015 = vadd.f32 %v4014, %v1871
    %v4016 = vadd.f32 %v4015, %v1875
    %v4017 = vadd.f32 %v4016, %v1879
    %v4018 = vadd.f32 %v4017, %v1883
    %v4019 = vadd.f32 %v4018, %v1887
    %v4020 = vadd.f32 %v4019, %v1891
    %v4021 = vadd.f32 %v4020, %v1895
    %v4022 = vadd.f32 %v4021, %v1899
    %v4023 = vadd.f32 %v4022, %v1903
    %v4024 = vrot.slane %v4023, 4
    %v4025 = vadd.f32 %v4023, %v4024
    %v4026 = vrot.slane %v4025, 2
    %v4027 = vadd.f32 %v4025, %v4026
    %v4028 = vrot.slane %v4027, 1
    %v4029 = vadd.f32 %v4027, %v4028
    %v4030 = vadd.f32 %v1781, %v1785
    %v4031 = vadd.f32 %v4030, %v1789
    %v4032 = vadd.f32 %v4031, %v1793
    %v4033 = vadd.f32 %v4032, %v1797
    %v4034 = vadd.f32 %v4033, %v1801
    %v4035 = vadd.f32 %v4034, %v1805
    %v4036 = vadd.f32 %v4035, %v1809
    %v4037 = vadd.f32 %v4036, %v1813
    %v4038 = vadd.f32 %v4037, %v1817
    %v4039 = vadd.f32 %v4038, %v1821
    %v4040 = vadd.f32 %v4039, %v1825
    %v4041 = vadd.f32 %v4040, %v1829
    %v4042 = vadd.f32 %v4041, %v1833
    %v4043 = vadd.f32 %v4042, %v1837
    %v4044 = vadd.f32 %v4043, %v1841
    %v4045 = vadd.f32 %v4044, %v1845
    %v4046 = vadd.f32 %v4045, %v1849
    %v4047 = vadd.f32 %v4046, %v1853
    %v4048 = vadd.f32 %v4047, %v1857
    %v4049 = vadd.f32 %v4048, %v1861
    %v4050 = vadd.f32 %v4049, %v1865
    %v4051 = vadd.f32 %v4050, %v1869
    %v4052 = vadd.f32 %v4051, %v1873
    %v4053 = vadd.f32 %v4052, %v1877
    %v4054 = vadd.f32 %v4053, %v1881
    %v4055 = vadd.f32 %v4054, %v1885
    %v4056 = vadd.f32 %v4055, %v1889
    %v4057 = vadd.f32 %v4056, %v1893
    %v4058 = vadd.f32 %v4057, %v1897
    %v4059 = vadd.f32 %v4058, %v1901
    %v4060 = vadd.f32 %v4059, %v1905
    %v4061 = vrot.slane %v4060, 4
    %v4062 = vadd.f32 %v4060, %v4061
    %v4063 = vrot.slane %v4062, 2
    %v4064 = vadd.f32 %v4062, %v4063
    %v4065 = vrot.slane %v4064, 1
    %v4066 = vadd.f32 %v4064, %v4065
    %v4067 = vadd.f32 %v2163, %v2167
    %v4068 = vadd.f32 %v4067, %v2171
    %v4069 = vadd.f32 %v4068, %v2175
    %v4070 = vadd.f32 %v4069, %v2179
    %v4071 = vadd.f32 %v4070, %v2183
    %v4072 = vadd.f32 %v4071, %v2187
    %v4073 = vadd.f32 %v4072, %v2191
    %v4074 = vadd.f32 %v4073, %v2195
    %v4075 = vadd.f32 %v4074, %v2199
    %v4076 = vadd.f32 %v4075, %v2203
    %v4077 = vadd.f32 %v4076, %v2207
    %v4078 = vadd.f32 %v4077, %v2211
    %v4079 = vadd.f32 %v4078, %v2215
    %v4080 = vadd.f32 %v4079, %v2219
    %v4081 = vadd.f32 %v4080, %v2223
    %v4082 = vadd.f32 %v4081, %v2227
    %v4083 = vadd.f32 %v4082, %v2231
    %v4084 = vadd.f32 %v4083, %v2235
    %v4085 = vadd.f32 %v4084, %v2239
    %v4086 = vadd.f32 %v4085, %v2243
    %v4087 = vadd.f32 %v4086, %v2247
    %v4088 = vadd.f32 %v4087, %v2251
    %v4089 = vadd.f32 %v4088, %v2255
    %v4090 = vadd.f32 %v4089, %v2259
    %v4091 = vadd.f32 %v4090, %v2263
    %v4092 = vadd.f32 %v4091, %v2267
    %v4093 = vadd.f32 %v4092, %v2271
    %v4094 = vadd.f32 %v4093, %v2275
    %v4095 = vadd.f32 %v4094, %v2279
    %v4096 = vadd.f32 %v4095, %v2283
    %v4097 = vadd.f32 %v4096, %v2287
    %v4098 = vrot.slane %v4097, 4
    %v4099 = vadd.f32 %v4097, %v4098
    %v4100 = vrot.slane %v4099, 2
    %v4101 = vadd.f32 %v4099, %v4100
    %v4102 = vrot.slane %v4101, 1
    %v4103 = vadd.f32 %v4101, %v4102
    %v4104 = vadd.f32 %v2165, %v2169
    %v4105 = vadd.f32 %v4104, %v2173
    %v4106 = vadd.f32 %v4105, %v2177
    %v4107 = vadd.f32 %v4106, %v2181
    %v4108 = vadd.f32 %v4107, %v2185
    %v4109 = vadd.f32 %v4108, %v2189
    %v4110 = vadd.f32 %v4109, %v2193
    %v4111 = vadd.f32 %v4110, %v2197
    %v4112 = vadd.f32 %v4111, %v2201
    %v4113 = vadd.f32 %v4112, %v2205
    %v4114 = vadd.f32 %v4113, %v2209
    %v4115 = vadd.f32 %v4114, %v2213
    %v4116 = vadd.f32 %v4115, %v2217
    %v4117 = vadd.f32 %v4116, %v2221
    %v4118 = vadd.f32 %v4117, %v2225
    %v4119 = vadd.f32 %v4118, %v2229
    %v4120 = vadd.f32 %v4119, %v2233
    %v4121 = vadd.f32 %v4120, %v2237
    %v4122 = vadd.f32 %v4121, %v2241
    %v4123 = vadd.f32 %v4122, %v2245
    %v4124 = vadd.f32 %v4123, %v2249
    %v4125 = vadd.f32 %v4124, %v2253
    %v4126 = vadd.f32 %v4125, %v2257
    %v4127 = vadd.f32 %v4126, %v2261
    %v4128 = vadd.f32 %v4127, %v2265
    %v4129 = vadd.f32 %v4128, %v2269
    %v4130 = vadd.f32 %v4129, %v2273
    %v4131 = vadd.f32 %v4130, %v2277
    %v4132 = vadd.f32 %v4131, %v2281
    %v4133 = vadd.f32 %v4132, %v2285
    %v4134 = vadd.f32 %v4133, %v2289
    %v4135 = vrot.slane %v4134, 4
    %v4136 = vadd.f32 %v4134, %v4135
    %v4137 = vrot.slane %v4136, 2
    %v4138 = vadd.f32 %v4136, %v4137
    %v4139 = vrot.slane %v4138, 1
    %v4140 = vadd.f32 %v4138, %v4139
    %v4141 = vadd.f32 %v4029, %v4103
    %v4142 = vadd.f32 %v4066, %v4140
    %v4145 = vrot.slane %v4142, 7
    %vm4146 = vcmask 1040384
    %v4147 = vsel %vm4146, %v4141, %v4145
    %v4149 = vadd.f32 %v3992, %v4147
    %v4150 = vlaneseq
    %vm4151 = vcmp.ge.s32.totalorder %v4150, 0
    %vm4152 = vcmp.lt.s32.totalorder %v4150, 256
    %vm4153 = vmand %vm4151, %vm4152
    %4154 = vst.msk [vmem:[#allocation3] sm:$0x3] %vm4153, %v4149
    // Predicated region
    $region22: #{tpu_custom_call.1} parent=1 // pred_check
      %p4155 = pneg %p47
    $region23: #{tpu_custom_call.1} parent=1 // pred_check_branch
      %4157 = sbr.rel (%p4155) target = $region25
    $region24: #{tpu_custom_call.1} parent=1 // pred_region
      %vm4158 = vcmp.lt.s32.totalorder %v1520, 8
      %vm4159 = vcmp.lt.s32.totalorder %v1521, 8
      %v4160 = vld [vmem:[#allocation3] sm:$0x3]
      %v4162 = vperm.slane %v4160, 0
      %v4163 = vperm.slane %v4160, 1
      %v4166 = vsel %vm4158, %v4162, 1.0
      %v4167 = vsel %vm4159, %v4163, 1.0
      %v4168 = vlog2.pop %v4166
      %v4169 = vmul.f32 %v4168, 0.6931472
      %v4170 = vlog2.pop %v4167
      %v4171 = vmul.f32 %v4170, 0.6931472
      %v4172 = vadd.f32 %v4169, 10.0
      %v4173 = vadd.f32 %v4171, 10.0
      %v4174 = vsel %vm4158, %v4172, 0.0
      %v4175 = vsel %vm4159, %v4173, 0.0
      %v4176 = vsel %vm4146, %v4174, 0.0
      %v4177 = vsel %vm4146, %v4175, 0.0
      %v4178 = vadd.f32 %v4176, %v4177
      %4179 = vadd.xlane.f32.xlu0 %v4178
      %v4180 = vpop.xlane.xlu0 %4179
      %v4181 = vrot.slane %v4180, 4
      %v4182 = vadd.f32 %v4180, %v4181
      %v4183 = vrot.slane %v4182, 2
      %v4184 = vadd.f32 %v4182, %v4183
      %v4185 = vrot.slane %v4184, 1
      %v4186 = vadd.f32 %v4184, %v4185
      %s4187 = vtos %v4186
      %v4188 = vstv %s4187
      %v4189 = vld [vmem:[#allocation4] sm:$0x1]
      %v4190 = vadd.f32 %v4189, %v4188
      %v4191 = vld [vmem:[#allocation5] sm:$0x1]
      %v4192 = vsub.f32 %v4190, %v4191
      %v4193 = vrcp.pop 16.0
      %v4194 = vmul.f32 16.0, %v4193
      %v4195 = vsub.f32 1.0, %v4194
      %v4196 = vmul.f32 %v4193, %v4195
      %v4197 = vadd.f32 %v4193, %v4196
      %vm4198 = vweird.f32 %v4193
      %v4199 = vsel %vm4198, %v4193, %v4197
      %v4200 = vmul.f32 %v4192, %v4199
      %4201 = vst.msk [vmem:[#allocation12] sm:$0x1] %vm2974, %v4200
      %v4202 = vld [vmem:[#allocation6] sm:$0x1]
      %v4203 = vmul.f32 %v4202, 100.0
      %v4204 = vrcp.pop 8.0
      %v4205 = vmul.f32 8.0, %v4204
      %v4206 = vsub.f32 1.0, %v4205
      %v4207 = vmul.f32 %v4204, %v4206
      %v4208 = vadd.f32 %v4204, %v4207
      %vm4209 = vweird.f32 %v4204
      %v4210 = vsel %vm4209, %v4204, %v4208
      %v4211 = vmul.f32 %v4203, %v4210
      %4212 = vst.msk [vmem:[#allocation13] sm:$0x1] %vm2974, %v4211
    $region25: #{tpu_custom_call.1} parent=1 // pred_fallthru
      _
    // Predicated region
    $region26: #{tpu_custom_call.1} parent=1 // pred_check
      _
    $region27: #{tpu_custom_call.1} parent=1 // pred_check_branch
      %4214 = sbr.rel (0) target = $region29
    $region28: #{tpu_custom_call.1} parent=1 // pred_region
      %4216 = vsyncadd [#allocation9], 0
      %s4218 = sshll.u32 [#allocation12], 4
      %s4219 = int_to_ptr.vmem [resolvable:$true] %s4218
      %s4220 = sshll.u32 %s2, 4
      %s4221 = int_to_ptr.hbm [resolvable:$true] %s4220
      %4223 = dma.vmem_to_hbm [thread:$0]  %s4219, 16, %s4221, [#allocation9]
    $region29: #{tpu_custom_call.1} parent=1 // pred_fallthru
      _
    // Predicated region
    $region30: #{tpu_custom_call.1} parent=1 // pred_check
      _
    $region31: #{tpu_custom_call.1} parent=1 // pred_check_branch
      %4225 = sbr.rel (0) target = $region33
    $region32: #{tpu_custom_call.1} parent=1 // pred_region
      %4227 = vsyncadd [#allocation14], 0
      %s4229 = sshll.u32 [#allocation13], 4
      %s4230 = int_to_ptr.vmem [resolvable:$true] %s4229
      %s4231 = sshll.u32 %s3, 4
      %s4232 = int_to_ptr.hbm [resolvable:$true] %s4231
      %4234 = dma.vmem_to_hbm [thread:$0]  %s4230, 16, %s4232, [#allocation14]
    $region33: #{tpu_custom_call.1} parent=1 // pred_fallthru
      _
    // Predicated region
    $region34: #{tpu_custom_call.1} parent=1 // pred_check
      _
    $region35: #{tpu_custom_call.1} parent=1 // pred_check_branch
      %4236 = sbr.rel (0) target = $region37
    $region36: #{tpu_custom_call.1} parent=1 // pred_region
      %4238 = dma.done [#allocation9], 16
    $region37: #{tpu_custom_call.1} parent=1 // pred_fallthru
      _
    // Predicated region
    $region38: #{tpu_custom_call.1} parent=1 // pred_check
      _
    $region39: #{tpu_custom_call.1} parent=1 // pred_check_branch
      %4240 = sbr.rel (0) target = $region41
    $region40: #{tpu_custom_call.1} parent=1 // pred_region
      %4242 = dma.done [#allocation14], 16
    $region41: #{tpu_custom_call.1} parent=1 // pred_fallthru
      _
    %4243 = vsyncpa [#allocation8], 1
    %4244 = vsyncpa [#allocation11], 1
    %4245 = vsyncpa [#allocation9], 1
    %4246 = vsyncpa [#allocation14], 1

</llo_original>
